<compile_context>
chip_gen: v7x
topology: tpu7x:2x2x1
jax: 0.10.0
libtpu: 0.0.40
codegen_flags: <defaults>
</compile_context>

<pallas_src>
import functools

import numpy as np
import jax
import jax.numpy as jnp
from jax.experimental import pallas as pl
from jax.experimental.pallas import tpu as pltpu

F32 = jnp.float32
MXU_DTYPE = jnp.bfloat16   # MXU operand dtype for MLP matmuls (set to jnp.float32 to disable)


# ----------------------------------------------------------------------------- helpers
def _relu(v):
    return jnp.maximum(v, 0.0)


def _mm(a, w):
    """MLP matmul: cast the activation to the weight dtype at the dot boundary only,
    accumulate in f32 on the MXU."""
    return jnp.dot(a.astype(w.dtype), w, preferred_element_type=F32)


def _dotT(a, b):
    """a^T @ b (contract axis 0 of both) — one-hot scatter-sum, kept f32."""
    return jax.lax.dot_general(a, b, (((0,), (0,)), ((), ())),
                               preferred_element_type=F32)


# ----------------------------------------------------------------------------- plan
def build_plan(cfg, x_in_dim, bc_dim, ea_dim):
    """Static per-layer shape plan: input 'parts' (core / skip_info / bc) per layer."""
    geom = cfg["geom_in_dim"]
    skipcon = frozenset(cfg["skipcon_indx"])
    layers = []
    parts = [x_in_dim + bc_dim]          # layer 0 consumes cat([x[:, :3], bc]) == full data.x
    ed = ea_dim
    for i, (ef, nf) in enumerate(zip(cfg["edge_feat_dims"], cfg["num_filters"])):
        layers.append(dict(parts=tuple(parts), ed=ed, ef=ef, nf=nf))
        parts = [nf, geom] + ([bc_dim] if i in skipcon else [])   # x after smoothing + concats
        ed = nf                                                   # smoothing edges are node-sized
    return dict(layers=layers, dec_parts=tuple(parts), geom=geom, skipcon=skipcon,
                hidden=cfg["hidden_nodes"], out_dim=cfg["out_dim"],
                num_layers=len(layers), bc_dim=bc_dim)


# ----------------------------------------------------------------------------- params
def _linear_params(key, fan_in, fan_out):
    """PyTorch nn.Linear/LazyLinear default init; weight stored as [in, out]."""
    kw, kb = jax.random.split(key)
    bound = 1.0 / float(np.sqrt(fan_in))
    w = jax.random.uniform(kw, (fan_in, fan_out), F32, -bound, bound)
    b = jax.random.uniform(kb, (1, fan_out), F32, -bound, bound)
    return w, b


def _split_rows(w, dims):
    out, off = [], 0
    for d in dims:
        out.append(w[off:off + d])
        off += d
    return out


def init_params(key, plan):
    """Flat operand list for the fused kernel. First-linear / decoder weights are row-split
    per input part (so the kernel never concatenates features); matmul weights pre-cast to
    MXU_DTYPE, biases stay f32."""
    H = plan["hidden"]
    keys = jax.random.split(key, 4 * plan["num_layers"] + 1)
    cast = lambda w: w.astype(MXU_DTYPE)
    ki = 0
    flat = []
    for L in plan["layers"]:
        parts, ed, ef, nf = list(L["parts"]), L["ed"], L["ef"], L["nf"]
        xd = sum(parts)
        e1w, e1b = _linear_params(keys[ki], 2 * xd + ed, H); ki += 1
        e2w, e2b = _linear_params(keys[ki], H, ef); ki += 1
        n1w, n1b = _linear_params(keys[ki], xd + ef, H); ki += 1
        n2w, n2b = _linear_params(keys[ki], H, nf); ki += 1
        w1a = _split_rows(e1w[:xd], parts)            # acts on (x_i + x_j)/2, per part
        w1b = _split_rows(e1w[xd:2 * xd], parts)      # acts on |x_i - x_j|/2, per part
        w1c = e1w[2 * xd:]                            # acts on edge_attr
        n1x = _split_rows(n1w[:xd], parts)            # acts on x, per part
        n1a = n1w[xd:]                                # acts on aggregated messages
        flat += [cast(w) for w in w1a] + [cast(w) for w in w1b]
        flat += [cast(w1c), e1b, cast(e2w), e2b]
        flat += [cast(w) for w in n1x] + [cast(n1a), n1b, cast(n2w), n2b]
    dparts = list(plan["dec_parts"])
    dw, db = _linear_params(keys[ki], sum(dparts), plan["out_dim"])
    flat += [cast(w) for w in _split_rows(dw, dparts)] + [db]
    return flat


# ----------------------------------------------------------------------------- kernel
def make_fused_kernel(plan, E):
    skipcon = plan["skipcon"]

    def kernel(*refs):
        out_ref = refs[-1]
        it = iter(refs[:-1])
        x0 = next(it)[...]        # [N, 3+bc]  full data.x (layer-0 node features)
        skip = next(it)[...]      # [N, geom]  skip_info
        bc = next(it)[...]        # [N, bc]    boundary conditions
        ea = next(it)[...]        # [E, ea]    edge_attr
        ohsd = next(it)[...]      # [2E, N]    stacked one-hots: rows [:E]=src, [E:]=dst
        inv_deg = next(it)[...]   # [N, 1]     1 / max(#edges with edge_index[0]==n, 1)

        ohs = ohsd[:E]            # one_hot(edge_index[0]) — scatter target of aggregate()

        # loop-invariant gathers (skip_info / bc), computed once, reused every layer
        g_skip = jnp.dot(ohsd, skip, preferred_element_type=F32)
        g_bc = jnp.dot(ohsd, bc, preferred_element_type=F32)

        x_parts = [x0]
        for li, L in enumerate(plan["layers"]):
            npart = len(L["parts"])
            w1a = [next(it)[...] for _ in range(npart)]
            w1b = [next(it)[...] for _ in range(npart)]
            w1c = next(it)[...]; b1 = next(it)[...]
            w2 = next(it)[...]; b2 = next(it)[...]
            n1x = [next(it)[...] for _ in range(npart)]
            n1a = next(it)[...]; n1b = next(it)[...]
            n2 = next(it)[...]; n2b = next(it)[...]

            # ---- ProcessorLayer.message + edge_mlp ----
            # one [2E,N]@[N,F] MXU pass for the (varying) core part gives both x_j and x_i
            g_core = jnp.dot(ohsd, x_parts[0], preferred_element_type=F32)
            g_parts = [g_core, g_skip, g_bc][:npart]
            h = _mm(ea, w1c) + b1
            for p in range(npart):
                xj, xi = g_parts[p][:E], g_parts[p][E:]      # x_j = x[src], x_i = x[dst]
                h = h + _mm((xi + xj) * 0.5, w1a[p]) + _mm(jnp.abs(xi - xj) * 0.5, w1b[p])
            ue = _mm(_relu(h), w2) + b2                      # updated_edges [E, ef]

            # ---- ProcessorLayer.aggregate: scatter-sum over edge_index[0] ----
            agg = _dotT(ohs, ue)                             # [N, ef]

            # ---- ProcessorLayer.node_mlp on cat([x, agg]) (row-split weights, no concat) --
            hn = _mm(agg, n1a) + n1b
            for p in range(npart):
                hn = hn + _mm(x_parts[p], n1x[p])
            x_core = _relu(_mm(_relu(hn), n2) + n2b)         # node_mlp ends with ReLU

            # ---- SmoothingLayer: per-edge mean + scatter-mean over edge_index[0] ----
            # (Processor's updated_edges are immediately replaced by the smoothing edges,
            #  which is what the next ProcessorLayer consumes as edge_attr.)
            g2 = jnp.dot(ohsd, x_core, preferred_element_type=F32)
            ue2 = (g2[:E] + g2[E:]) * 0.5                    # [E, nf]
            ea = ue2
            x_core = _dotT(ohs, ue2) * inv_deg               # [N, nf]

            # ---- post-smoothing skip/bc concats, tracked as parts (never materialized) ----
            x_parts = [x_core, skip] + ([bc] if li in skipcon else [])

        # ---- decoder ----
        wd = [next(it)[...] for _ in range(len(plan["dec_parts"]))]
        bd = next(it)[...]
        pred = bd
        for p in range(len(plan["dec_parts"])):
            pred = pred + _mm(x_parts[p], wd[p])
        out_ref[...] = pred

    return kernel


# ----------------------------------------------------------------------------- forward
def _forward_impl(flat_params, x_full, edge_index, edge_attr, plan):
    N = x_full.shape[0]
    E = edge_index.shape[1]
    geom = plan["geom"]

    skip = x_full[:, :geom]                                # skip_info
    bc = x_full[:, 3:]                                     # bc = data.x[:, 3:]

    # Hoisted out of the kernel: one-hots, stacked gather operand, inverse degree.
    ohs = jax.nn.one_hot(edge_index[0], N, dtype=F32)      # [E, N]
    ohd = jax.nn.one_hot(edge_index[1], N, dtype=F32)      # [E, N]
    ohsd = jnp.concatenate([ohs, ohd], axis=0)             # [2E, N]
    deg = jnp.sum(ohs, axis=0)[:, None]                    # scatter counts at edge_index[0]
    inv_deg = 1.0 / jnp.maximum(deg, 1.0)

    args = [x_full, skip, bc, edge_attr, ohsd, inv_deg] + list(flat_params)
    vmem = pl.BlockSpec(memory_space=pltpu.MemorySpace.VMEM)
    return pl.pallas_call(
        make_fused_kernel(plan, E),
        out_shape=jax.ShapeDtypeStruct((N, plan["out_dim"]), F32),
        in_specs=[vmem] * len(args),
        out_specs=vmem,
    )(*args)


def make_forward(plan):
    # TODO(synk): for large graphs the dense one-hot [2E,N] gather/scatter is O(E*N) and
    # will not fit VMEM (v7x's 64 MiB first); switch to a PrefetchScalarGridSpec +
    # pl.Element row-gather and a node-tiled scatter with a 'parallel' grid axis.
    return jax.jit(functools.partial(_forward_impl, plan=plan))


# ----------------------------------------------------------------------------- reference
def reference_forward(flat_params, x_full, edge_index, edge_attr, plan):
    """Independent pure-JAX/XLA reference (index gather + segment_sum scatter)."""
    N = x_full.shape[0]
    src, dst = edge_index[0], edge_index[1]
    skip = x_full[:, :plan["geom"]]
    bc = x_full[:, 3:]
    cnt = jax.ops.segment_sum(jnp.ones(src.shape, F32), src, num_segments=N)
    inv = (1.0 / jnp.maximum(cnt, 1.0))[:, None]

    it = iter(flat_params)
    x_parts, ea = [x_full], edge_attr
    for li, L in enumerate(plan["layers"]):
        npart = len(L["parts"])
        w1a = [next(it) for _ in range(npart)]
        w1b = [next(it) for _ in range(npart)]
        w1c, b1, w2, b2 = next(it), next(it), next(it), next(it)
        n1x = [next(it) for _ in range(npart)]
        n1a, n1b, n2, n2b = next(it), next(it), next(it), next(it)

        h = _mm(ea, w1c) + b1
        for p in range(npart):
            xi, xj = x_parts[p][dst], x_parts[p][src]
            h = h + _mm((xi + xj) * 0.5, w1a[p]) + _mm(jnp.abs(xi - xj) * 0.5, w1b[p])
        ue = _mm(_relu(h), w2) + b2
        agg = jax.ops.segment_sum(ue, src, num_segments=N)
        hn = _mm(agg, n1a) + n1b
        for p in range(npart):
            hn = hn + _mm(x_parts[p], n1x[p])
        x = _relu(_mm(_relu(hn), n2) + n2b)
        ue2 = (x[dst] + x[src]) * 0.5
        x = jax.ops.segment_sum(ue2, src, num_segments=N) * inv
        ea = ue2
        x_parts = [x, skip] + ([bc] if li in plan["skipcon"] else [])

    wd = [next(it) for _ in range(len(plan["dec_parts"]))]
    bd = next(it)
    pred = bd
    for p in range(len(plan["dec_parts"])):
        pred = pred + _mm(x_parts[p], wd[p])
    return pred


# ----------------------------------------------------------------------------- main
if __name__ == "__main__":
    key = jax.random.PRNGKey(0)
    k1, k2, kp = jax.random.split(key, 3)

    N = 24
    BC_DIM = 4          # width of data.x[:, 3:]
    EA_DIM = 3
    cfg = dict(edge_feat_dims=[8, 8, 8], num_filters=[16, 16, 16],
               skipcon_indx=[1], geom_in_dim=2, out_dim=3, hidden_nodes=32)

    # bidirectional ring graph: every node appears as both a source and a target
    idx = np.arange(N)
    src_np = np.concatenate([idx, idx])
    dst_np = np.concatenate([(idx + 1) % N, (idx - 1) % N])
    edge_index = jnp.asarray(np.stack([src_np, dst_np]), dtype=jnp.int32)   # [2, 48]

    x_full = jax.random.normal(k1, (N, 3 + BC_DIM), jnp.float32)            # data.x
    edge_attr = jax.random.normal(k2, (edge_index.shape[1], EA_DIM), jnp.float32)

    plan = build_plan(cfg, x_in_dim=3, bc_dim=BC_DIM, ea_dim=EA_DIM)
    flat_params = init_params(kp, plan)

    forward = make_forward(plan)
    pred = jax.block_until_ready(forward(flat_params, x_full, edge_index, edge_attr))

    assert pred.shape == (N, cfg["out_dim"])
    assert bool(jnp.all(jnp.isfinite(pred)))

    ref = reference_forward(flat_params, x_full, edge_index, edge_attr, plan)
    err = float(jnp.max(jnp.abs(pred - ref)))
    assert err < 1e-2, f"mismatch vs XLA reference: max|diff|={err}"

    print("KERNEL_OK")
</pallas_src>

<mosaic_0001>
module attributes {stable_mosaic.version = 11 : i64} {
  func.func @kernel(%arg0: memref<24x7xf32, #tpu.memory_space<vmem>>, %arg1: memref<24x2xf32, #tpu.memory_space<vmem>>, %arg2: memref<24x4xf32, #tpu.memory_space<vmem>>, %arg3: memref<48x3xf32, #tpu.memory_space<vmem>>, %arg4: memref<96x24xf32, #tpu.memory_space<vmem>>, %arg5: memref<24x1xf32, #tpu.memory_space<vmem>>, %arg6: memref<7x32xbf16, #tpu.memory_space<vmem>>, %arg7: memref<7x32xbf16, #tpu.memory_space<vmem>>, %arg8: memref<3x32xbf16, #tpu.memory_space<vmem>>, %arg9: memref<1x32xf32, #tpu.memory_space<vmem>>, %arg10: memref<32x8xbf16, #tpu.memory_space<vmem>>, %arg11: memref<1x8xf32, #tpu.memory_space<vmem>>, %arg12: memref<7x32xbf16, #tpu.memory_space<vmem>>, %arg13: memref<8x32xbf16, #tpu.memory_space<vmem>>, %arg14: memref<1x32xf32, #tpu.memory_space<vmem>>, %arg15: memref<32x16xbf16, #tpu.memory_space<vmem>>, %arg16: memref<1x16xf32, #tpu.memory_space<vmem>>, %arg17: memref<16x32xbf16, #tpu.memory_space<vmem>>, %arg18: memref<2x32xbf16, #tpu.memory_space<vmem>>, %arg19: memref<16x32xbf16, #tpu.memory_space<vmem>>, %arg20: memref<2x32xbf16, #tpu.memory_space<vmem>>, %arg21: memref<16x32xbf16, #tpu.memory_space<vmem>>, %arg22: memref<1x32xf32, #tpu.memory_space<vmem>>, %arg23: memref<32x8xbf16, #tpu.memory_space<vmem>>, %arg24: memref<1x8xf32, #tpu.memory_space<vmem>>, %arg25: memref<16x32xbf16, #tpu.memory_space<vmem>>, %arg26: memref<2x32xbf16, #tpu.memory_space<vmem>>, %arg27: memref<8x32xbf16, #tpu.memory_space<vmem>>, %arg28: memref<1x32xf32, #tpu.memory_space<vmem>>, %arg29: memref<32x16xbf16, #tpu.memory_space<vmem>>, %arg30: memref<1x16xf32, #tpu.memory_space<vmem>>, %arg31: memref<16x32xbf16, #tpu.memory_space<vmem>>, %arg32: memref<2x32xbf16, #tpu.memory_space<vmem>>, %arg33: memref<4x32xbf16, #tpu.memory_space<vmem>>, %arg34: memref<16x32xbf16, #tpu.memory_space<vmem>>, %arg35: memref<2x32xbf16, #tpu.memory_space<vmem>>, %arg36: memref<4x32xbf16, #tpu.memory_space<vmem>>, %arg37: memref<16x32xbf16, #tpu.memory_space<vmem>>, %arg38: memref<1x32xf32, #tpu.memory_space<vmem>>, %arg39: memref<32x8xbf16, #tpu.memory_space<vmem>>, %arg40: memref<1x8xf32, #tpu.memory_space<vmem>>, %arg41: memref<16x32xbf16, #tpu.memory_space<vmem>>, %arg42: memref<2x32xbf16, #tpu.memory_space<vmem>>, %arg43: memref<4x32xbf16, #tpu.memory_space<vmem>>, %arg44: memref<8x32xbf16, #tpu.memory_space<vmem>>, %arg45: memref<1x32xf32, #tpu.memory_space<vmem>>, %arg46: memref<32x16xbf16, #tpu.memory_space<vmem>>, %arg47: memref<1x16xf32, #tpu.memory_space<vmem>>, %arg48: memref<16x3xbf16, #tpu.memory_space<vmem>>, %arg49: memref<2x3xbf16, #tpu.memory_space<vmem>>, %arg50: memref<1x3xf32, #tpu.memory_space<vmem>>, %arg51: memref<24x3xf32, #tpu.memory_space<vmem>>) attributes {dimension_semantics = [], scalar_prefetch = 0 : i64, scratch_operands = 0 : i64, tpu.core_type = #tpu.core_type<tc>} {
    %c0 = arith.constant 0 : index
    %c0_0 = arith.constant 0 : index
    %0 = vector.load %arg0[%c0, %c0_0] : memref<24x7xf32, #tpu.memory_space<vmem>>, vector<24x7xf32>
    %c0_1 = arith.constant 0 : index
    %c0_2 = arith.constant 0 : index
    %1 = vector.load %arg1[%c0_1, %c0_2] : memref<24x2xf32, #tpu.memory_space<vmem>>, vector<24x2xf32>
    %c0_3 = arith.constant 0 : index
    %c0_4 = arith.constant 0 : index
    %2 = vector.load %arg2[%c0_3, %c0_4] : memref<24x4xf32, #tpu.memory_space<vmem>>, vector<24x4xf32>
    %c0_5 = arith.constant 0 : index
    %c0_6 = arith.constant 0 : index
    %3 = vector.load %arg3[%c0_5, %c0_6] : memref<48x3xf32, #tpu.memory_space<vmem>>, vector<48x3xf32>
    %c0_7 = arith.constant 0 : index
    %c0_8 = arith.constant 0 : index
    %4 = vector.load %arg4[%c0_7, %c0_8] : memref<96x24xf32, #tpu.memory_space<vmem>>, vector<96x24xf32>
    %c0_9 = arith.constant 0 : index
    %c0_10 = arith.constant 0 : index
    %5 = vector.load %arg5[%c0_9, %c0_10] : memref<24x1xf32, #tpu.memory_space<vmem>>, vector<24x1xf32>
    %6 = vector.extract_strided_slice %4 {offsets = [0, 0], sizes = [48, 24], strides = [1, 1]} : vector<96x24xf32> to vector<48x24xf32>
    %cst = arith.constant dense<0.000000e+00> : vector<96x2xf32>
    %7 = tpu.matmul %4, %1, %cst {dimension_numbers = #tpu.dot_dimension_numbers<[1], [0], [0], [1], [0, 0, 1, 1], [], []>} : vector<96x24xf32>, vector<24x2xf32>, vector<96x2xf32> -> vector<96x2xf32>
    %cst_11 = arith.constant dense<0.000000e+00> : vector<96x4xf32>
    %8 = tpu.matmul %4, %2, %cst_11 {dimension_numbers = #tpu.dot_dimension_numbers<[1], [0], [0], [1], [0, 0, 1, 1], [], []>} : vector<96x24xf32>, vector<24x4xf32>, vector<96x4xf32> -> vector<96x4xf32>
    %c0_12 = arith.constant 0 : index
    %c0_13 = arith.constant 0 : index
    %9 = vector.load %arg6[%c0_12, %c0_13] : memref<7x32xbf16, #tpu.memory_space<vmem>>, vector<7x32xbf16>
    %c0_14 = arith.constant 0 : index
    %c0_15 = arith.constant 0 : index
    %10 = vector.load %arg7[%c0_14, %c0_15] : memref<7x32xbf16, #tpu.memory_space<vmem>>, vector<7x32xbf16>
    %c0_16 = arith.constant 0 : index
    %c0_17 = arith.constant 0 : index
    %11 = vector.load %arg8[%c0_16, %c0_17] : memref<3x32xbf16, #tpu.memory_space<vmem>>, vector<3x32xbf16>
    %c0_18 = arith.constant 0 : index
    %c0_19 = arith.constant 0 : index
    %12 = vector.load %arg9[%c0_18, %c0_19] : memref<1x32xf32, #tpu.memory_space<vmem>>, vector<1x32xf32>
    %c0_20 = arith.constant 0 : index
    %c0_21 = arith.constant 0 : index
    %13 = vector.load %arg10[%c0_20, %c0_21] : memref<32x8xbf16, #tpu.memory_space<vmem>>, vector<32x8xbf16>
    %c0_22 = arith.constant 0 : index
    %c0_23 = arith.constant 0 : index
    %14 = vector.load %arg11[%c0_22, %c0_23] : memref<1x8xf32, #tpu.memory_space<vmem>>, vector<1x8xf32>
    %c0_24 = arith.constant 0 : index
    %c0_25 = arith.constant 0 : index
    %15 = vector.load %arg12[%c0_24, %c0_25] : memref<7x32xbf16, #tpu.memory_space<vmem>>, vector<7x32xbf16>
    %c0_26 = arith.constant 0 : index
    %c0_27 = arith.constant 0 : index
    %16 = vector.load %arg13[%c0_26, %c0_27] : memref<8x32xbf16, #tpu.memory_space<vmem>>, vector<8x32xbf16>
    %c0_28 = arith.constant 0 : index
    %c0_29 = arith.constant 0 : index
    %17 = vector.load %arg14[%c0_28, %c0_29] : memref<1x32xf32, #tpu.memory_space<vmem>>, vector<1x32xf32>
    %c0_30 = arith.constant 0 : index
    %c0_31 = arith.constant 0 : index
    %18 = vector.load %arg15[%c0_30, %c0_31] : memref<32x16xbf16, #tpu.memory_space<vmem>>, vector<32x16xbf16>
    %c0_32 = arith.constant 0 : index
    %c0_33 = arith.constant 0 : index
    %19 = vector.load %arg16[%c0_32, %c0_33] : memref<1x16xf32, #tpu.memory_space<vmem>>, vector<1x16xf32>
    %cst_34 = arith.constant dense<0.000000e+00> : vector<96x7xf32>
    %20 = tpu.matmul %4, %0, %cst_34 {dimension_numbers = #tpu.dot_dimension_numbers<[1], [0], [0], [1], [0, 0, 1, 1], [], []>} : vector<96x24xf32>, vector<24x7xf32>, vector<96x7xf32> -> vector<96x7xf32>
    %21 = arith.truncf %3 : vector<48x3xf32> to vector<48x3xbf16>
    %cst_35 = arith.constant dense<0.000000e+00> : vector<48x32xf32>
    %22 = tpu.matmul %21, %11, %cst_35 {dimension_numbers = #tpu.dot_dimension_numbers<[1], [0], [0], [1], [0, 0, 1, 1], [], []>} : vector<48x3xbf16>, vector<3x32xbf16>, vector<48x32xf32> -> vector<48x32xf32>
    %23 = vector.broadcast %12 : vector<1x32xf32> to vector<48x32xf32>
    %24 = arith.addf %22, %23 : vector<48x32xf32>
    %25 = vector.extract_strided_slice %20 {offsets = [0, 0], sizes = [48, 7], strides = [1, 1]} : vector<96x7xf32> to vector<48x7xf32>
    %26 = vector.extract_strided_slice %20 {offsets = [48, 0], sizes = [48, 7], strides = [1, 1]} : vector<96x7xf32> to vector<48x7xf32>
    %27 = arith.addf %26, %25 : vector<48x7xf32>
    %cst_36 = arith.constant 5.000000e-01 : f32
    %28 = vector.broadcast %cst_36 : f32 to vector<48x7xf32>
    %29 = arith.mulf %27, %28 : vector<48x7xf32>
    %30 = arith.truncf %29 : vector<48x7xf32> to vector<48x7xbf16>
    %cst_37 = arith.constant dense<0.000000e+00> : vector<48x32xf32>
    %31 = tpu.matmul %30, %9, %cst_37 {dimension_numbers = #tpu.dot_dimension_numbers<[1], [0], [0], [1], [0, 0, 1, 1], [], []>} : vector<48x7xbf16>, vector<7x32xbf16>, vector<48x32xf32> -> vector<48x32xf32>
    %32 = arith.addf %24, %31 : vector<48x32xf32>
    %33 = arith.subf %26, %25 : vector<48x7xf32>
    %34 = math.absf %33 : vector<48x7xf32>
    %cst_38 = arith.constant 5.000000e-01 : f32
    %35 = vector.broadcast %cst_38 : f32 to vector<48x7xf32>
    %36 = arith.mulf %34, %35 : vector<48x7xf32>
    %37 = arith.truncf %36 : vector<48x7xf32> to vector<48x7xbf16>
    %cst_39 = arith.constant dense<0.000000e+00> : vector<48x32xf32>
    %38 = tpu.matmul %37, %10, %cst_39 {dimension_numbers = #tpu.dot_dimension_numbers<[1], [0], [0], [1], [0, 0, 1, 1], [], []>} : vector<48x7xbf16>, vector<7x32xbf16>, vector<48x32xf32> -> vector<48x32xf32>
    %39 = arith.addf %32, %38 : vector<48x32xf32>
    %cst_40 = arith.constant 0.000000e+00 : f32
    %40 = vector.broadcast %cst_40 : f32 to vector<48x32xf32>
    %41 = arith.maximumf %39, %40 : vector<48x32xf32>
    %42 = arith.truncf %41 : vector<48x32xf32> to vector<48x32xbf16>
    %cst_41 = arith.constant dense<0.000000e+00> : vector<48x8xf32>
    %43 = tpu.matmul %42, %13, %cst_41 {dimension_numbers = #tpu.dot_dimension_numbers<[1], [0], [0], [1], [0, 0, 1, 1], [], []>} : vector<48x32xbf16>, vector<32x8xbf16>, vector<48x8xf32> -> vector<48x8xf32>
    %44 = vector.broadcast %14 : vector<1x8xf32> to vector<48x8xf32>
    %45 = arith.addf %43, %44 : vector<48x8xf32>
    %cst_42 = arith.constant dense<0.000000e+00> : vector<24x8xf32>
    %46 = tpu.matmul %6, %45, %cst_42 {dimension_numbers = #tpu.dot_dimension_numbers<[0], [0], [1], [1], [0, 1, 1, 1], [], []>} : vector<48x24xf32>, vector<48x8xf32>, vector<24x8xf32> -> vector<24x8xf32>
    %47 = arith.truncf %46 : vector<24x8xf32> to vector<24x8xbf16>
    %cst_43 = arith.constant dense<0.000000e+00> : vector<24x32xf32>
    %48 = tpu.matmul %47, %16, %cst_43 {dimension_numbers = #tpu.dot_dimension_numbers<[1], [0], [0], [1], [0, 0, 1, 1], [], []>} : vector<24x8xbf16>, vector<8x32xbf16>, vector<24x32xf32> -> vector<24x32xf32>
    %49 = vector.broadcast %17 : vector<1x32xf32> to vector<24x32xf32>
    %50 = arith.addf %48, %49 : vector<24x32xf32>
    %51 = arith.truncf %0 : vector<24x7xf32> to vector<24x7xbf16>
    %cst_44 = arith.constant dense<0.000000e+00> : vector<24x32xf32>
    %52 = tpu.matmul %51, %15, %cst_44 {dimension_numbers = #tpu.dot_dimension_numbers<[1], [0], [0], [1], [0, 0, 1, 1], [], []>} : vector<24x7xbf16>, vector<7x32xbf16>, vector<24x32xf32> -> vector<24x32xf32>
    %53 = arith.addf %50, %52 : vector<24x32xf32>
    %cst_45 = arith.constant 0.000000e+00 : f32
    %54 = vector.broadcast %cst_45 : f32 to vector<24x32xf32>
    %55 = arith.maximumf %53, %54 : vector<24x32xf32>
    %56 = arith.truncf %55 : vector<24x32xf32> to vector<24x32xbf16>
    %cst_46 = arith.constant dense<0.000000e+00> : vector<24x16xf32>
    %57 = tpu.matmul %56, %18, %cst_46 {dimension_numbers = #tpu.dot_dimension_numbers<[1], [0], [0], [1], [0, 0, 1, 1], [], []>} : vector<24x32xbf16>, vector<32x16xbf16>, vector<24x16xf32> -> vector<24x16xf32>
    %58 = vector.broadcast %19 : vector<1x16xf32> to vector<24x16xf32>
    %59 = arith.addf %57, %58 : vector<24x16xf32>
    %cst_47 = arith.constant 0.000000e+00 : f32
    %60 = vector.broadcast %cst_47 : f32 to vector<24x16xf32>
    %61 = arith.maximumf %59, %60 : vector<24x16xf32>
    %cst_48 = arith.constant dense<0.000000e+00> : vector<96x16xf32>
    %62 = tpu.matmul %4, %61, %cst_48 {dimension_numbers = #tpu.dot_dimension_numbers<[1], [0], [0], [1], [0, 0, 1, 1], [], []>} : vector<96x24xf32>, vector<24x16xf32>, vector<96x16xf32> -> vector<96x16xf32>
    %63 = vector.extract_strided_slice %62 {offsets = [0, 0], sizes = [48, 16], strides = [1, 1]} : vector<96x16xf32> to vector<48x16xf32>
    %64 = vector.extract_strided_slice %62 {offsets = [48, 0], sizes = [48, 16], strides = [1, 1]} : vector<96x16xf32> to vector<48x16xf32>
    %65 = arith.addf %63, %64 : vector<48x16xf32>
    %cst_49 = arith.constant 5.000000e-01 : f32
    %66 = vector.broadcast %cst_49 : f32 to vector<48x16xf32>
    %67 = arith.mulf %65, %66 : vector<48x16xf32>
    %cst_50 = arith.constant dense<0.000000e+00> : vector<24x16xf32>
    %68 = tpu.matmul %6, %67, %cst_50 {dimension_numbers = #tpu.dot_dimension_numbers<[0], [0], [1], [1], [0, 1, 1, 1], [], []>} : vector<48x24xf32>, vector<48x16xf32>, vector<24x16xf32> -> vector<24x16xf32>
    %69 = vector.broadcast %5 : vector<24x1xf32> to vector<24x16xf32>
    %70 = arith.mulf %68, %69 : vector<24x16xf32>
    %c0_51 = arith.constant 0 : index
    %c0_52 = arith.constant 0 : index
    %71 = vector.load %arg17[%c0_51, %c0_52] : memref<16x32xbf16, #tpu.memory_space<vmem>>, vector<16x32xbf16>
    %c0_53 = arith.constant 0 : index
    %c0_54 = arith.constant 0 : index
    %72 = vector.load %arg18[%c0_53, %c0_54] : memref<2x32xbf16, #tpu.memory_space<vmem>>, vector<2x32xbf16>
    %c0_55 = arith.constant 0 : index
    %c0_56 = arith.constant 0 : index
    %73 = vector.load %arg19[%c0_55, %c0_56] : memref<16x32xbf16, #tpu.memory_space<vmem>>, vector<16x32xbf16>
    %c0_57 = arith.constant 0 : index
    %c0_58 = arith.constant 0 : index
    %74 = vector.load %arg20[%c0_57, %c0_58] : memref<2x32xbf16, #tpu.memory_space<vmem>>, vector<2x32xbf16>
    %c0_59 = arith.constant 0 : index
    %c0_60 = arith.constant 0 : index
    %75 = vector.load %arg21[%c0_59, %c0_60] : memref<16x32xbf16, #tpu.memory_space<vmem>>, vector<16x32xbf16>
    %c0_61 = arith.constant 0 : index
    %c0_62 = arith.constant 0 : index
    %76 = vector.load %arg22[%c0_61, %c0_62] : memref<1x32xf32, #tpu.memory_space<vmem>>, vector<1x32xf32>
    %c0_63 = arith.constant 0 : index
    %c0_64 = arith.constant 0 : index
    %77 = vector.load %arg23[%c0_63, %c0_64] : memref<32x8xbf16, #tpu.memory_space<vmem>>, vector<32x8xbf16>
    %c0_65 = arith.constant 0 : index
    %c0_66 = arith.constant 0 : index
    %78 = vector.load %arg24[%c0_65, %c0_66] : memref<1x8xf32, #tpu.memory_space<vmem>>, vector<1x8xf32>
    %c0_67 = arith.constant 0 : index
    %c0_68 = arith.constant 0 : index
    %79 = vector.load %arg25[%c0_67, %c0_68] : memref<16x32xbf16, #tpu.memory_space<vmem>>, vector<16x32xbf16>
    %c0_69 = arith.constant 0 : index
    %c0_70 = arith.constant 0 : index
    %80 = vector.load %arg26[%c0_69, %c0_70] : memref<2x32xbf16, #tpu.memory_space<vmem>>, vector<2x32xbf16>
    %c0_71 = arith.constant 0 : index
    %c0_72 = arith.constant 0 : index
    %81 = vector.load %arg27[%c0_71, %c0_72] : memref<8x32xbf16, #tpu.memory_space<vmem>>, vector<8x32xbf16>
    %c0_73 = arith.constant 0 : index
    %c0_74 = arith.constant 0 : index
    %82 = vector.load %arg28[%c0_73, %c0_74] : memref<1x32xf32, #tpu.memory_space<vmem>>, vector<1x32xf32>
    %c0_75 = arith.constant 0 : index
    %c0_76 = arith.constant 0 : index
    %83 = vector.load %arg29[%c0_75, %c0_76] : memref<32x16xbf16, #tpu.memory_space<vmem>>, vector<32x16xbf16>
    %c0_77 = arith.constant 0 : index
    %c0_78 = arith.constant 0 : index
    %84 = vector.load %arg30[%c0_77, %c0_78] : memref<1x16xf32, #tpu.memory_space<vmem>>, vector<1x16xf32>
    %cst_79 = arith.constant dense<0.000000e+00> : vector<96x16xf32>
    %85 = tpu.matmul %4, %70, %cst_79 {dimension_numbers = #tpu.dot_dimension_numbers<[1], [0], [0], [1], [0, 0, 1, 1], [], []>} : vector<96x24xf32>, vector<24x16xf32>, vector<96x16xf32> -> vector<96x16xf32>
    %86 = arith.truncf %67 : vector<48x16xf32> to vector<48x16xbf16>
    %cst_80 = arith.constant dense<0.000000e+00> : vector<48x32xf32>
    %87 = tpu.matmul %86, %75, %cst_80 {dimension_numbers = #tpu.dot_dimension_numbers<[1], [0], [0], [1], [0, 0, 1, 1], [], []>} : vector<48x16xbf16>, vector<16x32xbf16>, vector<48x32xf32> -> vector<48x32xf32>
    %88 = vector.broadcast %76 : vector<1x32xf32> to vector<48x32xf32>
    %89 = arith.addf %87, %88 : vector<48x32xf32>
    %90 = vector.extract_strided_slice %85 {offsets = [0, 0], sizes = [48, 16], strides = [1, 1]} : vector<96x16xf32> to vector<48x16xf32>
    %91 = vector.extract_strided_slice %85 {offsets = [48, 0], sizes = [48, 16], strides = [1, 1]} : vector<96x16xf32> to vector<48x16xf32>
    %92 = arith.addf %91, %90 : vector<48x16xf32>
    %cst_81 = arith.constant 5.000000e-01 : f32
    %93 = vector.broadcast %cst_81 : f32 to vector<48x16xf32>
    %94 = arith.mulf %92, %93 : vector<48x16xf32>
    %95 = arith.truncf %94 : vector<48x16xf32> to vector<48x16xbf16>
    %cst_82 = arith.constant dense<0.000000e+00> : vector<48x32xf32>
    %96 = tpu.matmul %95, %71, %cst_82 {dimension_numbers = #tpu.dot_dimension_numbers<[1], [0], [0], [1], [0, 0, 1, 1], [], []>} : vector<48x16xbf16>, vector<16x32xbf16>, vector<48x32xf32> -> vector<48x32xf32>
    %97 = arith.addf %89, %96 : vector<48x32xf32>
    %98 = arith.subf %91, %90 : vector<48x16xf32>
    %99 = math.absf %98 : vector<48x16xf32>
    %cst_83 = arith.constant 5.000000e-01 : f32
    %100 = vector.broadcast %cst_83 : f32 to vector<48x16xf32>
    %101 = arith.mulf %99, %100 : vector<48x16xf32>
    %102 = arith.truncf %101 : vector<48x16xf32> to vector<48x16xbf16>
    %cst_84 = arith.constant dense<0.000000e+00> : vector<48x32xf32>
    %103 = tpu.matmul %102, %73, %cst_84 {dimension_numbers = #tpu.dot_dimension_numbers<[1], [0], [0], [1], [0, 0, 1, 1], [], []>} : vector<48x16xbf16>, vector<16x32xbf16>, vector<48x32xf32> -> vector<48x32xf32>
    %104 = arith.addf %97, %103 : vector<48x32xf32>
    %105 = vector.extract_strided_slice %7 {offsets = [0, 0], sizes = [48, 2], strides = [1, 1]} : vector<96x2xf32> to vector<48x2xf32>
    %106 = vector.extract_strided_slice %7 {offsets = [48, 0], sizes = [48, 2], strides = [1, 1]} : vector<96x2xf32> to vector<48x2xf32>
    %107 = arith.addf %106, %105 : vector<48x2xf32>
    %cst_85 = arith.constant 5.000000e-01 : f32
    %108 = vector.broadcast %cst_85 : f32 to vector<48x2xf32>
    %109 = arith.mulf %107, %108 : vector<48x2xf32>
    %110 = arith.truncf %109 : vector<48x2xf32> to vector<48x2xbf16>
    %cst_86 = arith.constant dense<0.000000e+00> : vector<48x32xf32>
    %111 = tpu.matmul %110, %72, %cst_86 {dimension_numbers = #tpu.dot_dimension_numbers<[1], [0], [0], [1], [0, 0, 1, 1], [], []>} : vector<48x2xbf16>, vector<2x32xbf16>, vector<48x32xf32> -> vector<48x32xf32>
    %112 = arith.addf %104, %111 : vector<48x32xf32>
    %113 = arith.subf %106, %105 : vector<48x2xf32>
    %114 = math.absf %113 : vector<48x2xf32>
    %cst_87 = arith.constant 5.000000e-01 : f32
    %115 = vector.broadcast %cst_87 : f32 to vector<48x2xf32>
    %116 = arith.mulf %114, %115 : vector<48x2xf32>
    %117 = arith.truncf %116 : vector<48x2xf32> to vector<48x2xbf16>
    %cst_88 = arith.constant dense<0.000000e+00> : vector<48x32xf32>
    %118 = tpu.matmul %117, %74, %cst_88 {dimension_numbers = #tpu.dot_dimension_numbers<[1], [0], [0], [1], [0, 0, 1, 1], [], []>} : vector<48x2xbf16>, vector<2x32xbf16>, vector<48x32xf32> -> vector<48x32xf32>
    %119 = arith.addf %112, %118 : vector<48x32xf32>
    %cst_89 = arith.constant 0.000000e+00 : f32
    %120 = vector.broadcast %cst_89 : f32 to vector<48x32xf32>
    %121 = arith.maximumf %119, %120 : vector<48x32xf32>
    %122 = arith.truncf %121 : vector<48x32xf32> to vector<48x32xbf16>
    %cst_90 = arith.constant dense<0.000000e+00> : vector<48x8xf32>
    %123 = tpu.matmul %122, %77, %cst_90 {dimension_numbers = #tpu.dot_dimension_numbers<[1], [0], [0], [1], [0, 0, 1, 1], [], []>} : vector<48x32xbf16>, vector<32x8xbf16>, vector<48x8xf32> -> vector<48x8xf32>
    %124 = vector.broadcast %78 : vector<1x8xf32> to vector<48x8xf32>
    %125 = arith.addf %123, %124 : vector<48x8xf32>
    %cst_91 = arith.constant dense<0.000000e+00> : vector<24x8xf32>
    %126 = tpu.matmul %6, %125, %cst_91 {dimension_numbers = #tpu.dot_dimension_numbers<[0], [0], [1], [1], [0, 1, 1, 1], [], []>} : vector<48x24xf32>, vector<48x8xf32>, vector<24x8xf32> -> vector<24x8xf32>
    %127 = arith.truncf %126 : vector<24x8xf32> to vector<24x8xbf16>
    %cst_92 = arith.constant dense<0.000000e+00> : vector<24x32xf32>
    %128 = tpu.matmul %127, %81, %cst_92 {dimension_numbers = #tpu.dot_dimension_numbers<[1], [0], [0], [1], [0, 0, 1, 1], [], []>} : vector<24x8xbf16>, vector<8x32xbf16>, vector<24x32xf32> -> vector<24x32xf32>
    %129 = vector.broadcast %82 : vector<1x32xf32> to vector<24x32xf32>
    %130 = arith.addf %128, %129 : vector<24x32xf32>
    %131 = arith.truncf %70 : vector<24x16xf32> to vector<24x16xbf16>
    %cst_93 = arith.constant dense<0.000000e+00> : vector<24x32xf32>
    %132 = tpu.matmul %131, %79, %cst_93 {dimension_numbers = #tpu.dot_dimension_numbers<[1], [0], [0], [1], [0, 0, 1, 1], [], []>} : vector<24x16xbf16>, vector<16x32xbf16>, vector<24x32xf32> -> vector<24x32xf32>
    %133 = arith.addf %130, %132 : vector<24x32xf32>
    %134 = arith.truncf %1 : vector<24x2xf32> to vector<24x2xbf16>
    %cst_94 = arith.constant dense<0.000000e+00> : vector<24x32xf32>
    %135 = tpu.matmul %134, %80, %cst_94 {dimension_numbers = #tpu.dot_dimension_numbers<[1], [0], [0], [1], [0, 0, 1, 1], [], []>} : vector<24x2xbf16>, vector<2x32xbf16>, vector<24x32xf32> -> vector<24x32xf32>
    %136 = arith.addf %133, %135 : vector<24x32xf32>
    %cst_95 = arith.constant 0.000000e+00 : f32
    %137 = vector.broadcast %cst_95 : f32 to vector<24x32xf32>
    %138 = arith.maximumf %136, %137 : vector<24x32xf32>
    %139 = arith.truncf %138 : vector<24x32xf32> to vector<24x32xbf16>
    %cst_96 = arith.constant dense<0.000000e+00> : vector<24x16xf32>
    %140 = tpu.matmul %139, %83, %cst_96 {dimension_numbers = #tpu.dot_dimension_numbers<[1], [0], [0], [1], [0, 0, 1, 1], [], []>} : vector<24x32xbf16>, vector<32x16xbf16>, vector<24x16xf32> -> vector<24x16xf32>
    %141 = vector.broadcast %84 : vector<1x16xf32> to vector<24x16xf32>
    %142 = arith.addf %140, %141 : vector<24x16xf32>
    %cst_97 = arith.constant 0.000000e+00 : f32
    %143 = vector.broadcast %cst_97 : f32 to vector<24x16xf32>
    %144 = arith.maximumf %142, %143 : vector<24x16xf32>
    %cst_98 = arith.constant dense<0.000000e+00> : vector<96x16xf32>
    %145 = tpu.matmul %4, %144, %cst_98 {dimension_numbers = #tpu.dot_dimension_numbers<[1], [0], [0], [1], [0, 0, 1, 1], [], []>} : vector<96x24xf32>, vector<24x16xf32>, vector<96x16xf32> -> vector<96x16xf32>
    %146 = vector.extract_strided_slice %145 {offsets = [0, 0], sizes = [48, 16], strides = [1, 1]} : vector<96x16xf32> to vector<48x16xf32>
    %147 = vector.extract_strided_slice %145 {offsets = [48, 0], sizes = [48, 16], strides = [1, 1]} : vector<96x16xf32> to vector<48x16xf32>
    %148 = arith.addf %146, %147 : vector<48x16xf32>
    %cst_99 = arith.constant 5.000000e-01 : f32
    %149 = vector.broadcast %cst_99 : f32 to vector<48x16xf32>
    %150 = arith.mulf %148, %149 : vector<48x16xf32>
    %cst_100 = arith.constant dense<0.000000e+00> : vector<24x16xf32>
    %151 = tpu.matmul %6, %150, %cst_100 {dimension_numbers = #tpu.dot_dimension_numbers<[0], [0], [1], [1], [0, 1, 1, 1], [], []>} : vector<48x24xf32>, vector<48x16xf32>, vector<24x16xf32> -> vector<24x16xf32>
    %152 = vector.broadcast %5 : vector<24x1xf32> to vector<24x16xf32>
    %153 = arith.mulf %151, %152 : vector<24x16xf32>
    %c0_101 = arith.constant 0 : index
    %c0_102 = arith.constant 0 : index
    %154 = vector.load %arg31[%c0_101, %c0_102] : memref<16x32xbf16, #tpu.memory_space<vmem>>, vector<16x32xbf16>
    %c0_103 = arith.constant 0 : index
    %c0_104 = arith.constant 0 : index
    %155 = vector.load %arg32[%c0_103, %c0_104] : memref<2x32xbf16, #tpu.memory_space<vmem>>, vector<2x32xbf16>
    %c0_105 = arith.constant 0 : index
    %c0_106 = arith.constant 0 : index
    %156 = vector.load %arg33[%c0_105, %c0_106] : memref<4x32xbf16, #tpu.memory_space<vmem>>, vector<4x32xbf16>
    %c0_107 = arith.constant 0 : index
    %c0_108 = arith.constant 0 : index
    %157 = vector.load %arg34[%c0_107, %c0_108] : memref<16x32xbf16, #tpu.memory_space<vmem>>, vector<16x32xbf16>
    %c0_109 = arith.constant 0 : index
    %c0_110 = arith.constant 0 : index
    %158 = vector.load %arg35[%c0_109, %c0_110] : memref<2x32xbf16, #tpu.memory_space<vmem>>, vector<2x32xbf16>
    %c0_111 = arith.constant 0 : index
    %c0_112 = arith.constant 0 : index
    %159 = vector.load %arg36[%c0_111, %c0_112] : memref<4x32xbf16, #tpu.memory_space<vmem>>, vector<4x32xbf16>
    %c0_113 = arith.constant 0 : index
    %c0_114 = arith.constant 0 : index
    %160 = vector.load %arg37[%c0_113, %c0_114] : memref<16x32xbf16, #tpu.memory_space<vmem>>, vector<16x32xbf16>
    %c0_115 = arith.constant 0 : index
    %c0_116 = arith.constant 0 : index
    %161 = vector.load %arg38[%c0_115, %c0_116] : memref<1x32xf32, #tpu.memory_space<vmem>>, vector<1x32xf32>
    %c0_117 = arith.constant 0 : index
    %c0_118 = arith.constant 0 : index
    %162 = vector.load %arg39[%c0_117, %c0_118] : memref<32x8xbf16, #tpu.memory_space<vmem>>, vector<32x8xbf16>
    %c0_119 = arith.constant 0 : index
    %c0_120 = arith.constant 0 : index
    %163 = vector.load %arg40[%c0_119, %c0_120] : memref<1x8xf32, #tpu.memory_space<vmem>>, vector<1x8xf32>
    %c0_121 = arith.constant 0 : index
    %c0_122 = arith.constant 0 : index
    %164 = vector.load %arg41[%c0_121, %c0_122] : memref<16x32xbf16, #tpu.memory_space<vmem>>, vector<16x32xbf16>
    %c0_123 = arith.constant 0 : index
    %c0_124 = arith.constant 0 : index
    %165 = vector.load %arg42[%c0_123, %c0_124] : memref<2x32xbf16, #tpu.memory_space<vmem>>, vector<2x32xbf16>
    %c0_125 = arith.constant 0 : index
    %c0_126 = arith.constant 0 : index
    %166 = vector.load %arg43[%c0_125, %c0_126] : memref<4x32xbf16, #tpu.memory_space<vmem>>, vector<4x32xbf16>
    %c0_127 = arith.constant 0 : index
    %c0_128 = arith.constant 0 : index
    %167 = vector.load %arg44[%c0_127, %c0_128] : memref<8x32xbf16, #tpu.memory_space<vmem>>, vector<8x32xbf16>
    %c0_129 = arith.constant 0 : index
    %c0_130 = arith.constant 0 : index
    %168 = vector.load %arg45[%c0_129, %c0_130] : memref<1x32xf32, #tpu.memory_space<vmem>>, vector<1x32xf32>
    %c0_131 = arith.constant 0 : index
    %c0_132 = arith.constant 0 : index
    %169 = vector.load %arg46[%c0_131, %c0_132] : memref<32x16xbf16, #tpu.memory_space<vmem>>, vector<32x16xbf16>
    %c0_133 = arith.constant 0 : index
    %c0_134 = arith.constant 0 : index
    %170 = vector.load %arg47[%c0_133, %c0_134] : memref<1x16xf32, #tpu.memory_space<vmem>>, vector<1x16xf32>
    %cst_135 = arith.constant dense<0.000000e+00> : vector<96x16xf32>
    %171 = tpu.matmul %4, %153, %cst_135 {dimension_numbers = #tpu.dot_dimension_numbers<[1], [0], [0], [1], [0, 0, 1, 1], [], []>} : vector<96x24xf32>, vector<24x16xf32>, vector<96x16xf32> -> vector<96x16xf32>
    %172 = arith.truncf %150 : vector<48x16xf32> to vector<48x16xbf16>
    %cst_136 = arith.constant dense<0.000000e+00> : vector<48x32xf32>
    %173 = tpu.matmul %172, %160, %cst_136 {dimension_numbers = #tpu.dot_dimension_numbers<[1], [0], [0], [1], [0, 0, 1, 1], [], []>} : vector<48x16xbf16>, vector<16x32xbf16>, vector<48x32xf32> -> vector<48x32xf32>
    %174 = vector.broadcast %161 : vector<1x32xf32> to vector<48x32xf32>
    %175 = arith.addf %173, %174 : vector<48x32xf32>
    %176 = vector.extract_strided_slice %171 {offsets = [0, 0], sizes = [48, 16], strides = [1, 1]} : vector<96x16xf32> to vector<48x16xf32>
    %177 = vector.extract_strided_slice %171 {offsets = [48, 0], sizes = [48, 16], strides = [1, 1]} : vector<96x16xf32> to vector<48x16xf32>
    %178 = arith.addf %177, %176 : vector<48x16xf32>
    %cst_137 = arith.constant 5.000000e-01 : f32
    %179 = vector.broadcast %cst_137 : f32 to vector<48x16xf32>
    %180 = arith.mulf %178, %179 : vector<48x16xf32>
    %181 = arith.truncf %180 : vector<48x16xf32> to vector<48x16xbf16>
    %cst_138 = arith.constant dense<0.000000e+00> : vector<48x32xf32>
    %182 = tpu.matmul %181, %154, %cst_138 {dimension_numbers = #tpu.dot_dimension_numbers<[1], [0], [0], [1], [0, 0, 1, 1], [], []>} : vector<48x16xbf16>, vector<16x32xbf16>, vector<48x32xf32> -> vector<48x32xf32>
    %183 = arith.addf %175, %182 : vector<48x32xf32>
    %184 = arith.subf %177, %176 : vector<48x16xf32>
    %185 = math.absf %184 : vector<48x16xf32>
    %cst_139 = arith.constant 5.000000e-01 : f32
    %186 = vector.broadcast %cst_139 : f32 to vector<48x16xf32>
    %187 = arith.mulf %185, %186 : vector<48x16xf32>
    %188 = arith.truncf %187 : vector<48x16xf32> to vector<48x16xbf16>
    %cst_140 = arith.constant dense<0.000000e+00> : vector<48x32xf32>
    %189 = tpu.matmul %188, %157, %cst_140 {dimension_numbers = #tpu.dot_dimension_numbers<[1], [0], [0], [1], [0, 0, 1, 1], [], []>} : vector<48x16xbf16>, vector<16x32xbf16>, vector<48x32xf32> -> vector<48x32xf32>
    %190 = arith.addf %183, %189 : vector<48x32xf32>
    %191 = vector.extract_strided_slice %7 {offsets = [0, 0], sizes = [48, 2], strides = [1, 1]} : vector<96x2xf32> to vector<48x2xf32>
    %192 = vector.extract_strided_slice %7 {offsets = [48, 0], sizes = [48, 2], strides = [1, 1]} : vector<96x2xf32> to vector<48x2xf32>
    %193 = arith.addf %192, %191 : vector<48x2xf32>
    %cst_141 = arith.constant 5.000000e-01 : f32
    %194 = vector.broadcast %cst_141 : f32 to vector<48x2xf32>
    %195 = arith.mulf %193, %194 : vector<48x2xf32>
    %196 = arith.truncf %195 : vector<48x2xf32> to vector<48x2xbf16>
    %cst_142 = arith.constant dense<0.000000e+00> : vector<48x32xf32>
    %197 = tpu.matmul %196, %155, %cst_142 {dimension_numbers = #tpu.dot_dimension_numbers<[1], [0], [0], [1], [0, 0, 1, 1], [], []>} : vector<48x2xbf16>, vector<2x32xbf16>, vector<48x32xf32> -> vector<48x32xf32>
    %198 = arith.addf %190, %197 : vector<48x32xf32>
    %199 = arith.subf %192, %191 : vector<48x2xf32>
    %200 = math.absf %199 : vector<48x2xf32>
    %cst_143 = arith.constant 5.000000e-01 : f32
    %201 = vector.broadcast %cst_143 : f32 to vector<48x2xf32>
    %202 = arith.mulf %200, %201 : vector<48x2xf32>
    %203 = arith.truncf %202 : vector<48x2xf32> to vector<48x2xbf16>
    %cst_144 = arith.constant dense<0.000000e+00> : vector<48x32xf32>
    %204 = tpu.matmul %203, %158, %cst_144 {dimension_numbers = #tpu.dot_dimension_numbers<[1], [0], [0], [1], [0, 0, 1, 1], [], []>} : vector<48x2xbf16>, vector<2x32xbf16>, vector<48x32xf32> -> vector<48x32xf32>
    %205 = arith.addf %198, %204 : vector<48x32xf32>
    %206 = vector.extract_strided_slice %8 {offsets = [0, 0], sizes = [48, 4], strides = [1, 1]} : vector<96x4xf32> to vector<48x4xf32>
    %207 = vector.extract_strided_slice %8 {offsets = [48, 0], sizes = [48, 4], strides = [1, 1]} : vector<96x4xf32> to vector<48x4xf32>
    %208 = arith.addf %207, %206 : vector<48x4xf32>
    %cst_145 = arith.constant 5.000000e-01 : f32
    %209 = vector.broadcast %cst_145 : f32 to vector<48x4xf32>
    %210 = arith.mulf %208, %209 : vector<48x4xf32>
    %211 = arith.truncf %210 : vector<48x4xf32> to vector<48x4xbf16>
    %cst_146 = arith.constant dense<0.000000e+00> : vector<48x32xf32>
    %212 = tpu.matmul %211, %156, %cst_146 {dimension_numbers = #tpu.dot_dimension_numbers<[1], [0], [0], [1], [0, 0, 1, 1], [], []>} : vector<48x4xbf16>, vector<4x32xbf16>, vector<48x32xf32> -> vector<48x32xf32>
    %213 = arith.addf %205, %212 : vector<48x32xf32>
    %214 = arith.subf %207, %206 : vector<48x4xf32>
    %215 = math.absf %214 : vector<48x4xf32>
    %cst_147 = arith.constant 5.000000e-01 : f32
    %216 = vector.broadcast %cst_147 : f32 to vector<48x4xf32>
    %217 = arith.mulf %215, %216 : vector<48x4xf32>
    %218 = arith.truncf %217 : vector<48x4xf32> to vector<48x4xbf16>
    %cst_148 = arith.constant dense<0.000000e+00> : vector<48x32xf32>
    %219 = tpu.matmul %218, %159, %cst_148 {dimension_numbers = #tpu.dot_dimension_numbers<[1], [0], [0], [1], [0, 0, 1, 1], [], []>} : vector<48x4xbf16>, vector<4x32xbf16>, vector<48x32xf32> -> vector<48x32xf32>
    %220 = arith.addf %213, %219 : vector<48x32xf32>
    %cst_149 = arith.constant 0.000000e+00 : f32
    %221 = vector.broadcast %cst_149 : f32 to vector<48x32xf32>
    %222 = arith.maximumf %220, %221 : vector<48x32xf32>
    %223 = arith.truncf %222 : vector<48x32xf32> to vector<48x32xbf16>
    %cst_150 = arith.constant dense<0.000000e+00> : vector<48x8xf32>
    %224 = tpu.matmul %223, %162, %cst_150 {dimension_numbers = #tpu.dot_dimension_numbers<[1], [0], [0], [1], [0, 0, 1, 1], [], []>} : vector<48x32xbf16>, vector<32x8xbf16>, vector<48x8xf32> -> vector<48x8xf32>
    %225 = vector.broadcast %163 : vector<1x8xf32> to vector<48x8xf32>
    %226 = arith.addf %224, %225 : vector<48x8xf32>
    %cst_151 = arith.constant dense<0.000000e+00> : vector<24x8xf32>
    %227 = tpu.matmul %6, %226, %cst_151 {dimension_numbers = #tpu.dot_dimension_numbers<[0], [0], [1], [1], [0, 1, 1, 1], [], []>} : vector<48x24xf32>, vector<48x8xf32>, vector<24x8xf32> -> vector<24x8xf32>
    %228 = arith.truncf %227 : vector<24x8xf32> to vector<24x8xbf16>
    %cst_152 = arith.constant dense<0.000000e+00> : vector<24x32xf32>
    %229 = tpu.matmul %228, %167, %cst_152 {dimension_numbers = #tpu.dot_dimension_numbers<[1], [0], [0], [1], [0, 0, 1, 1], [], []>} : vector<24x8xbf16>, vector<8x32xbf16>, vector<24x32xf32> -> vector<24x32xf32>
    %230 = vector.broadcast %168 : vector<1x32xf32> to vector<24x32xf32>
    %231 = arith.addf %229, %230 : vector<24x32xf32>
    %232 = arith.truncf %153 : vector<24x16xf32> to vector<24x16xbf16>
    %cst_153 = arith.constant dense<0.000000e+00> : vector<24x32xf32>
    %233 = tpu.matmul %232, %164, %cst_153 {dimension_numbers = #tpu.dot_dimension_numbers<[1], [0], [0], [1], [0, 0, 1, 1], [], []>} : vector<24x16xbf16>, vector<16x32xbf16>, vector<24x32xf32> -> vector<24x32xf32>
    %234 = arith.addf %231, %233 : vector<24x32xf32>
    %235 = arith.truncf %1 : vector<24x2xf32> to vector<24x2xbf16>
    %cst_154 = arith.constant dense<0.000000e+00> : vector<24x32xf32>
    %236 = tpu.matmul %235, %165, %cst_154 {dimension_numbers = #tpu.dot_dimension_numbers<[1], [0], [0], [1], [0, 0, 1, 1], [], []>} : vector<24x2xbf16>, vector<2x32xbf16>, vector<24x32xf32> -> vector<24x32xf32>
    %237 = arith.addf %234, %236 : vector<24x32xf32>
    %238 = arith.truncf %2 : vector<24x4xf32> to vector<24x4xbf16>
    %cst_155 = arith.constant dense<0.000000e+00> : vector<24x32xf32>
    %239 = tpu.matmul %238, %166, %cst_155 {dimension_numbers = #tpu.dot_dimension_numbers<[1], [0], [0], [1], [0, 0, 1, 1], [], []>} : vector<24x4xbf16>, vector<4x32xbf16>, vector<24x32xf32> -> vector<24x32xf32>
    %240 = arith.addf %237, %239 : vector<24x32xf32>
    %cst_156 = arith.constant 0.000000e+00 : f32
    %241 = vector.broadcast %cst_156 : f32 to vector<24x32xf32>
    %242 = arith.maximumf %240, %241 : vector<24x32xf32>
    %243 = arith.truncf %242 : vector<24x32xf32> to vector<24x32xbf16>
    %cst_157 = arith.constant dense<0.000000e+00> : vector<24x16xf32>
    %244 = tpu.matmul %243, %169, %cst_157 {dimension_numbers = #tpu.dot_dimension_numbers<[1], [0], [0], [1], [0, 0, 1, 1], [], []>} : vector<24x32xbf16>, vector<32x16xbf16>, vector<24x16xf32> -> vector<24x16xf32>
    %245 = vector.broadcast %170 : vector<1x16xf32> to vector<24x16xf32>
    %246 = arith.addf %244, %245 : vector<24x16xf32>
    %cst_158 = arith.constant 0.000000e+00 : f32
    %247 = vector.broadcast %cst_158 : f32 to vector<24x16xf32>
    %248 = arith.maximumf %246, %247 : vector<24x16xf32>
    %cst_159 = arith.constant dense<0.000000e+00> : vector<96x16xf32>
    %249 = tpu.matmul %4, %248, %cst_159 {dimension_numbers = #tpu.dot_dimension_numbers<[1], [0], [0], [1], [0, 0, 1, 1], [], []>} : vector<96x24xf32>, vector<24x16xf32>, vector<96x16xf32> -> vector<96x16xf32>
    %250 = vector.extract_strided_slice %249 {offsets = [0, 0], sizes = [48, 16], strides = [1, 1]} : vector<96x16xf32> to vector<48x16xf32>
    %251 = vector.extract_strided_slice %249 {offsets = [48, 0], sizes = [48, 16], strides = [1, 1]} : vector<96x16xf32> to vector<48x16xf32>
    %252 = arith.addf %250, %251 : vector<48x16xf32>
    %cst_160 = arith.constant 5.000000e-01 : f32
    %253 = vector.broadcast %cst_160 : f32 to vector<48x16xf32>
    %254 = arith.mulf %252, %253 : vector<48x16xf32>
    %cst_161 = arith.constant dense<0.000000e+00> : vector<24x16xf32>
    %255 = tpu.matmul %6, %254, %cst_161 {dimension_numbers = #tpu.dot_dimension_numbers<[0], [0], [1], [1], [0, 1, 1, 1], [], []>} : vector<48x24xf32>, vector<48x16xf32>, vector<24x16xf32> -> vector<24x16xf32>
    %256 = vector.broadcast %5 : vector<24x1xf32> to vector<24x16xf32>
    %257 = arith.mulf %255, %256 : vector<24x16xf32>
    %c0_162 = arith.constant 0 : index
    %c0_163 = arith.constant 0 : index
    %258 = vector.load %arg48[%c0_162, %c0_163] : memref<16x3xbf16, #tpu.memory_space<vmem>>, vector<16x3xbf16>
    %c0_164 = arith.constant 0 : index
    %c0_165 = arith.constant 0 : index
    %259 = vector.load %arg49[%c0_164, %c0_165] : memref<2x3xbf16, #tpu.memory_space<vmem>>, vector<2x3xbf16>
    %c0_166 = arith.constant 0 : index
    %c0_167 = arith.constant 0 : index
    %260 = vector.load %arg50[%c0_166, %c0_167] : memref<1x3xf32, #tpu.memory_space<vmem>>, vector<1x3xf32>
    %261 = arith.truncf %257 : vector<24x16xf32> to vector<24x16xbf16>
    %cst_168 = arith.constant dense<0.000000e+00> : vector<24x3xf32>
    %262 = tpu.matmul %261, %258, %cst_168 {dimension_numbers = #tpu.dot_dimension_numbers<[1], [0], [0], [1], [0, 0, 1, 1], [], []>} : vector<24x16xbf16>, vector<16x3xbf16>, vector<24x3xf32> -> vector<24x3xf32>
    %263 = vector.broadcast %260 : vector<1x3xf32> to vector<24x3xf32>
    %264 = arith.addf %263, %262 : vector<24x3xf32>
    %265 = arith.truncf %1 : vector<24x2xf32> to vector<24x2xbf16>
    %cst_169 = arith.constant dense<0.000000e+00> : vector<24x3xf32>
    %266 = tpu.matmul %265, %259, %cst_169 {dimension_numbers = #tpu.dot_dimension_numbers<[1], [0], [0], [1], [0, 0, 1, 1], [], []>} : vector<24x2xbf16>, vector<2x3xbf16>, vector<24x3xf32> -> vector<24x3xf32>
    %267 = arith.addf %264, %266 : vector<24x3xf32>
    %c0_170 = arith.constant 0 : index
    %c0_171 = arith.constant 0 : index
    %268 = vector.load %arg51[%c0_170, %c0_171] : memref<24x3xf32, #tpu.memory_space<vmem>>, vector<24x3xf32>
    tpu.vector_store %arg51[%c0_170, %c0_171], %267 {strides = array<i32>} : memref<24x3xf32, #tpu.memory_space<vmem>>, vector<24x3xf32>,
    return
  }
}

</mosaic_0001>

<llo_original>
// kernel: _forward_impl.1
$region0: #{_forward_impl.1}
  #allocation0 [shape = 'u32[]', space=smem, size = 0x4, offset = 0x4, fixed_abs, tag = 'smem constant byte address 0x4 - core index']
  #allocation1 [shape = 'u32[144,128]{1,0:T(1,128)}', space=vmem, size = 0x12000, scoped, tag = 'internal scratch']
  %s0 = inlined_call_operand.smem [shape: u32[52], index: -1, kind: input, shape index: {}]
  %s1 = sld [smem:[%s0]]
  %s2 = scalar_lea.smem %s0, 1
  %s3 = sld [smem:[%s2]]
  %s4 = scalar_lea.smem %s0, 2
  %s5 = sld [smem:[%s4]]
  %s6 = scalar_lea.smem %s0, 3
  %s7 = sld [smem:[%s6]]
  %s8 = scalar_lea.smem %s0, 4
  %s9 = sld [smem:[%s8]]
  %s10 = scalar_lea.smem %s0, 5
  %s11 = sld [smem:[%s10]]
  %s12 = scalar_lea.smem %s0, 6
  %s13 = sld [smem:[%s12]]
  %s14 = scalar_lea.smem %s0, 7
  %s15 = sld [smem:[%s14]]
  %s16 = scalar_lea.smem %s0, 8
  %s17 = sld [smem:[%s16]]
  %s18 = scalar_lea.smem %s0, 9
  %s19 = sld [smem:[%s18]]
  %s20 = scalar_lea.smem %s0, 10
  %s21 = sld [smem:[%s20]]
  %s22 = scalar_lea.smem %s0, 11
  %s23 = sld [smem:[%s22]]
  %s24 = scalar_lea.smem %s0, 12
  %s25 = sld [smem:[%s24]]
  %s26 = scalar_lea.smem %s0, 13
  %s27 = sld [smem:[%s26]]
  %s28 = scalar_lea.smem %s0, 14
  %s29 = sld [smem:[%s28]]
  %s30 = scalar_lea.smem %s0, 15
  %s31 = sld [smem:[%s30]]
  %s32 = scalar_lea.smem %s0, 16
  %s33 = sld [smem:[%s32]]
  %s34 = scalar_lea.smem %s0, 17
  %s35 = sld [smem:[%s34]]
  %s36 = scalar_lea.smem %s0, 18
  %s37 = sld [smem:[%s36]]
  %s38 = scalar_lea.smem %s0, 19
  %s39 = sld [smem:[%s38]]
  %s40 = scalar_lea.smem %s0, 20
  %s41 = sld [smem:[%s40]]
  %s42 = scalar_lea.smem %s0, 21
  %s43 = sld [smem:[%s42]]
  %s44 = scalar_lea.smem %s0, 22
  %s45 = sld [smem:[%s44]]
  %s46 = scalar_lea.smem %s0, 23
  %s47 = sld [smem:[%s46]]
  %s48 = scalar_lea.smem %s0, 24
  %s49 = sld [smem:[%s48]]
  %s50 = scalar_lea.smem %s0, 25
  %s51 = sld [smem:[%s50]]
  %s52 = scalar_lea.smem %s0, 26
  %s53 = sld [smem:[%s52]]
  %s54 = scalar_lea.smem %s0, 27
  %s55 = sld [smem:[%s54]]
  %s56 = scalar_lea.smem %s0, 28
  %s57 = sld [smem:[%s56]]
  %s58 = scalar_lea.smem %s0, 29
  %s59 = sld [smem:[%s58]]
  %s60 = scalar_lea.smem %s0, 30
  %s61 = sld [smem:[%s60]]
  %s62 = scalar_lea.smem %s0, 31
  %s63 = sld [smem:[%s62]]
  %s64 = scalar_lea.smem %s0, 32
  %s65 = sld [smem:[%s64]]
  %s66 = scalar_lea.smem %s0, 33
  %s67 = sld [smem:[%s66]]
  %s68 = scalar_lea.smem %s0, 34
  %s69 = sld [smem:[%s68]]
  %s70 = scalar_lea.smem %s0, 35
  %s71 = sld [smem:[%s70]]
  %s72 = scalar_lea.smem %s0, 36
  %s73 = sld [smem:[%s72]]
  %s74 = scalar_lea.smem %s0, 37
  %s75 = sld [smem:[%s74]]
  %s76 = scalar_lea.smem %s0, 38
  %s77 = sld [smem:[%s76]]
  %s78 = scalar_lea.smem %s0, 39
  %s79 = sld [smem:[%s78]]
  %s80 = scalar_lea.smem %s0, 40
  %s81 = sld [smem:[%s80]]
  %s82 = scalar_lea.smem %s0, 41
  %s83 = sld [smem:[%s82]]
  %s84 = scalar_lea.smem %s0, 42
  %s85 = sld [smem:[%s84]]
  %s86 = scalar_lea.smem %s0, 43
  %s87 = sld [smem:[%s86]]
  %s88 = scalar_lea.smem %s0, 44
  %s89 = sld [smem:[%s88]]
  %s90 = scalar_lea.smem %s0, 45
  %s91 = sld [smem:[%s90]]
  %s92 = scalar_lea.smem %s0, 46
  %s93 = sld [smem:[%s92]]
  %s94 = scalar_lea.smem %s0, 47
  %s95 = sld [smem:[%s94]]
  %s96 = scalar_lea.smem %s0, 48
  %s97 = sld [smem:[%s96]]
  %s98 = scalar_lea.smem %s0, 49
  %s99 = sld [smem:[%s98]]
  %s100 = scalar_lea.smem %s0, 50
  %s101 = sld [smem:[%s100]]
  %s102 = scalar_lea.smem %s0, 51
  %s103 = sld [smem:[%s102]]
  %s104 = sld [smem:[#allocation0]]
  $region214: #{_forward_impl.1} parent=0
    _
  %s106 = ssub.s32 1, %s104
  %s107 = scalar_select 0, %s106, %s104
  // Predicated region
  $region2: #{_forward_impl.1} parent=0 // pred_check
    _
  $region3: #{_forward_impl.1} parent=0 // pred_check_branch
    %109 = sbr.rel (0) target = $region5
  $region4: #{_forward_impl.1} parent=0 // pred_region
    _
  $region5: #{_forward_impl.1} parent=0 // pred_fallthru
    _
  // Predicated region
  $region6: #{_forward_impl.1} parent=0 // pred_check
    _
  $region7: #{_forward_impl.1} parent=0 // pred_check_branch
    %111 = sbr.rel (0) target = $region9
  $region8: #{_forward_impl.1} parent=0 // pred_region
    _
  $region9: #{_forward_impl.1} parent=0 // pred_fallthru
    _
  // Predicated region
  $region10: #{_forward_impl.1} parent=0 // pred_check
    _
  $region11: #{_forward_impl.1} parent=0 // pred_check_branch
    %113 = sbr.rel (0) target = $region13
  $region12: #{_forward_impl.1} parent=0 // pred_region
    _
  $region13: #{_forward_impl.1} parent=0 // pred_fallthru
    _
  // Predicated region
  $region14: #{_forward_impl.1} parent=0 // pred_check
    _
  $region15: #{_forward_impl.1} parent=0 // pred_check_branch
    %115 = sbr.rel (0) target = $region17
  $region16: #{_forward_impl.1} parent=0 // pred_region
    _
  $region17: #{_forward_impl.1} parent=0 // pred_fallthru
    _
  // Predicated region
  $region18: #{_forward_impl.1} parent=0 // pred_check
    _
  $region19: #{_forward_impl.1} parent=0 // pred_check_branch
    %117 = sbr.rel (0) target = $region21
  $region20: #{_forward_impl.1} parent=0 // pred_region
    _
  $region21: #{_forward_impl.1} parent=0 // pred_fallthru
    _
  // Predicated region
  $region22: #{_forward_impl.1} parent=0 // pred_check
    _
  $region23: #{_forward_impl.1} parent=0 // pred_check_branch
    %119 = sbr.rel (0) target = $region25
  $region24: #{_forward_impl.1} parent=0 // pred_region
    _
  $region25: #{_forward_impl.1} parent=0 // pred_fallthru
    _
  // Predicated region
  $region26: #{_forward_impl.1} parent=0 // pred_check
    _
  $region27: #{_forward_impl.1} parent=0 // pred_check_branch
    %121 = sbr.rel (0) target = $region29
  $region28: #{_forward_impl.1} parent=0 // pred_region
    _
  $region29: #{_forward_impl.1} parent=0 // pred_fallthru
    _
  // Predicated region
  $region30: #{_forward_impl.1} parent=0 // pred_check
    _
  $region31: #{_forward_impl.1} parent=0 // pred_check_branch
    %123 = sbr.rel (0) target = $region33
  $region32: #{_forward_impl.1} parent=0 // pred_region
    _
  $region33: #{_forward_impl.1} parent=0 // pred_fallthru
    _
  // Predicated region
  $region34: #{_forward_impl.1} parent=0 // pred_check
    _
  $region35: #{_forward_impl.1} parent=0 // pred_check_branch
    %125 = sbr.rel (0) target = $region37
  $region36: #{_forward_impl.1} parent=0 // pred_region
    _
  $region37: #{_forward_impl.1} parent=0 // pred_fallthru
    _
  // Predicated region
  $region38: #{_forward_impl.1} parent=0 // pred_check
    _
  $region39: #{_forward_impl.1} parent=0 // pred_check_branch
    %127 = sbr.rel (0) target = $region41
  $region40: #{_forward_impl.1} parent=0 // pred_region
    _
  $region41: #{_forward_impl.1} parent=0 // pred_fallthru
    _
  // Predicated region
  $region42: #{_forward_impl.1} parent=0 // pred_check
    _
  $region43: #{_forward_impl.1} parent=0 // pred_check_branch
    %129 = sbr.rel (0) target = $region45
  $region44: #{_forward_impl.1} parent=0 // pred_region
    _
  $region45: #{_forward_impl.1} parent=0 // pred_fallthru
    _
  // Predicated region
  $region46: #{_forward_impl.1} parent=0 // pred_check
    _
  $region47: #{_forward_impl.1} parent=0 // pred_check_branch
    %131 = sbr.rel (0) target = $region49
  $region48: #{_forward_impl.1} parent=0 // pred_region
    _
  $region49: #{_forward_impl.1} parent=0 // pred_fallthru
    _
  // Predicated region
  $region50: #{_forward_impl.1} parent=0 // pred_check
    _
  $region51: #{_forward_impl.1} parent=0 // pred_check_branch
    %133 = sbr.rel (0) target = $region53
  $region52: #{_forward_impl.1} parent=0 // pred_region
    _
  $region53: #{_forward_impl.1} parent=0 // pred_fallthru
    _
  // Predicated region
  $region54: #{_forward_impl.1} parent=0 // pred_check
    _
  $region55: #{_forward_impl.1} parent=0 // pred_check_branch
    %135 = sbr.rel (0) target = $region57
  $region56: #{_forward_impl.1} parent=0 // pred_region
    _
  $region57: #{_forward_impl.1} parent=0 // pred_fallthru
    _
  // Predicated region
  $region58: #{_forward_impl.1} parent=0 // pred_check
    _
  $region59: #{_forward_impl.1} parent=0 // pred_check_branch
    %137 = sbr.rel (0) target = $region61
  $region60: #{_forward_impl.1} parent=0 // pred_region
    _
  $region61: #{_forward_impl.1} parent=0 // pred_fallthru
    _
  // Predicated region
  $region62: #{_forward_impl.1} parent=0 // pred_check
    _
  $region63: #{_forward_impl.1} parent=0 // pred_check_branch
    %139 = sbr.rel (0) target = $region65
  $region64: #{_forward_impl.1} parent=0 // pred_region
    _
  $region65: #{_forward_impl.1} parent=0 // pred_fallthru
    _
  // Predicated region
  $region66: #{_forward_impl.1} parent=0 // pred_check
    _
  $region67: #{_forward_impl.1} parent=0 // pred_check_branch
    %141 = sbr.rel (0) target = $region69
  $region68: #{_forward_impl.1} parent=0 // pred_region
    _
  $region69: #{_forward_impl.1} parent=0 // pred_fallthru
    _
  // Predicated region
  $region70: #{_forward_impl.1} parent=0 // pred_check
    _
  $region71: #{_forward_impl.1} parent=0 // pred_check_branch
    %143 = sbr.rel (0) target = $region73
  $region72: #{_forward_impl.1} parent=0 // pred_region
    _
  $region73: #{_forward_impl.1} parent=0 // pred_fallthru
    _
  // Predicated region
  $region74: #{_forward_impl.1} parent=0 // pred_check
    _
  $region75: #{_forward_impl.1} parent=0 // pred_check_branch
    %145 = sbr.rel (0) target = $region77
  $region76: #{_forward_impl.1} parent=0 // pred_region
    _
  $region77: #{_forward_impl.1} parent=0 // pred_fallthru
    _
  // Predicated region
  $region78: #{_forward_impl.1} parent=0 // pred_check
    _
  $region79: #{_forward_impl.1} parent=0 // pred_check_branch
    %147 = sbr.rel (0) target = $region81
  $region80: #{_forward_impl.1} parent=0 // pred_region
    _
  $region81: #{_forward_impl.1} parent=0 // pred_fallthru
    _
  // Predicated region
  $region82: #{_forward_impl.1} parent=0 // pred_check
    _
  $region83: #{_forward_impl.1} parent=0 // pred_check_branch
    %149 = sbr.rel (0) target = $region85
  $region84: #{_forward_impl.1} parent=0 // pred_region
    _
  $region85: #{_forward_impl.1} parent=0 // pred_fallthru
    _
  // Predicated region
  $region86: #{_forward_impl.1} parent=0 // pred_check
    _
  $region87: #{_forward_impl.1} parent=0 // pred_check_branch
    %151 = sbr.rel (0) target = $region89
  $region88: #{_forward_impl.1} parent=0 // pred_region
    _
  $region89: #{_forward_impl.1} parent=0 // pred_fallthru
    _
  // Predicated region
  $region90: #{_forward_impl.1} parent=0 // pred_check
    _
  $region91: #{_forward_impl.1} parent=0 // pred_check_branch
    %153 = sbr.rel (0) target = $region93
  $region92: #{_forward_impl.1} parent=0 // pred_region
    _
  $region93: #{_forward_impl.1} parent=0 // pred_fallthru
    _
  // Predicated region
  $region94: #{_forward_impl.1} parent=0 // pred_check
    _
  $region95: #{_forward_impl.1} parent=0 // pred_check_branch
    %155 = sbr.rel (0) target = $region97
  $region96: #{_forward_impl.1} parent=0 // pred_region
    _
  $region97: #{_forward_impl.1} parent=0 // pred_fallthru
    _
  // Predicated region
  $region98: #{_forward_impl.1} parent=0 // pred_check
    _
  $region99: #{_forward_impl.1} parent=0 // pred_check_branch
    %157 = sbr.rel (0) target = $region101
  $region100: #{_forward_impl.1} parent=0 // pred_region
    _
  $region101: #{_forward_impl.1} parent=0 // pred_fallthru
    _
  // Predicated region
  $region102: #{_forward_impl.1} parent=0 // pred_check
    _
  $region103: #{_forward_impl.1} parent=0 // pred_check_branch
    %159 = sbr.rel (0) target = $region105
  $region104: #{_forward_impl.1} parent=0 // pred_region
    _
  $region105: #{_forward_impl.1} parent=0 // pred_fallthru
    _
  // Predicated region
  $region106: #{_forward_impl.1} parent=0 // pred_check
    _
  $region107: #{_forward_impl.1} parent=0 // pred_check_branch
    %161 = sbr.rel (0) target = $region109
  $region108: #{_forward_impl.1} parent=0 // pred_region
    _
  $region109: #{_forward_impl.1} parent=0 // pred_fallthru
    _
  // Predicated region
  $region110: #{_forward_impl.1} parent=0 // pred_check
    _
  $region111: #{_forward_impl.1} parent=0 // pred_check_branch
    %163 = sbr.rel (0) target = $region113
  $region112: #{_forward_impl.1} parent=0 // pred_region
    _
  $region113: #{_forward_impl.1} parent=0 // pred_fallthru
    _
  // Predicated region
  $region114: #{_forward_impl.1} parent=0 // pred_check
    _
  $region115: #{_forward_impl.1} parent=0 // pred_check_branch
    %165 = sbr.rel (0) target = $region117
  $region116: #{_forward_impl.1} parent=0 // pred_region
    _
  $region117: #{_forward_impl.1} parent=0 // pred_fallthru
    _
  // Predicated region
  $region118: #{_forward_impl.1} parent=0 // pred_check
    _
  $region119: #{_forward_impl.1} parent=0 // pred_check_branch
    %167 = sbr.rel (0) target = $region121
  $region120: #{_forward_impl.1} parent=0 // pred_region
    _
  $region121: #{_forward_impl.1} parent=0 // pred_fallthru
    _
  // Predicated region
  $region122: #{_forward_impl.1} parent=0 // pred_check
    _
  $region123: #{_forward_impl.1} parent=0 // pred_check_branch
    %169 = sbr.rel (0) target = $region125
  $region124: #{_forward_impl.1} parent=0 // pred_region
    _
  $region125: #{_forward_impl.1} parent=0 // pred_fallthru
    _
  // Predicated region
  $region126: #{_forward_impl.1} parent=0 // pred_check
    _
  $region127: #{_forward_impl.1} parent=0 // pred_check_branch
    %171 = sbr.rel (0) target = $region129
  $region128: #{_forward_impl.1} parent=0 // pred_region
    _
  $region129: #{_forward_impl.1} parent=0 // pred_fallthru
    _
  // Predicated region
  $region130: #{_forward_impl.1} parent=0 // pred_check
    _
  $region131: #{_forward_impl.1} parent=0 // pred_check_branch
    %173 = sbr.rel (0) target = $region133
  $region132: #{_forward_impl.1} parent=0 // pred_region
    _
  $region133: #{_forward_impl.1} parent=0 // pred_fallthru
    _
  // Predicated region
  $region134: #{_forward_impl.1} parent=0 // pred_check
    _
  $region135: #{_forward_impl.1} parent=0 // pred_check_branch
    %175 = sbr.rel (0) target = $region137
  $region136: #{_forward_impl.1} parent=0 // pred_region
    _
  $region137: #{_forward_impl.1} parent=0 // pred_fallthru
    _
  // Predicated region
  $region138: #{_forward_impl.1} parent=0 // pred_check
    _
  $region139: #{_forward_impl.1} parent=0 // pred_check_branch
    %177 = sbr.rel (0) target = $region141
  $region140: #{_forward_impl.1} parent=0 // pred_region
    _
  $region141: #{_forward_impl.1} parent=0 // pred_fallthru
    _
  // Predicated region
  $region142: #{_forward_impl.1} parent=0 // pred_check
    _
  $region143: #{_forward_impl.1} parent=0 // pred_check_branch
    %179 = sbr.rel (0) target = $region145
  $region144: #{_forward_impl.1} parent=0 // pred_region
    _
  $region145: #{_forward_impl.1} parent=0 // pred_fallthru
    _
  // Predicated region
  $region146: #{_forward_impl.1} parent=0 // pred_check
    _
  $region147: #{_forward_impl.1} parent=0 // pred_check_branch
    %181 = sbr.rel (0) target = $region149
  $region148: #{_forward_impl.1} parent=0 // pred_region
    _
  $region149: #{_forward_impl.1} parent=0 // pred_fallthru
    _
  // Predicated region
  $region150: #{_forward_impl.1} parent=0 // pred_check
    _
  $region151: #{_forward_impl.1} parent=0 // pred_check_branch
    %183 = sbr.rel (0) target = $region153
  $region152: #{_forward_impl.1} parent=0 // pred_region
    _
  $region153: #{_forward_impl.1} parent=0 // pred_fallthru
    _
  // Predicated region
  $region154: #{_forward_impl.1} parent=0 // pred_check
    _
  $region155: #{_forward_impl.1} parent=0 // pred_check_branch
    %185 = sbr.rel (0) target = $region157
  $region156: #{_forward_impl.1} parent=0 // pred_region
    _
  $region157: #{_forward_impl.1} parent=0 // pred_fallthru
    _
  // Predicated region
  $region158: #{_forward_impl.1} parent=0 // pred_check
    _
  $region159: #{_forward_impl.1} parent=0 // pred_check_branch
    %187 = sbr.rel (0) target = $region161
  $region160: #{_forward_impl.1} parent=0 // pred_region
    _
  $region161: #{_forward_impl.1} parent=0 // pred_fallthru
    _
  // Predicated region
  $region162: #{_forward_impl.1} parent=0 // pred_check
    _
  $region163: #{_forward_impl.1} parent=0 // pred_check_branch
    %189 = sbr.rel (0) target = $region165
  $region164: #{_forward_impl.1} parent=0 // pred_region
    _
  $region165: #{_forward_impl.1} parent=0 // pred_fallthru
    _
  // Predicated region
  $region166: #{_forward_impl.1} parent=0 // pred_check
    _
  $region167: #{_forward_impl.1} parent=0 // pred_check_branch
    %191 = sbr.rel (0) target = $region169
  $region168: #{_forward_impl.1} parent=0 // pred_region
    _
  $region169: #{_forward_impl.1} parent=0 // pred_fallthru
    _
  // Predicated region
  $region170: #{_forward_impl.1} parent=0 // pred_check
    _
  $region171: #{_forward_impl.1} parent=0 // pred_check_branch
    %193 = sbr.rel (0) target = $region173
  $region172: #{_forward_impl.1} parent=0 // pred_region
    _
  $region173: #{_forward_impl.1} parent=0 // pred_fallthru
    _
  // Predicated region
  $region174: #{_forward_impl.1} parent=0 // pred_check
    _
  $region175: #{_forward_impl.1} parent=0 // pred_check_branch
    %195 = sbr.rel (0) target = $region177
  $region176: #{_forward_impl.1} parent=0 // pred_region
    _
  $region177: #{_forward_impl.1} parent=0 // pred_fallthru
    _
  // Predicated region
  $region178: #{_forward_impl.1} parent=0 // pred_check
    _
  $region179: #{_forward_impl.1} parent=0 // pred_check_branch
    %197 = sbr.rel (0) target = $region181
  $region180: #{_forward_impl.1} parent=0 // pred_region
    _
  $region181: #{_forward_impl.1} parent=0 // pred_fallthru
    _
  // Predicated region
  $region182: #{_forward_impl.1} parent=0 // pred_check
    _
  $region183: #{_forward_impl.1} parent=0 // pred_check_branch
    %199 = sbr.rel (0) target = $region185
  $region184: #{_forward_impl.1} parent=0 // pred_region
    _
  $region185: #{_forward_impl.1} parent=0 // pred_fallthru
    _
  // Predicated region
  $region186: #{_forward_impl.1} parent=0 // pred_check
    _
  $region187: #{_forward_impl.1} parent=0 // pred_check_branch
    %201 = sbr.rel (0) target = $region189
  $region188: #{_forward_impl.1} parent=0 // pred_region
    _
  $region189: #{_forward_impl.1} parent=0 // pred_fallthru
    _
  // Predicated region
  $region190: #{_forward_impl.1} parent=0 // pred_check
    _
  $region191: #{_forward_impl.1} parent=0 // pred_check_branch
    %203 = sbr.rel (0) target = $region193
  $region192: #{_forward_impl.1} parent=0 // pred_region
    _
  $region193: #{_forward_impl.1} parent=0 // pred_fallthru
    _
  // Predicated region
  $region194: #{_forward_impl.1} parent=0 // pred_check
    _
  $region195: #{_forward_impl.1} parent=0 // pred_check_branch
    %205 = sbr.rel (0) target = $region197
  $region196: #{_forward_impl.1} parent=0 // pred_region
    _
  $region197: #{_forward_impl.1} parent=0 // pred_fallthru
    _
  // Predicated region
  $region198: #{_forward_impl.1} parent=0 // pred_check
    _
  $region199: #{_forward_impl.1} parent=0 // pred_check_branch
    %207 = sbr.rel (0) target = $region201
  $region200: #{_forward_impl.1} parent=0 // pred_region
    _
  $region201: #{_forward_impl.1} parent=0 // pred_fallthru
    _
  // Predicated region
  $region202: #{_forward_impl.1} parent=0 // pred_check
    _
  $region203: #{_forward_impl.1} parent=0 // pred_check_branch
    %209 = sbr.rel (0) target = $region205
  $region204: #{_forward_impl.1} parent=0 // pred_region
    _
  $region205: #{_forward_impl.1} parent=0 // pred_fallthru
    _
  %v211 = vld [vmem:[%s1] sm:$0xff]
  %v212 = vld [vmem:[%s1 + $0x8] sm:$0xff]
  %v213 = vld [vmem:[%s1 + $0x10] sm:$0xff]
  %v214 = vld [vmem:[%s3] sm:$0xff]
  %v215 = vld [vmem:[%s3 + $0x8] sm:$0xff]
  %v216 = vld [vmem:[%s3 + $0x10] sm:$0xff]
  %v217 = vld [vmem:[%s5] sm:$0xff]
  %v218 = vld [vmem:[%s5 + $0x8] sm:$0xff]
  %v219 = vld [vmem:[%s5 + $0x10] sm:$0xff]
  %v220 = vld [vmem:[%s7] sm:$0xff]
  %v221 = vld [vmem:[%s7 + $0x8] sm:$0xff]
  %v222 = vld [vmem:[%s7 + $0x10] sm:$0xff]
  %v223 = vld [vmem:[%s7 + $0x18] sm:$0xff]
  %v224 = vld [vmem:[%s7 + $0x20] sm:$0xff]
  %v225 = vld [vmem:[%s7 + $0x28] sm:$0xff]
  %v226 = vld [vmem:[%s9] sm:$0xff]
  %v227 = vld [vmem:[%s9 + $0x8] sm:$0xff]
  %v228 = vld [vmem:[%s9 + $0x10] sm:$0xff]
  %v229 = vld [vmem:[%s9 + $0x18] sm:$0xff]
  %v230 = vld [vmem:[%s9 + $0x20] sm:$0xff]
  %v231 = vld [vmem:[%s9 + $0x28] sm:$0xff]
  %v232 = vld [vmem:[%s9 + $0x30] sm:$0xff]
  %v233 = vld [vmem:[%s9 + $0x38] sm:$0xff]
  %v234 = vld [vmem:[%s9 + $0x40] sm:$0xff]
  %v235 = vld [vmem:[%s9 + $0x48] sm:$0xff]
  %v236 = vld [vmem:[%s9 + $0x50] sm:$0xff]
  %v237 = vld [vmem:[%s9 + $0x58] sm:$0xff]
  %v238 = vld [vmem:[%s11] sm:$0xff]
  %v239 = vld [vmem:[%s11 + $0x8] sm:$0xff]
  %v240 = vld [vmem:[%s11 + $0x10] sm:$0xff]
  %vm241 = vcmask 195584
  %v243 = vsel %vm241, %v226, 0
  %v246 = vsel %vm241, %v227, 0
  %v249 = vsel %vm241, %v228, 0
  %v252 = vsel %vm241, %v229, 0
  %v255 = vsel %vm241, %v230, 0
  %v258 = vsel %vm241, %v231, 0
  %v261 = vsel %vm241, %v232, 0
  %v264 = vsel %vm241, %v233, 0
  %v267 = vsel %vm241, %v234, 0
  %v270 = vsel %vm241, %v235, 0
  %v273 = vsel %vm241, %v236, 0
  %v276 = vsel %vm241, %v237, 0
  %278 = vmatprep.subr.mxu0 0.0
  %279 = vmatpush1.msra.mxu0 %v214
  %280 = vmatprep.subr.mxu0 0.0
  %281 = vmatpush1.msra.mxu0 %v215
  %282 = vmatprep.subr.mxu0 0.0
  %283 = vmatpush1.msra.mxu0 %v216
  %284 = vmatprep.subr.mxu0 0.0
  %285 = vmatpush1.msra.mxu0 0.0
  %286 = vmatprep.subr.mxu0 0.0
  %287 = vmatpush1.msra.mxu0 0.0
  %288 = vmatprep.subr.mxu0 0.0
  %289 = vmatpush1.msra.mxu0 0.0
  %290 = vmatprep.subr.mxu0 0.0
  %291 = vmatpush1.msra.mxu0 0.0
  %292 = vmatprep.subr.mxu0 0.0
  %293 = vmatpush1.msra.mxu0 0.0
  %294 = vmatprep.subr.mxu0 0.0
  %295 = vmatpush1.msra.mxu0 0.0
  %296 = vmatprep.subr.mxu0 0.0
  %297 = vmatpush1.msra.mxu0 0.0
  %298 = vmatprep.subr.mxu0 0.0
  %299 = vmatpush1.msra.mxu0 0.0
  %300 = vmatprep.subr.mxu0 0.0
  %301 = vmatpush1.msra.mxu0 0.0
  %302 = vmatprep.subr.mxu0 0.0
  %303 = vmatpush1.msra.mxu0 0.0
  %304 = vmatprep.subr.mxu0 0.0
  %305 = vmatpush1.msra.mxu0 0.0
  %306 = vmatprep.subr.mxu0 0.0
  %307 = vmatpush1.msra.mxu0 0.0
  %308 = vmatprep.subr.mxu0 0.0
  %309 = vmatpush1.msra.mxu0 0.0
  %310 = vmatprep.subr.mxu0 0.0
  %311 = vmatpush1.msra.mxu0 0.0
  %312 = vmatprep.subr.mxu0 0.0
  %313 = vmatpush1.msra.mxu0 0.0
  %314 = vmatprep.subr.mxu0 0.0
  %315 = vmatpush1.msra.mxu0 0.0
  %316 = vmatprep.subr.mxu0 0.0
  %317 = vmatpush1.msra.mxu0 0.0
  %318 = vmatprep.subr.mxu0 0.0
  %319 = vmatpush1.msra.mxu0 0.0
  %320 = vmatprep.subr.mxu0 0.0
  %321 = vmatpush1.msra.mxu0 0.0
  %322 = vmatprep.subr.mxu0 0.0
  %323 = vmatpush1.msra.mxu0 0.0
  %324 = vmatprep.subr.mxu0 0.0
  %325 = vmatpush1.msra.mxu0 0.0
  %326 = vmatprep.subr.mxu0 0.0
  %327 = vmatpush1.msra.mxu0 0.0
  %328 = vmatprep.subr.mxu0 0.0
  %329 = vmatpush1.msra.mxu0 0.0
  %330 = vmatprep.subr.mxu0 0.0
  %331 = vmatpush1.msra.mxu0 0.0
  %332 = vmatprep.subr.mxu0 0.0
  %333 = vmatpush1.msra.mxu0 0.0
  %334 = vmatprep.subr.mxu0 0.0
  %335 = vmatpush1.msra.mxu0 0.0
  %336 = vmatprep.subr.mxu0 0.0
  %337 = vmatpush1.msra.mxu0 0.0
  %338 = vmatprep.subr.mxu0 0.0
  %339 = vmatpush1.msra.mxu0 0.0
  %340 = vmatprep.subr.mxu0 0.0
  %341 = vmatpush1.msra.mxu0 0.0
  %342 = vmatprep.mubr.f32.mxu0 0.0
  %343 = vmatmul.mubr.f32.gmra.mrb[0].mxu0 %v243
  %v344 = vpop.f32.mrb[0].mxu0
  %v345 = vadd.f32 0.0, %v344
  %v346 = vpop.f32.mrb[0].mxu0
  %347 = vmatprep.mubr.f32.mxu0 0.0
  %348 = vmatmul.mubr.f32.gmra.mrb[0].mxu0 %v246
  %v349 = vpop.f32.mrb[0].mxu0
  %v350 = vadd.f32 0.0, %v349
  %v351 = vpop.f32.mrb[0].mxu0
  %352 = vmatprep.mubr.f32.mxu0 0.0
  %353 = vmatmul.mubr.f32.gmra.mrb[0].mxu0 %v249
  %v354 = vpop.f32.mrb[0].mxu0
  %v355 = vadd.f32 0.0, %v354
  %v356 = vpop.f32.mrb[0].mxu0
  %357 = vmatprep.mubr.f32.mxu0 0.0
  %358 = vmatmul.mubr.f32.gmra.mrb[0].mxu0 %v252
  %v359 = vpop.f32.mrb[0].mxu0
  %v360 = vadd.f32 0.0, %v359
  %v361 = vpop.f32.mrb[0].mxu0
  %362 = vmatprep.mubr.f32.mxu0 0.0
  %363 = vmatmul.mubr.f32.gmra.mrb[0].mxu0 %v255
  %v364 = vpop.f32.mrb[0].mxu0
  %v365 = vadd.f32 0.0, %v364
  %v366 = vpop.f32.mrb[0].mxu0
  %367 = vmatprep.mubr.f32.mxu0 0.0
  %368 = vmatmul.mubr.f32.gmra.mrb[0].mxu0 %v258
  %v369 = vpop.f32.mrb[0].mxu0
  %v370 = vadd.f32 0.0, %v369
  %v371 = vpop.f32.mrb[0].mxu0
  %372 = vmatprep.mubr.f32.mxu0 0.0
  %373 = vmatmul.mubr.f32.gmra.mrb[0].mxu0 %v261
  %v374 = vpop.f32.mrb[0].mxu0
  %v375 = vadd.f32 0.0, %v374
  %v376 = vpop.f32.mrb[0].mxu0
  %377 = vmatprep.mubr.f32.mxu0 0.0
  %378 = vmatmul.mubr.f32.gmra.mrb[0].mxu0 %v264
  %v379 = vpop.f32.mrb[0].mxu0
  %v380 = vadd.f32 0.0, %v379
  %v381 = vpop.f32.mrb[0].mxu0
  %382 = vmatprep.mubr.f32.mxu0 0.0
  %383 = vmatmul.mubr.f32.gmra.mrb[0].mxu0 %v267
  %v384 = vpop.f32.mrb[0].mxu0
  %v385 = vadd.f32 0.0, %v384
  %v386 = vpop.f32.mrb[0].mxu0
  %387 = vmatprep.mubr.f32.mxu0 0.0
  %388 = vmatmul.mubr.f32.gmra.mrb[0].mxu0 %v270
  %v389 = vpop.f32.mrb[0].mxu0
  %v390 = vadd.f32 0.0, %v389
  %v391 = vpop.f32.mrb[0].mxu0
  %392 = vmatprep.mubr.f32.mxu0 0.0
  %393 = vmatmul.mubr.f32.gmra.mrb[0].mxu0 %v273
  %v394 = vpop.f32.mrb[0].mxu0
  %v395 = vadd.f32 0.0, %v394
  %v396 = vpop.f32.mrb[0].mxu0
  %397 = vmatprep.mubr.f32.mxu0 0.0
  %398 = vmatmul.mubr.f32.gmra.mrb[0].mxu0 %v276
  %v399 = vpop.f32.mrb[0].mxu0
  %v400 = vadd.f32 0.0, %v399
  %v401 = vpop.f32.mrb[0].mxu0
  %402 = vdwg.mxu0
  %403 = vmatprep.subr.mxu0 0.0
  %404 = vmatpush1.msra.mxu0 %v217
  %405 = vmatprep.subr.mxu0 0.0
  %406 = vmatpush1.msra.mxu0 %v218
  %407 = vmatprep.subr.mxu0 0.0
  %408 = vmatpush1.msra.mxu0 %v219
  %409 = vmatprep.subr.mxu0 0.0
  %410 = vmatpush1.msra.mxu0 0.0
  %411 = vmatprep.subr.mxu0 0.0
  %412 = vmatpush1.msra.mxu0 0.0
  %413 = vmatprep.subr.mxu0 0.0
  %414 = vmatpush1.msra.mxu0 0.0
  %415 = vmatprep.subr.mxu0 0.0
  %416 = vmatpush1.msra.mxu0 0.0
  %417 = vmatprep.subr.mxu0 0.0
  %418 = vmatpush1.msra.mxu0 0.0
  %419 = vmatprep.subr.mxu0 0.0
  %420 = vmatpush1.msra.mxu0 0.0
  %421 = vmatprep.subr.mxu0 0.0
  %422 = vmatpush1.msra.mxu0 0.0
  %423 = vmatprep.subr.mxu0 0.0
  %424 = vmatpush1.msra.mxu0 0.0
  %425 = vmatprep.subr.mxu0 0.0
  %426 = vmatpush1.msra.mxu0 0.0
  %427 = vmatprep.subr.mxu0 0.0
  %428 = vmatpush1.msra.mxu0 0.0
  %429 = vmatprep.subr.mxu0 0.0
  %430 = vmatpush1.msra.mxu0 0.0
  %431 = vmatprep.subr.mxu0 0.0
  %432 = vmatpush1.msra.mxu0 0.0
  %433 = vmatprep.subr.mxu0 0.0
  %434 = vmatpush1.msra.mxu0 0.0
  %435 = vmatprep.subr.mxu0 0.0
  %436 = vmatpush1.msra.mxu0 0.0
  %437 = vmatprep.subr.mxu0 0.0
  %438 = vmatpush1.msra.mxu0 0.0
  %439 = vmatprep.subr.mxu0 0.0
  %440 = vmatpush1.msra.mxu0 0.0
  %441 = vmatprep.subr.mxu0 0.0
  %442 = vmatpush1.msra.mxu0 0.0
  %443 = vmatprep.subr.mxu0 0.0
  %444 = vmatpush1.msra.mxu0 0.0
  %445 = vmatprep.subr.mxu0 0.0
  %446 = vmatpush1.msra.mxu0 0.0
  %447 = vmatprep.subr.mxu0 0.0
  %448 = vmatpush1.msra.mxu0 0.0
  %449 = vmatprep.subr.mxu0 0.0
  %450 = vmatpush1.msra.mxu0 0.0
  %451 = vmatprep.subr.mxu0 0.0
  %452 = vmatpush1.msra.mxu0 0.0
  %453 = vmatprep.subr.mxu0 0.0
  %454 = vmatpush1.msra.mxu0 0.0
  %455 = vmatprep.subr.mxu0 0.0
  %456 = vmatpush1.msra.mxu0 0.0
  %457 = vmatprep.subr.mxu0 0.0
  %458 = vmatpush1.msra.mxu0 0.0
  %459 = vmatprep.subr.mxu0 0.0
  %460 = vmatpush1.msra.mxu0 0.0
  %461 = vmatprep.subr.mxu0 0.0
  %462 = vmatpush1.msra.mxu0 0.0
  %463 = vmatprep.subr.mxu0 0.0
  %464 = vmatpush1.msra.mxu0 0.0
  %465 = vmatprep.subr.mxu0 0.0
  %466 = vmatpush1.msra.mxu0 0.0
  %467 = vmatprep.mubr.f32.mxu0 0.0
  %468 = vmatmul.mubr.f32.gmra.mrb[0].mxu0 %v243
  %v469 = vpop.f32.mrb[0].mxu0
  %v470 = vadd.f32 0.0, %v469
  %v471 = vpop.f32.mrb[0].mxu0
  %472 = vmatprep.mubr.f32.mxu0 0.0
  %473 = vmatmul.mubr.f32.gmra.mrb[0].mxu0 %v246
  %v474 = vpop.f32.mrb[0].mxu0
  %v475 = vadd.f32 0.0, %v474
  %v476 = vpop.f32.mrb[0].mxu0
  %477 = vmatprep.mubr.f32.mxu0 0.0
  %478 = vmatmul.mubr.f32.gmra.mrb[0].mxu0 %v249
  %v479 = vpop.f32.mrb[0].mxu0
  %v480 = vadd.f32 0.0, %v479
  %v481 = vpop.f32.mrb[0].mxu0
  %482 = vmatprep.mubr.f32.mxu0 0.0
  %483 = vmatmul.mubr.f32.gmra.mrb[0].mxu0 %v252
  %v484 = vpop.f32.mrb[0].mxu0
  %v485 = vadd.f32 0.0, %v484
  %v486 = vpop.f32.mrb[0].mxu0
  %487 = vmatprep.mubr.f32.mxu0 0.0
  %488 = vmatmul.mubr.f32.gmra.mrb[0].mxu0 %v255
  %v489 = vpop.f32.mrb[0].mxu0
  %v490 = vadd.f32 0.0, %v489
  %v491 = vpop.f32.mrb[0].mxu0
  %492 = vmatprep.mubr.f32.mxu0 0.0
  %493 = vmatmul.mubr.f32.gmra.mrb[0].mxu0 %v258
  %v494 = vpop.f32.mrb[0].mxu0
  %v495 = vadd.f32 0.0, %v494
  %v496 = vpop.f32.mrb[0].mxu0
  %497 = vmatprep.mubr.f32.mxu0 0.0
  %498 = vmatmul.mubr.f32.gmra.mrb[0].mxu0 %v261
  %v499 = vpop.f32.mrb[0].mxu0
  %v500 = vadd.f32 0.0, %v499
  %v501 = vpop.f32.mrb[0].mxu0
  %502 = vmatprep.mubr.f32.mxu0 0.0
  %503 = vmatmul.mubr.f32.gmra.mrb[0].mxu0 %v264
  %v504 = vpop.f32.mrb[0].mxu0
  %v505 = vadd.f32 0.0, %v504
  %v506 = vpop.f32.mrb[0].mxu0
  %507 = vmatprep.mubr.f32.mxu0 0.0
  %508 = vmatmul.mubr.f32.gmra.mrb[0].mxu0 %v267
  %v509 = vpop.f32.mrb[0].mxu0
  %v510 = vadd.f32 0.0, %v509
  %v511 = vpop.f32.mrb[0].mxu0
  %512 = vmatprep.mubr.f32.mxu0 0.0
  %513 = vmatmul.mubr.f32.gmra.mrb[0].mxu0 %v270
  %v514 = vpop.f32.mrb[0].mxu0
  %v515 = vadd.f32 0.0, %v514
  %v516 = vpop.f32.mrb[0].mxu0
  %517 = vmatprep.mubr.f32.mxu0 0.0
  %518 = vmatmul.mubr.f32.gmra.mrb[0].mxu0 %v273
  %v519 = vpop.f32.mrb[0].mxu0
  %v520 = vadd.f32 0.0, %v519
  %v521 = vpop.f32.mrb[0].mxu0
  %522 = vmatprep.mubr.f32.mxu0 0.0
  %523 = vmatmul.mubr.f32.gmra.mrb[0].mxu0 %v276
  %v524 = vpop.f32.mrb[0].mxu0
  %v525 = vadd.f32 0.0, %v524
  %v526 = vpop.f32.mrb[0].mxu0
  %527 = vdwg.mxu0
  %v528 = vld [vmem:[%s13] sm:$0xf]
  %v529 = vld [vmem:[%s15] sm:$0xf]
  %v530 = vld [vmem:[%s17] sm:$0x3]
  %v531 = vld [vmem:[%s19] sm:$0x1]
  %v532 = vld [vmem:[%s21] sm:$0xf]
  %v533 = vld [vmem:[%s21 + $0x4] sm:$0xf]
  %v534 = vld [vmem:[%s21 + $0x8] sm:$0xf]
  %v535 = vld [vmem:[%s21 + $0xc] sm:$0xf]
  %v536 = vld [vmem:[%s23] sm:$0x1]
  %v537 = vld [vmem:[%s25] sm:$0xf]
  %v538 = vld [vmem:[%s27] sm:$0xf]
  %v539 = vld [vmem:[%s29] sm:$0x1]
  %v540 = vld [vmem:[%s31] sm:$0xf]
  %v541 = vld [vmem:[%s31 + $0x4] sm:$0xf]
  %v542 = vld [vmem:[%s31 + $0x8] sm:$0xf]
  %v543 = vld [vmem:[%s31 + $0xc] sm:$0xf]
  %v544 = vld [vmem:[%s33] sm:$0x1]
  %545 = vmatprep.subr.mxu0 0.0
  %546 = vmatpush1.msra.mxu0 %v211
  %547 = vmatprep.subr.mxu0 0.0
  %548 = vmatpush1.msra.mxu0 %v212
  %549 = vmatprep.subr.mxu0 0.0
  %550 = vmatpush1.msra.mxu0 %v213
  %551 = vmatprep.subr.mxu0 0.0
  %552 = vmatpush1.msra.mxu0 0.0
  %553 = vmatprep.subr.mxu0 0.0
  %554 = vmatpush1.msra.mxu0 0.0
  %555 = vmatprep.subr.mxu0 0.0
  %556 = vmatpush1.msra.mxu0 0.0
  %557 = vmatprep.subr.mxu0 0.0
  %558 = vmatpush1.msra.mxu0 0.0
  %559 = vmatprep.subr.mxu0 0.0
  %560 = vmatpush1.msra.mxu0 0.0
  %561 = vmatprep.subr.mxu0 0.0
  %562 = vmatpush1.msra.mxu0 0.0
  %563 = vmatprep.subr.mxu0 0.0
  %564 = vmatpush1.msra.mxu0 0.0
  %565 = vmatprep.subr.mxu0 0.0
  %566 = vmatpush1.msra.mxu0 0.0
  %567 = vmatprep.subr.mxu0 0.0
  %568 = vmatpush1.msra.mxu0 0.0
  %569 = vmatprep.subr.mxu0 0.0
  %570 = vmatpush1.msra.mxu0 0.0
  %571 = vmatprep.subr.mxu0 0.0
  %572 = vmatpush1.msra.mxu0 0.0
  %573 = vmatprep.subr.mxu0 0.0
  %574 = vmatpush1.msra.mxu0 0.0
  %575 = vmatprep.subr.mxu0 0.0
  %576 = vmatpush1.msra.mxu0 0.0
  %577 = vmatprep.subr.mxu0 0.0
  %578 = vmatpush1.msra.mxu0 0.0
  %579 = vmatprep.subr.mxu0 0.0
  %580 = vmatpush1.msra.mxu0 0.0
  %581 = vmatprep.subr.mxu0 0.0
  %582 = vmatpush1.msra.mxu0 0.0
  %583 = vmatprep.subr.mxu0 0.0
  %584 = vmatpush1.msra.mxu0 0.0
  %585 = vmatprep.subr.mxu0 0.0
  %586 = vmatpush1.msra.mxu0 0.0
  %587 = vmatprep.subr.mxu0 0.0
  %588 = vmatpush1.msra.mxu0 0.0
  %589 = vmatprep.subr.mxu0 0.0
  %590 = vmatpush1.msra.mxu0 0.0
  %591 = vmatprep.subr.mxu0 0.0
  %592 = vmatpush1.msra.mxu0 0.0
  %593 = vmatprep.subr.mxu0 0.0
  %594 = vmatpush1.msra.mxu0 0.0
  %595 = vmatprep.subr.mxu0 0.0
  %596 = vmatpush1.msra.mxu0 0.0
  %597 = vmatprep.subr.mxu0 0.0
  %598 = vmatpush1.msra.mxu0 0.0
  %599 = vmatprep.subr.mxu0 0.0
  %600 = vmatpush1.msra.mxu0 0.0
  %601 = vmatprep.subr.mxu0 0.0
  %602 = vmatpush1.msra.mxu0 0.0
  %603 = vmatprep.subr.mxu0 0.0
  %604 = vmatpush1.msra.mxu0 0.0
  %605 = vmatprep.subr.mxu0 0.0
  %606 = vmatpush1.msra.mxu0 0.0
  %607 = vmatprep.subr.mxu0 0.0
  %608 = vmatpush1.msra.mxu0 0.0
  %609 = vmatprep.mubr.f32.mxu0 0.0
  %610 = vmatmul.mubr.f32.gmra.mrb[0].mxu0 %v243
  %v611 = vpop.f32.mrb[0].mxu0
  %v612 = vadd.f32 0.0, %v611
  %v613 = vpop.f32.mrb[0].mxu0
  %614 = vmatprep.mubr.f32.mxu0 0.0
  %615 = vmatmul.mubr.f32.gmra.mrb[0].mxu0 %v246
  %v616 = vpop.f32.mrb[0].mxu0
  %v617 = vadd.f32 0.0, %v616
  %v618 = vpop.f32.mrb[0].mxu0
  %619 = vmatprep.mubr.f32.mxu0 0.0
  %620 = vmatmul.mubr.f32.gmra.mrb[0].mxu0 %v249
  %v621 = vpop.f32.mrb[0].mxu0
  %v622 = vadd.f32 0.0, %v621
  %v623 = vpop.f32.mrb[0].mxu0
  %624 = vmatprep.mubr.f32.mxu0 0.0
  %625 = vmatmul.mubr.f32.gmra.mrb[0].mxu0 %v252
  %v626 = vpop.f32.mrb[0].mxu0
  %v627 = vadd.f32 0.0, %v626
  %v628 = vpop.f32.mrb[0].mxu0
  %629 = vmatprep.mubr.f32.mxu0 0.0
  %630 = vmatmul.mubr.f32.gmra.mrb[0].mxu0 %v255
  %v631 = vpop.f32.mrb[0].mxu0
  %v632 = vadd.f32 0.0, %v631
  %v633 = vpop.f32.mrb[0].mxu0
  %634 = vmatprep.mubr.f32.mxu0 0.0
  %635 = vmatmul.mubr.f32.gmra.mrb[0].mxu0 %v258
  %v636 = vpop.f32.mrb[0].mxu0
  %v637 = vadd.f32 0.0, %v636
  %v638 = vpop.f32.mrb[0].mxu0
  %639 = vmatprep.mubr.f32.mxu0 0.0
  %640 = vmatmul.mubr.f32.gmra.mrb[0].mxu0 %v261
  %v641 = vpop.f32.mrb[0].mxu0
  %v642 = vadd.f32 0.0, %v641
  %v643 = vpop.f32.mrb[0].mxu0
  %644 = vmatprep.mubr.f32.mxu0 0.0
  %645 = vmatmul.mubr.f32.gmra.mrb[0].mxu0 %v264
  %v646 = vpop.f32.mrb[0].mxu0
  %v647 = vadd.f32 0.0, %v646
  %v648 = vpop.f32.mrb[0].mxu0
  %649 = vmatprep.mubr.f32.mxu0 0.0
  %650 = vmatmul.mubr.f32.gmra.mrb[0].mxu0 %v267
  %v651 = vpop.f32.mrb[0].mxu0
  %v652 = vadd.f32 0.0, %v651
  %v653 = vpop.f32.mrb[0].mxu0
  %654 = vmatprep.mubr.f32.mxu0 0.0
  %655 = vmatmul.mubr.f32.gmra.mrb[0].mxu0 %v270
  %v656 = vpop.f32.mrb[0].mxu0
  %v657 = vadd.f32 0.0, %v656
  %v658 = vpop.f32.mrb[0].mxu0
  %659 = vmatprep.mubr.f32.mxu0 0.0
  %660 = vmatmul.mubr.f32.gmra.mrb[0].mxu0 %v273
  %v661 = vpop.f32.mrb[0].mxu0
  %v662 = vadd.f32 0.0, %v661
  %v663 = vpop.f32.mrb[0].mxu0
  %664 = vmatprep.mubr.f32.mxu0 0.0
  %665 = vmatmul.mubr.f32.gmra.mrb[0].mxu0 %v276
  %v666 = vpop.f32.mrb[0].mxu0
  %v667 = vadd.f32 0.0, %v666
  %v668 = vpop.f32.mrb[0].mxu0
  %669 = vdwg.mxu0
  %v670 = vpack.c.bf16 %v221, %v220
  %v671 = vpack.c.bf16 %v223, %v222
  %v672 = vpack.c.bf16 %v225, %v224
  %v674 = vlaneseq
  %v675 = vshrl.u32 %v674, 7
  %v676 = vsub.s32 0, %v675
  %v677 = vrot.slane %v531, %v676
  %vm679 = vcmask 23552
  %v681 = vsel %vm679, %v670, 0
  %v684 = vsel %vm679, %v671, 0
  %v687 = vsel %vm679, %v672, 0
  %vm689 = vcmask 1040384
  %vm690 = vcmask 1041408
  %v691 = vsel %vm689, 4294967295, 65535
  %v692 = vsel %vm690, %v691, 0
  %v694 = vand.u32 %v530, %v692
  %696 = vmatprep.subr.bf16.mxu0 0
  %697 = vmatpush1.bf16.msra.mxu0 %v694
  %698 = vmatprep.subr.bf16.mxu0 0
  %699 = vmatpush1.bf16.msra.mxu0 0
  %700 = vmatprep.subr.bf16.mxu0 0
  %701 = vmatpush1.bf16.msra.mxu0 0
  %702 = vmatprep.subr.bf16.mxu0 0
  %703 = vmatpush1.bf16.msra.mxu0 0
  %704 = vmatprep.subr.bf16.mxu0 0
  %705 = vmatpush1.bf16.msra.mxu0 0
  %706 = vmatprep.subr.bf16.mxu0 0
  %707 = vmatpush1.bf16.msra.mxu0 0
  %708 = vmatprep.subr.bf16.mxu0 0
  %709 = vmatpush1.bf16.msra.mxu0 0
  %710 = vmatprep.subr.bf16.mxu0 0
  %711 = vmatpush1.bf16.msra.mxu0 0
  %712 = vmatprep.subr.bf16.mxu0 0
  %713 = vmatpush1.bf16.msra.mxu0 0
  %714 = vmatprep.subr.bf16.mxu0 0
  %715 = vmatpush1.bf16.msra.mxu0 0
  %716 = vmatprep.subr.bf16.mxu0 0
  %717 = vmatpush1.bf16.msra.mxu0 0
  %718 = vmatprep.subr.bf16.mxu0 0
  %719 = vmatpush1.bf16.msra.mxu0 0
  %720 = vmatprep.subr.bf16.mxu0 0
  %721 = vmatpush1.bf16.msra.mxu0 0
  %722 = vmatprep.subr.bf16.mxu0 0
  %723 = vmatpush1.bf16.msra.mxu0 0
  %724 = vmatprep.subr.bf16.mxu0 0
  %725 = vmatpush1.bf16.msra.mxu0 0
  %726 = vmatprep.subr.bf16.mxu0 0
  %727 = vmatpush1.bf16.msra.mxu0 0
  %728 = vmatprep.mubr.bf16.mxu0 0
  %729 = vmatmul.mubr.bf16.gmra.mrb[0].mxu0 %v681
  %v730 = vpop.f32.mrb[0].mxu0
  %v731 = vadd.f32 %v677, %v730
  %v732 = vpop.f32.mrb[0].mxu0
  %v733 = vpop.f32.mrb[0].mxu0
  %v734 = vadd.f32 %v677, %v733
  %v735 = vpop.f32.mrb[0].mxu0
  %736 = vmatprep.mubr.bf16.mxu0 0
  %737 = vmatmul.mubr.bf16.gmra.mrb[0].mxu0 %v684
  %v738 = vpop.f32.mrb[0].mxu0
  %v739 = vadd.f32 %v677, %v738
  %v740 = vpop.f32.mrb[0].mxu0
  %v741 = vpop.f32.mrb[0].mxu0
  %v742 = vadd.f32 %v677, %v741
  %v743 = vpop.f32.mrb[0].mxu0
  %744 = vmatprep.mubr.bf16.mxu0 0
  %745 = vmatmul.mubr.bf16.gmra.mrb[0].mxu0 %v687
  %v746 = vpop.f32.mrb[0].mxu0
  %v747 = vadd.f32 %v677, %v746
  %v748 = vpop.f32.mrb[0].mxu0
  %v749 = vpop.f32.mrb[0].mxu0
  %v750 = vadd.f32 %v677, %v749
  %v751 = vpop.f32.mrb[0].mxu0
  %752 = vdwg.mxu0
  %v753 = vadd.f32 %v642, %v612
  %v754 = vadd.f32 %v647, %v617
  %v755 = vadd.f32 %v652, %v622
  %v756 = vadd.f32 %v657, %v627
  %v757 = vadd.f32 %v662, %v632
  %v758 = vadd.f32 %v667, %v637
  %v759 = vmul.f32 %v753, 0.5
  %v760 = vmul.f32 %v754, 0.5
  %v761 = vmul.f32 %v755, 0.5
  %v762 = vmul.f32 %v756, 0.5
  %v763 = vmul.f32 %v757, 0.5
  %v764 = vmul.f32 %v758, 0.5
  %v765 = vpack.c.bf16 %v760, %v759
  %v766 = vpack.c.bf16 %v762, %v761
  %v767 = vpack.c.bf16 %v764, %v763
  %vm768 = vcmask 56320
  %v770 = vsel %vm768, %v765, 0
  %v773 = vsel %vm768, %v766, 0
  %v776 = vsel %vm768, %v767, 0
  %vm778 = vcmask 1042432
  %vm779 = vcmask 1043456
  %v780 = vsel %vm778, 4294967295, 65535
  %v781 = vsel %vm779, %v780, 0
  %v783 = vand.u32 %v528, %v781
  %785 = vmatprep.subr.bf16.mxu0 0
  %786 = vmatpush1.bf16.msra.mxu0 %v783
  %787 = vmatprep.subr.bf16.mxu0 0
  %788 = vmatpush1.bf16.msra.mxu0 0
  %789 = vmatprep.subr.bf16.mxu0 0
  %790 = vmatpush1.bf16.msra.mxu0 0
  %791 = vmatprep.subr.bf16.mxu0 0
  %792 = vmatpush1.bf16.msra.mxu0 0
  %793 = vmatprep.subr.bf16.mxu0 0
  %794 = vmatpush1.bf16.msra.mxu0 0
  %795 = vmatprep.subr.bf16.mxu0 0
  %796 = vmatpush1.bf16.msra.mxu0 0
  %797 = vmatprep.subr.bf16.mxu0 0
  %798 = vmatpush1.bf16.msra.mxu0 0
  %799 = vmatprep.subr.bf16.mxu0 0
  %800 = vmatpush1.bf16.msra.mxu0 0
  %801 = vmatprep.subr.bf16.mxu0 0
  %802 = vmatpush1.bf16.msra.mxu0 0
  %803 = vmatprep.subr.bf16.mxu0 0
  %804 = vmatpush1.bf16.msra.mxu0 0
  %805 = vmatprep.subr.bf16.mxu0 0
  %806 = vmatpush1.bf16.msra.mxu0 0
  %807 = vmatprep.subr.bf16.mxu0 0
  %808 = vmatpush1.bf16.msra.mxu0 0
  %809 = vmatprep.subr.bf16.mxu0 0
  %810 = vmatpush1.bf16.msra.mxu0 0
  %811 = vmatprep.subr.bf16.mxu0 0
  %812 = vmatpush1.bf16.msra.mxu0 0
  %813 = vmatprep.subr.bf16.mxu0 0
  %814 = vmatpush1.bf16.msra.mxu0 0
  %815 = vmatprep.subr.bf16.mxu0 0
  %816 = vmatpush1.bf16.msra.mxu0 0
  %817 = vmatprep.mubr.bf16.mxu0 0
  %818 = vmatmul.mubr.bf16.gmra.mrb[0].mxu0 %v770
  %v819 = vpop.f32.mrb[0].mxu0
  %v820 = vadd.f32 0.0, %v819
  %v821 = vpop.f32.mrb[0].mxu0
  %v822 = vpop.f32.mrb[0].mxu0
  %v823 = vadd.f32 0.0, %v822
  %v824 = vpop.f32.mrb[0].mxu0
  %825 = vmatprep.mubr.bf16.mxu0 0
  %826 = vmatmul.mubr.bf16.gmra.mrb[0].mxu0 %v773
  %v827 = vpop.f32.mrb[0].mxu0
  %v828 = vadd.f32 0.0, %v827
  %v829 = vpop.f32.mrb[0].mxu0
  %v830 = vpop.f32.mrb[0].mxu0
  %v831 = vadd.f32 0.0, %v830
  %v832 = vpop.f32.mrb[0].mxu0
  %833 = vmatprep.mubr.bf16.mxu0 0
  %834 = vmatmul.mubr.bf16.gmra.mrb[0].mxu0 %v776
  %v835 = vpop.f32.mrb[0].mxu0
  %v836 = vadd.f32 0.0, %v835
  %v837 = vpop.f32.mrb[0].mxu0
  %v838 = vpop.f32.mrb[0].mxu0
  %v839 = vadd.f32 0.0, %v838
  %v840 = vpop.f32.mrb[0].mxu0
  %841 = vdwg.mxu0
  %v842 = vadd.f32 %v731, %v820
  %v843 = vadd.f32 %v734, %v823
  %v844 = vadd.f32 %v739, %v828
  %v845 = vadd.f32 %v742, %v831
  %v846 = vadd.f32 %v747, %v836
  %v847 = vadd.f32 %v750, %v839
  %v848 = vsub.f32 %v642, %v612
  %v849 = vsub.f32 %v647, %v617
  %v850 = vsub.f32 %v652, %v622
  %v851 = vsub.f32 %v657, %v627
  %v852 = vsub.f32 %v662, %v632
  %v853 = vsub.f32 %v667, %v637
  %v854 = vand.u32 2147483647, %v848
  %v855 = vand.u32 2147483647, %v849
  %v856 = vand.u32 2147483647, %v850
  %v857 = vand.u32 2147483647, %v851
  %v858 = vand.u32 2147483647, %v852
  %v859 = vand.u32 2147483647, %v853
  %v860 = vmul.f32 %v854, 0.5
  %v861 = vmul.f32 %v855, 0.5
  %v862 = vmul.f32 %v856, 0.5
  %v863 = vmul.f32 %v857, 0.5
  %v864 = vmul.f32 %v858, 0.5
  %v865 = vmul.f32 %v859, 0.5
  %v866 = vpack.c.bf16 %v861, %v860
  %v867 = vpack.c.bf16 %v863, %v862
  %v868 = vpack.c.bf16 %v865, %v864
  %v870 = vsel %vm768, %v866, 0
  %v873 = vsel %vm768, %v867, 0
  %v876 = vsel %vm768, %v868, 0
  %v879 = vand.u32 %v529, %v781
  %881 = vmatprep.subr.bf16.mxu0 0
  %882 = vmatpush1.bf16.msra.mxu0 %v879
  %883 = vmatprep.subr.bf16.mxu0 0
  %884 = vmatpush1.bf16.msra.mxu0 0
  %885 = vmatprep.subr.bf16.mxu0 0
  %886 = vmatpush1.bf16.msra.mxu0 0
  %887 = vmatprep.subr.bf16.mxu0 0
  %888 = vmatpush1.bf16.msra.mxu0 0
  %889 = vmatprep.subr.bf16.mxu0 0
  %890 = vmatpush1.bf16.msra.mxu0 0
  %891 = vmatprep.subr.bf16.mxu0 0
  %892 = vmatpush1.bf16.msra.mxu0 0
  %893 = vmatprep.subr.bf16.mxu0 0
  %894 = vmatpush1.bf16.msra.mxu0 0
  %895 = vmatprep.subr.bf16.mxu0 0
  %896 = vmatpush1.bf16.msra.mxu0 0
  %897 = vmatprep.subr.bf16.mxu0 0
  %898 = vmatpush1.bf16.msra.mxu0 0
  %899 = vmatprep.subr.bf16.mxu0 0
  %900 = vmatpush1.bf16.msra.mxu0 0
  %901 = vmatprep.subr.bf16.mxu0 0
  %902 = vmatpush1.bf16.msra.mxu0 0
  %903 = vmatprep.subr.bf16.mxu0 0
  %904 = vmatpush1.bf16.msra.mxu0 0
  %905 = vmatprep.subr.bf16.mxu0 0
  %906 = vmatpush1.bf16.msra.mxu0 0
  %907 = vmatprep.subr.bf16.mxu0 0
  %908 = vmatpush1.bf16.msra.mxu0 0
  %909 = vmatprep.subr.bf16.mxu0 0
  %910 = vmatpush1.bf16.msra.mxu0 0
  %911 = vmatprep.subr.bf16.mxu0 0
  %912 = vmatpush1.bf16.msra.mxu0 0
  %913 = vmatprep.mubr.bf16.mxu0 0
  %914 = vmatmul.mubr.bf16.gmra.mrb[0].mxu0 %v870
  %v915 = vpop.f32.mrb[0].mxu0
  %v916 = vadd.f32 0.0, %v915
  %v917 = vpop.f32.mrb[0].mxu0
  %v918 = vpop.f32.mrb[0].mxu0
  %v919 = vadd.f32 0.0, %v918
  %v920 = vpop.f32.mrb[0].mxu0
  %921 = vmatprep.mubr.bf16.mxu0 0
  %922 = vmatmul.mubr.bf16.gmra.mrb[0].mxu0 %v873
  %v923 = vpop.f32.mrb[0].mxu0
  %v924 = vadd.f32 0.0, %v923
  %v925 = vpop.f32.mrb[0].mxu0
  %v926 = vpop.f32.mrb[0].mxu0
  %v927 = vadd.f32 0.0, %v926
  %v928 = vpop.f32.mrb[0].mxu0
  %929 = vmatprep.mubr.bf16.mxu0 0
  %930 = vmatmul.mubr.bf16.gmra.mrb[0].mxu0 %v876
  %v931 = vpop.f32.mrb[0].mxu0
  %v932 = vadd.f32 0.0, %v931
  %v933 = vpop.f32.mrb[0].mxu0
  %v934 = vpop.f32.mrb[0].mxu0
  %v935 = vadd.f32 0.0, %v934
  %v936 = vpop.f32.mrb[0].mxu0
  %937 = vdwg.mxu0
  %v938 = vadd.f32 %v842, %v916
  %v939 = vadd.f32 %v843, %v919
  %v940 = vadd.f32 %v844, %v924
  %v941 = vadd.f32 %v845, %v927
  %v942 = vadd.f32 %v846, %v932
  %v943 = vadd.f32 %v847, %v935
  %v944 = vmax.f32 %v938, 0.0
  %v945 = vmax.f32 %v939, 0.0
  %v946 = vmax.f32 %v940, 0.0
  %v947 = vmax.f32 %v941, 0.0
  %v948 = vmax.f32 %v942, 0.0
  %v949 = vmax.f32 %v943, 0.0
  %v950 = vpack.c.bf16 %v945, %v944
  %v951 = vpack.c.bf16 %v947, %v946
  %v952 = vpack.c.bf16 %v949, %v948
  %v954 = vlaneseq
  %v955 = vshrl.u32 %v954, 7
  %v956 = vsub.s32 0, %v955
  %v957 = vrot.slane %v536, %v956
  %v963 = vunpack.c.l.b16 %v532
  %v964 = vunpack.c.l.b16 %v533
  %v965 = vunpack.c.l.b16 %v534
  %v966 = vunpack.c.l.b16 %v535
  %v967 = vpack.c.b16 %v964, %v963
  %v968 = vpack.c.b16 %v966, %v965
  %vm971 = vcmask 261120
  %v973 = vsel %vm971, %v950, 0
  %v976 = vsel %vm971, %v951, 0
  %v979 = vsel %vm971, %v952, 0
  %981 = vmatprep.subr.bf16.mxu0 0
  %982 = vmatpush1.bf16.msra.mxu0 %v967
  %983 = vmatprep.subr.bf16.mxu0 0
  %984 = vmatpush1.bf16.msra.mxu0 %v968
  %985 = vmatprep.subr.bf16.mxu0 0
  %986 = vmatpush1.bf16.msra.mxu0 0
  %987 = vmatprep.subr.bf16.mxu0 0
  %988 = vmatpush1.bf16.msra.mxu0 0
  %989 = vmatprep.subr.bf16.mxu0 0
  %990 = vmatpush1.bf16.msra.mxu0 0
  %991 = vmatprep.subr.bf16.mxu0 0
  %992 = vmatpush1.bf16.msra.mxu0 0
  %993 = vmatprep.subr.bf16.mxu0 0
  %994 = vmatpush1.bf16.msra.mxu0 0
  %995 = vmatprep.subr.bf16.mxu0 0
  %996 = vmatpush1.bf16.msra.mxu0 0
  %997 = vmatprep.subr.bf16.mxu0 0
  %998 = vmatpush1.bf16.msra.mxu0 0
  %999 = vmatprep.subr.bf16.mxu0 0
  %1000 = vmatpush1.bf16.msra.mxu0 0
  %1001 = vmatprep.subr.bf16.mxu0 0
  %1002 = vmatpush1.bf16.msra.mxu0 0
  %1003 = vmatprep.subr.bf16.mxu0 0
  %1004 = vmatpush1.bf16.msra.mxu0 0
  %1005 = vmatprep.subr.bf16.mxu0 0
  %1006 = vmatpush1.bf16.msra.mxu0 0
  %1007 = vmatprep.subr.bf16.mxu0 0
  %1008 = vmatpush1.bf16.msra.mxu0 0
  %1009 = vmatprep.subr.bf16.mxu0 0
  %1010 = vmatpush1.bf16.msra.mxu0 0
  %1011 = vmatprep.subr.bf16.mxu0 0
  %1012 = vmatpush1.bf16.msra.mxu0 0
  %1013 = vmatprep.mubr.bf16.mxu0 0
  %1014 = vmatmul.mubr.bf16.gmra.mrb[0].mxu0 %v973
  %v1015 = vpop.f32.mrb[0].mxu0
  %v1016 = vadd.f32 %v957, %v1015
  %v1017 = vpop.f32.mrb[0].mxu0
  %v1018 = vpop.f32.mrb[0].mxu0
  %v1019 = vadd.f32 %v957, %v1018
  %v1020 = vpop.f32.mrb[0].mxu0
  %1021 = vmatprep.mubr.bf16.mxu0 0
  %1022 = vmatmul.mubr.bf16.gmra.mrb[0].mxu0 %v976
  %v1023 = vpop.f32.mrb[0].mxu0
  %v1024 = vadd.f32 %v957, %v1023
  %v1025 = vpop.f32.mrb[0].mxu0
  %v1026 = vpop.f32.mrb[0].mxu0
  %v1027 = vadd.f32 %v957, %v1026
  %v1028 = vpop.f32.mrb[0].mxu0
  %1029 = vmatprep.mubr.bf16.mxu0 0
  %1030 = vmatmul.mubr.bf16.gmra.mrb[0].mxu0 %v979
  %v1031 = vpop.f32.mrb[0].mxu0
  %v1032 = vadd.f32 %v957, %v1031
  %v1033 = vpop.f32.mrb[0].mxu0
  %v1034 = vpop.f32.mrb[0].mxu0
  %v1035 = vadd.f32 %v957, %v1034
  %v1036 = vpop.f32.mrb[0].mxu0
  %1037 = vdwg.mxu0
  %1038 = vxpose.xlu0.b32.start [1/16] %v226, 128
  %1039 = vxpose.xlu0.b32.cont [2/16] %v227, 128
  %1040 = vxpose.xlu0.b32.cont [3/16] %v228, 128
  %1041 = vxpose.xlu0.b32.cont [4/16] %v229, 128
  %1042 = vxpose.xlu0.b32.cont [5/16] %v230, 128
  %1043 = vxpose.xlu0.b32.cont [6/16] %v231, 128
  %1044 = vxpose.xlu0.b32.cont [7/16] 0.0, 128
  %1045 = vxpose.xlu0.b32.cont [8/16] 0.0, 128
  %1046 = vxpose.xlu0.b32.cont [9/16] 0.0, 128
  %1047 = vxpose.xlu0.b32.cont [10/16] 0.0, 128
  %1048 = vxpose.xlu0.b32.cont [11/16] 0.0, 128
  %1049 = vxpose.xlu0.b32.cont [12/16] 0.0, 128
  %1050 = vxpose.xlu0.b32.cont [13/16] 0.0, 128
  %1051 = vxpose.xlu0.b32.cont [14/16] 0.0, 128
  %1052 = vxpose.xlu0.b32.cont [15/16] 0.0, 128
  %1053 = vxpose.xlu0.b32.end [16/16] 0.0, 128
  %v1054 = vpop.trf.xlu0
  %v1055 = vpop.trf.xlu0
  %v1056 = vpop.trf.xlu0
  %v1057 = vpop.trf.xlu0
  %v1058 = vpop.trf.xlu0
  %v1059 = vpop.trf.xlu0
  %v1060 = vpop.trf.xlu0
  %v1061 = vpop.trf.xlu0
  %v1062 = vpop.trf.xlu0
  %v1063 = vpop.trf.xlu0
  %v1064 = vpop.trf.xlu0
  %v1065 = vpop.trf.xlu0
  %v1066 = vpop.trf.xlu0
  %v1067 = vpop.trf.xlu0
  %v1068 = vpop.trf.xlu0
  %v1069 = vpop.trf.xlu0
  %vm1070 = vcmask 392192
  %v1072 = vsel %vm1070, %v1054, 0
  %v1075 = vsel %vm1070, %v1055, 0
  %v1078 = vsel %vm1070, %v1056, 0
  %1080 = vmatprep.subr.mxu0 0.0
  %1081 = vmatpush1.msra.mxu0 %v1016
  %1082 = vmatprep.subr.mxu0 0.0
  %1083 = vmatpush1.msra.mxu0 %v1019
  %1084 = vmatprep.subr.mxu0 0.0
  %1085 = vmatpush1.msra.mxu0 %v1024
  %1086 = vmatprep.subr.mxu0 0.0
  %1087 = vmatpush1.msra.mxu0 %v1027
  %1088 = vmatprep.subr.mxu0 0.0
  %1089 = vmatpush1.msra.mxu0 %v1032
  %1090 = vmatprep.subr.mxu0 0.0
  %1091 = vmatpush1.msra.mxu0 %v1035
  %1092 = vmatprep.subr.mxu0 0.0
  %1093 = vmatpush1.msra.mxu0 0.0
  %1094 = vmatprep.subr.mxu0 0.0
  %1095 = vmatpush1.msra.mxu0 0.0
  %1096 = vmatprep.subr.mxu0 0.0
  %1097 = vmatpush1.msra.mxu0 0.0
  %1098 = vmatprep.subr.mxu0 0.0
  %1099 = vmatpush1.msra.mxu0 0.0
  %1100 = vmatprep.subr.mxu0 0.0
  %1101 = vmatpush1.msra.mxu0 0.0
  %1102 = vmatprep.subr.mxu0 0.0
  %1103 = vmatpush1.msra.mxu0 0.0
  %1104 = vmatprep.subr.mxu0 0.0
  %1105 = vmatpush1.msra.mxu0 0.0
  %1106 = vmatprep.subr.mxu0 0.0
  %1107 = vmatpush1.msra.mxu0 0.0
  %1108 = vmatprep.subr.mxu0 0.0
  %1109 = vmatpush1.msra.mxu0 0.0
  %1110 = vmatprep.subr.mxu0 0.0
  %1111 = vmatpush1.msra.mxu0 0.0
  %1112 = vmatprep.subr.mxu0 0.0
  %1113 = vmatpush1.msra.mxu0 0.0
  %1114 = vmatprep.subr.mxu0 0.0
  %1115 = vmatpush1.msra.mxu0 0.0
  %1116 = vmatprep.subr.mxu0 0.0
  %1117 = vmatpush1.msra.mxu0 0.0
  %1118 = vmatprep.subr.mxu0 0.0
  %1119 = vmatpush1.msra.mxu0 0.0
  %1120 = vmatprep.subr.mxu0 0.0
  %1121 = vmatpush1.msra.mxu0 0.0
  %1122 = vmatprep.subr.mxu0 0.0
  %1123 = vmatpush1.msra.mxu0 0.0
  %1124 = vmatprep.subr.mxu0 0.0
  %1125 = vmatpush1.msra.mxu0 0.0
  %1126 = vmatprep.subr.mxu0 0.0
  %1127 = vmatpush1.msra.mxu0 0.0
  %1128 = vmatprep.subr.mxu0 0.0
  %1129 = vmatpush1.msra.mxu0 0.0
  %1130 = vmatprep.subr.mxu0 0.0
  %1131 = vmatpush1.msra.mxu0 0.0
  %1132 = vmatprep.subr.mxu0 0.0
  %1133 = vmatpush1.msra.mxu0 0.0
  %1134 = vmatprep.subr.mxu0 0.0
  %1135 = vmatpush1.msra.mxu0 0.0
  %1136 = vmatprep.subr.mxu0 0.0
  %1137 = vmatpush1.msra.mxu0 0.0
  %1138 = vmatprep.subr.mxu0 0.0
  %1139 = vmatpush1.msra.mxu0 0.0
  %1140 = vmatprep.subr.mxu0 0.0
  %1141 = vmatpush1.msra.mxu0 0.0
  %1142 = vmatprep.subr.mxu0 0.0
  %1143 = vmatpush1.msra.mxu0 0.0
  %1144 = vmatprep.mubr.f32.mxu0 0.0
  %1145 = vmatmul.mubr.f32.gmra.mrb[0].mxu0 %v1072
  %v1146 = vpop.f32.mrb[0].mxu0
  %v1147 = vadd.f32 0.0, %v1146
  %v1148 = vpop.f32.mrb[0].mxu0
  %1149 = vmatprep.mubr.f32.mxu0 0.0
  %1150 = vmatmul.mubr.f32.gmra.mrb[0].mxu0 %v1075
  %v1151 = vpop.f32.mrb[0].mxu0
  %v1152 = vadd.f32 0.0, %v1151
  %v1153 = vpop.f32.mrb[0].mxu0
  %1154 = vmatprep.mubr.f32.mxu0 0.0
  %1155 = vmatmul.mubr.f32.gmra.mrb[0].mxu0 %v1078
  %v1156 = vpop.f32.mrb[0].mxu0
  %v1157 = vadd.f32 0.0, %v1156
  %v1158 = vpop.f32.mrb[0].mxu0
  %1159 = vdwg.mxu0
  %v1160 = vpack.c.bf16 %v1152, %v1147
  %v1161 = vpack.c.bf16 %v1157, %v1157
  %v1163 = vlaneseq
  %v1164 = vshrl.u32 %v1163, 7
  %v1165 = vsub.s32 0, %v1164
  %v1166 = vrot.slane %v539, %v1165
  %vm1168 = vcmask 64512
  %v1170 = vsel %vm1168, %v1160, 0
  %v1173 = vsel %vm1168, %v1161, 0
  %v1176 = vsel %vm779, %v538, 0
  %1178 = vmatprep.subr.bf16.mxu0 0
  %1179 = vmatpush1.bf16.msra.mxu0 %v1176
  %1180 = vmatprep.subr.bf16.mxu0 0
  %1181 = vmatpush1.bf16.msra.mxu0 0
  %1182 = vmatprep.subr.bf16.mxu0 0
  %1183 = vmatpush1.bf16.msra.mxu0 0
  %1184 = vmatprep.subr.bf16.mxu0 0
  %1185 = vmatpush1.bf16.msra.mxu0 0
  %1186 = vmatprep.subr.bf16.mxu0 0
  %1187 = vmatpush1.bf16.msra.mxu0 0
  %1188 = vmatprep.subr.bf16.mxu0 0
  %1189 = vmatpush1.bf16.msra.mxu0 0
  %1190 = vmatprep.subr.bf16.mxu0 0
  %1191 = vmatpush1.bf16.msra.mxu0 0
  %1192 = vmatprep.subr.bf16.mxu0 0
  %1193 = vmatpush1.bf16.msra.mxu0 0
  %1194 = vmatprep.subr.bf16.mxu0 0
  %1195 = vmatpush1.bf16.msra.mxu0 0
  %1196 = vmatprep.subr.bf16.mxu0 0
  %1197 = vmatpush1.bf16.msra.mxu0 0
  %1198 = vmatprep.subr.bf16.mxu0 0
  %1199 = vmatpush1.bf16.msra.mxu0 0
  %1200 = vmatprep.subr.bf16.mxu0 0
  %1201 = vmatpush1.bf16.msra.mxu0 0
  %1202 = vmatprep.subr.bf16.mxu0 0
  %1203 = vmatpush1.bf16.msra.mxu0 0
  %1204 = vmatprep.subr.bf16.mxu0 0
  %1205 = vmatpush1.bf16.msra.mxu0 0
  %1206 = vmatprep.subr.bf16.mxu0 0
  %1207 = vmatpush1.bf16.msra.mxu0 0
  %1208 = vmatprep.subr.bf16.mxu0 0
  %1209 = vmatpush1.bf16.msra.mxu0 0
  %1210 = vmatprep.mubr.bf16.mxu0 0
  %1211 = vmatmul.mubr.bf16.gmra.mrb[0].mxu0 %v1170
  %v1212 = vpop.f32.mrb[0].mxu0
  %v1213 = vadd.f32 %v1166, %v1212
  %v1214 = vpop.f32.mrb[0].mxu0
  %v1215 = vpop.f32.mrb[0].mxu0
  %v1216 = vadd.f32 %v1166, %v1215
  %v1217 = vpop.f32.mrb[0].mxu0
  %1218 = vmatprep.mubr.bf16.mxu0 0
  %1219 = vmatmul.mubr.bf16.gmra.mrb[0].mxu0 %v1173
  %v1220 = vpop.f32.mrb[0].mxu0
  %v1221 = vadd.f32 %v1166, %v1220
  %v1222 = vpop.f32.mrb[0].mxu0
  %v1223 = vpop.f32.mrb[0].mxu0
  %v1224 = vpop.f32.mrb[0].mxu0
  %1225 = vdwg.mxu0
  %v1226 = vpack.c.bf16 %v212, %v211
  %v1227 = vpack.c.bf16 %v213, %v213
  %v1229 = vsel %vm768, %v1226, 0
  %v1232 = vsel %vm768, %v1227, 0
  %v1235 = vand.u32 %v537, %v781
  %1237 = vmatprep.subr.bf16.mxu0 0
  %1238 = vmatpush1.bf16.msra.mxu0 %v1235
  %1239 = vmatprep.subr.bf16.mxu0 0
  %1240 = vmatpush1.bf16.msra.mxu0 0
  %1241 = vmatprep.subr.bf16.mxu0 0
  %1242 = vmatpush1.bf16.msra.mxu0 0
  %1243 = vmatprep.subr.bf16.mxu0 0
  %1244 = vmatpush1.bf16.msra.mxu0 0
  %1245 = vmatprep.subr.bf16.mxu0 0
  %1246 = vmatpush1.bf16.msra.mxu0 0
  %1247 = vmatprep.subr.bf16.mxu0 0
  %1248 = vmatpush1.bf16.msra.mxu0 0
  %1249 = vmatprep.subr.bf16.mxu0 0
  %1250 = vmatpush1.bf16.msra.mxu0 0
  %1251 = vmatprep.subr.bf16.mxu0 0
  %1252 = vmatpush1.bf16.msra.mxu0 0
  %1253 = vmatprep.subr.bf16.mxu0 0
  %1254 = vmatpush1.bf16.msra.mxu0 0
  %1255 = vmatprep.subr.bf16.mxu0 0
  %1256 = vmatpush1.bf16.msra.mxu0 0
  %1257 = vmatprep.subr.bf16.mxu0 0
  %1258 = vmatpush1.bf16.msra.mxu0 0
  %1259 = vmatprep.subr.bf16.mxu0 0
  %1260 = vmatpush1.bf16.msra.mxu0 0
  %1261 = vmatprep.subr.bf16.mxu0 0
  %1262 = vmatpush1.bf16.msra.mxu0 0
  %1263 = vmatprep.subr.bf16.mxu0 0
  %1264 = vmatpush1.bf16.msra.mxu0 0
  %1265 = vmatprep.subr.bf16.mxu0 0
  %1266 = vmatpush1.bf16.msra.mxu0 0
  %1267 = vmatprep.subr.bf16.mxu0 0
  %1268 = vmatpush1.bf16.msra.mxu0 0
  %1269 = vmatprep.mubr.bf16.mxu0 0
  %1270 = vmatmul.mubr.bf16.gmra.mrb[0].mxu0 %v1229
  %v1271 = vpop.f32.mrb[0].mxu0
  %v1272 = vadd.f32 0.0, %v1271
  %v1273 = vpop.f32.mrb[0].mxu0
  %v1274 = vpop.f32.mrb[0].mxu0
  %v1275 = vadd.f32 0.0, %v1274
  %v1276 = vpop.f32.mrb[0].mxu0
  %1277 = vmatprep.mubr.bf16.mxu0 0
  %1278 = vmatmul.mubr.bf16.gmra.mrb[0].mxu0 %v1232
  %v1279 = vpop.f32.mrb[0].mxu0
  %v1280 = vadd.f32 0.0, %v1279
  %v1281 = vpop.f32.mrb[0].mxu0
  %v1282 = vpop.f32.mrb[0].mxu0
  %v1283 = vpop.f32.mrb[0].mxu0
  %1284 = vdwg.mxu0
  %v1285 = vadd.f32 %v1213, %v1272
  %v1286 = vadd.f32 %v1216, %v1275
  %v1287 = vadd.f32 %v1221, %v1280
  %v1288 = vmax.f32 %v1285, 0.0
  %v1289 = vmax.f32 %v1286, 0.0
  %v1290 = vmax.f32 %v1287, 0.0
  %v1291 = vpack.c.bf16 %v1289, %v1288
  %v1292 = vpack.c.bf16 %v1290, %v1290
  %v1294 = vlaneseq
  %v1295 = vshrl.u32 %v1294, 7
  %v1296 = vsub.s32 0, %v1295
  %v1297 = vrot.slane %v544, %v1296
  %v1303 = vunpack.c.l.b16 %v540
  %v1304 = vunpack.c.l.b16 %v541
  %v1305 = vunpack.c.l.b16 %v542
  %v1306 = vunpack.c.l.b16 %v543
  %v1307 = vpack.c.b16 %v1304, %v1303
  %v1308 = vpack.c.b16 %v1306, %v1305
  %v1312 = vsel %vm971, %v1291, 0
  %v1315 = vsel %vm971, %v1292, 0
  %1317 = vmatprep.subr.bf16.mxu0 0
  %1318 = vmatpush1.bf16.msra.mxu0 %v1307
  %1319 = vmatprep.subr.bf16.mxu0 0
  %1320 = vmatpush1.bf16.msra.mxu0 %v1308
  %1321 = vmatprep.subr.bf16.mxu0 0
  %1322 = vmatpush1.bf16.msra.mxu0 0
  %1323 = vmatprep.subr.bf16.mxu0 0
  %1324 = vmatpush1.bf16.msra.mxu0 0
  %1325 = vmatprep.subr.bf16.mxu0 0
  %1326 = vmatpush1.bf16.msra.mxu0 0
  %1327 = vmatprep.subr.bf16.mxu0 0
  %1328 = vmatpush1.bf16.msra.mxu0 0
  %1329 = vmatprep.subr.bf16.mxu0 0
  %1330 = vmatpush1.bf16.msra.mxu0 0
  %1331 = vmatprep.subr.bf16.mxu0 0
  %1332 = vmatpush1.bf16.msra.mxu0 0
  %1333 = vmatprep.subr.bf16.mxu0 0
  %1334 = vmatpush1.bf16.msra.mxu0 0
  %1335 = vmatprep.subr.bf16.mxu0 0
  %1336 = vmatpush1.bf16.msra.mxu0 0
  %1337 = vmatprep.subr.bf16.mxu0 0
  %1338 = vmatpush1.bf16.msra.mxu0 0
  %1339 = vmatprep.subr.bf16.mxu0 0
  %1340 = vmatpush1.bf16.msra.mxu0 0
  %1341 = vmatprep.subr.bf16.mxu0 0
  %1342 = vmatpush1.bf16.msra.mxu0 0
  %1343 = vmatprep.subr.bf16.mxu0 0
  %1344 = vmatpush1.bf16.msra.mxu0 0
  %1345 = vmatprep.subr.bf16.mxu0 0
  %1346 = vmatpush1.bf16.msra.mxu0 0
  %1347 = vmatprep.subr.bf16.mxu0 0
  %1348 = vmatpush1.bf16.msra.mxu0 0
  %1349 = vmatprep.mubr.bf16.mxu0 0
  %1350 = vmatmul.mubr.bf16.gmra.mrb[0].mxu0 %v1312
  %v1351 = vpop.f32.mrb[0].mxu0
  %v1352 = vadd.f32 %v1297, %v1351
  %v1353 = vpop.f32.mrb[0].mxu0
  %v1354 = vpop.f32.mrb[0].mxu0
  %v1355 = vadd.f32 %v1297, %v1354
  %v1356 = vpop.f32.mrb[0].mxu0
  %1357 = vmatprep.mubr.bf16.mxu0 0
  %1358 = vmatmul.mubr.bf16.gmra.mrb[0].mxu0 %v1315
  %v1359 = vpop.f32.mrb[0].mxu0
  %v1360 = vadd.f32 %v1297, %v1359
  %v1361 = vpop.f32.mrb[0].mxu0
  %v1362 = vpop.f32.mrb[0].mxu0
  %v1363 = vpop.f32.mrb[0].mxu0
  %1364 = vdwg.mxu0
  %v1365 = vmax.f32 %v1352, 0.0
  %v1366 = vmax.f32 %v1355, 0.0
  %v1367 = vmax.f32 %v1360, 0.0
  %1368 = vmatprep.subr.mxu0 0.0
  %1369 = vmatpush1.msra.mxu0 %v1365
  %1370 = vmatprep.subr.mxu0 0.0
  %1371 = vmatpush1.msra.mxu0 %v1366
  %1372 = vmatprep.subr.mxu0 0.0
  %1373 = vmatpush1.msra.mxu0 %v1367
  %1374 = vmatprep.subr.mxu0 0.0
  %1375 = vmatpush1.msra.mxu0 0.0
  %1376 = vmatprep.subr.mxu0 0.0
  %1377 = vmatpush1.msra.mxu0 0.0
  %1378 = vmatprep.subr.mxu0 0.0
  %1379 = vmatpush1.msra.mxu0 0.0
  %1380 = vmatprep.subr.mxu0 0.0
  %1381 = vmatpush1.msra.mxu0 0.0
  %1382 = vmatprep.subr.mxu0 0.0
  %1383 = vmatpush1.msra.mxu0 0.0
  %1384 = vmatprep.subr.mxu0 0.0
  %1385 = vmatpush1.msra.mxu0 0.0
  %1386 = vmatprep.subr.mxu0 0.0
  %1387 = vmatpush1.msra.mxu0 0.0
  %1388 = vmatprep.subr.mxu0 0.0
  %1389 = vmatpush1.msra.mxu0 0.0
  %1390 = vmatprep.subr.mxu0 0.0
  %1391 = vmatpush1.msra.mxu0 0.0
  %1392 = vmatprep.subr.mxu0 0.0
  %1393 = vmatpush1.msra.mxu0 0.0
  %1394 = vmatprep.subr.mxu0 0.0
  %1395 = vmatpush1.msra.mxu0 0.0
  %1396 = vmatprep.subr.mxu0 0.0
  %1397 = vmatpush1.msra.mxu0 0.0
  %1398 = vmatprep.subr.mxu0 0.0
  %1399 = vmatpush1.msra.mxu0 0.0
  %1400 = vmatprep.subr.mxu0 0.0
  %1401 = vmatpush1.msra.mxu0 0.0
  %1402 = vmatprep.subr.mxu0 0.0
  %1403 = vmatpush1.msra.mxu0 0.0
  %1404 = vmatprep.subr.mxu0 0.0
  %1405 = vmatpush1.msra.mxu0 0.0
  %1406 = vmatprep.subr.mxu0 0.0
  %1407 = vmatpush1.msra.mxu0 0.0
  %1408 = vmatprep.subr.mxu0 0.0
  %1409 = vmatpush1.msra.mxu0 0.0
  %1410 = vmatprep.subr.mxu0 0.0
  %1411 = vmatpush1.msra.mxu0 0.0
  %1412 = vmatprep.subr.mxu0 0.0
  %1413 = vmatpush1.msra.mxu0 0.0
  %1414 = vmatprep.subr.mxu0 0.0
  %1415 = vmatpush1.msra.mxu0 0.0
  %1416 = vmatprep.subr.mxu0 0.0
  %1417 = vmatpush1.msra.mxu0 0.0
  %1418 = vmatprep.subr.mxu0 0.0
  %1419 = vmatpush1.msra.mxu0 0.0
  %1420 = vmatprep.subr.mxu0 0.0
  %1421 = vmatpush1.msra.mxu0 0.0
  %1422 = vmatprep.subr.mxu0 0.0
  %1423 = vmatpush1.msra.mxu0 0.0
  %1424 = vmatprep.subr.mxu0 0.0
  %1425 = vmatpush1.msra.mxu0 0.0
  %1426 = vmatprep.subr.mxu0 0.0
  %1427 = vmatpush1.msra.mxu0 0.0
  %1428 = vmatprep.subr.mxu0 0.0
  %1429 = vmatpush1.msra.mxu0 0.0
  %1430 = vmatprep.subr.mxu0 0.0
  %1431 = vmatpush1.msra.mxu0 0.0
  %1432 = vmatprep.mubr.f32.mxu0 0.0
  %1433 = vmatmul.mubr.f32.gmra.mrb[0].mxu0 %v243
  %v1434 = vpop.f32.mrb[0].mxu0
  %v1435 = vadd.f32 0.0, %v1434
  %v1436 = vpop.f32.mrb[0].mxu0
  %1437 = vmatprep.mubr.f32.mxu0 0.0
  %1438 = vmatmul.mubr.f32.gmra.mrb[0].mxu0 %v246
  %v1439 = vpop.f32.mrb[0].mxu0
  %v1440 = vadd.f32 0.0, %v1439
  %v1441 = vpop.f32.mrb[0].mxu0
  %1442 = vmatprep.mubr.f32.mxu0 0.0
  %1443 = vmatmul.mubr.f32.gmra.mrb[0].mxu0 %v249
  %v1444 = vpop.f32.mrb[0].mxu0
  %v1445 = vadd.f32 0.0, %v1444
  %v1446 = vpop.f32.mrb[0].mxu0
  %1447 = vmatprep.mubr.f32.mxu0 0.0
  %1448 = vmatmul.mubr.f32.gmra.mrb[0].mxu0 %v252
  %v1449 = vpop.f32.mrb[0].mxu0
  %v1450 = vadd.f32 0.0, %v1449
  %v1451 = vpop.f32.mrb[0].mxu0
  %1452 = vmatprep.mubr.f32.mxu0 0.0
  %1453 = vmatmul.mubr.f32.gmra.mrb[0].mxu0 %v255
  %v1454 = vpop.f32.mrb[0].mxu0
  %v1455 = vadd.f32 0.0, %v1454
  %v1456 = vpop.f32.mrb[0].mxu0
  %1457 = vmatprep.mubr.f32.mxu0 0.0
  %1458 = vmatmul.mubr.f32.gmra.mrb[0].mxu0 %v258
  %v1459 = vpop.f32.mrb[0].mxu0
  %v1460 = vadd.f32 0.0, %v1459
  %v1461 = vpop.f32.mrb[0].mxu0
  %1462 = vmatprep.mubr.f32.mxu0 0.0
  %1463 = vmatmul.mubr.f32.gmra.mrb[0].mxu0 %v261
  %v1464 = vpop.f32.mrb[0].mxu0
  %v1465 = vadd.f32 0.0, %v1464
  %v1466 = vpop.f32.mrb[0].mxu0
  %1467 = vmatprep.mubr.f32.mxu0 0.0
  %1468 = vmatmul.mubr.f32.gmra.mrb[0].mxu0 %v264
  %v1469 = vpop.f32.mrb[0].mxu0
  %v1470 = vadd.f32 0.0, %v1469
  %v1471 = vpop.f32.mrb[0].mxu0
  %1472 = vmatprep.mubr.f32.mxu0 0.0
  %1473 = vmatmul.mubr.f32.gmra.mrb[0].mxu0 %v267
  %v1474 = vpop.f32.mrb[0].mxu0
  %v1475 = vadd.f32 0.0, %v1474
  %v1476 = vpop.f32.mrb[0].mxu0
  %1477 = vmatprep.mubr.f32.mxu0 0.0
  %1478 = vmatmul.mubr.f32.gmra.mrb[0].mxu0 %v270
  %v1479 = vpop.f32.mrb[0].mxu0
  %v1480 = vadd.f32 0.0, %v1479
  %v1481 = vpop.f32.mrb[0].mxu0
  %1482 = vmatprep.mubr.f32.mxu0 0.0
  %1483 = vmatmul.mubr.f32.gmra.mrb[0].mxu0 %v273
  %v1484 = vpop.f32.mrb[0].mxu0
  %v1485 = vadd.f32 0.0, %v1484
  %v1486 = vpop.f32.mrb[0].mxu0
  %1487 = vmatprep.mubr.f32.mxu0 0.0
  %1488 = vmatmul.mubr.f32.gmra.mrb[0].mxu0 %v276
  %v1489 = vpop.f32.mrb[0].mxu0
  %v1490 = vadd.f32 0.0, %v1489
  %v1491 = vpop.f32.mrb[0].mxu0
  %1492 = vdwg.mxu0
  %v1493 = vadd.f32 %v1435, %v1465
  %v1494 = vadd.f32 %v1440, %v1470
  %v1495 = vadd.f32 %v1445, %v1475
  %v1496 = vadd.f32 %v1450, %v1480
  %v1497 = vadd.f32 %v1455, %v1485
  %v1498 = vadd.f32 %v1460, %v1490
  %v1499 = vmul.f32 %v1493, 0.5
  %v1500 = vmul.f32 %v1494, 0.5
  %v1501 = vmul.f32 %v1495, 0.5
  %v1502 = vmul.f32 %v1496, 0.5
  %v1503 = vmul.f32 %v1497, 0.5
  %v1504 = vmul.f32 %v1498, 0.5
  %1505 = vmatprep.subr.mxu0 0.0
  %1506 = vmatpush1.msra.mxu0 %v1499
  %1507 = vmatprep.subr.mxu0 0.0
  %1508 = vmatpush1.msra.mxu0 %v1500
  %1509 = vmatprep.subr.mxu0 0.0
  %1510 = vmatpush1.msra.mxu0 %v1501
  %1511 = vmatprep.subr.mxu0 0.0
  %1512 = vmatpush1.msra.mxu0 %v1502
  %1513 = vmatprep.subr.mxu0 0.0
  %1514 = vmatpush1.msra.mxu0 %v1503
  %1515 = vmatprep.subr.mxu0 0.0
  %1516 = vmatpush1.msra.mxu0 %v1504
  %1517 = vmatprep.subr.mxu0 0.0
  %1518 = vmatpush1.msra.mxu0 0.0
  %1519 = vmatprep.subr.mxu0 0.0
  %1520 = vmatpush1.msra.mxu0 0.0
  %1521 = vmatprep.subr.mxu0 0.0
  %1522 = vmatpush1.msra.mxu0 0.0
  %1523 = vmatprep.subr.mxu0 0.0
  %1524 = vmatpush1.msra.mxu0 0.0
  %1525 = vmatprep.subr.mxu0 0.0
  %1526 = vmatpush1.msra.mxu0 0.0
  %1527 = vmatprep.subr.mxu0 0.0
  %1528 = vmatpush1.msra.mxu0 0.0
  %1529 = vmatprep.subr.mxu0 0.0
  %1530 = vmatpush1.msra.mxu0 0.0
  %1531 = vmatprep.subr.mxu0 0.0
  %1532 = vmatpush1.msra.mxu0 0.0
  %1533 = vmatprep.subr.mxu0 0.0
  %1534 = vmatpush1.msra.mxu0 0.0
  %1535 = vmatprep.subr.mxu0 0.0
  %1536 = vmatpush1.msra.mxu0 0.0
  %1537 = vmatprep.subr.mxu0 0.0
  %1538 = vmatpush1.msra.mxu0 0.0
  %1539 = vmatprep.subr.mxu0 0.0
  %1540 = vmatpush1.msra.mxu0 0.0
  %1541 = vmatprep.subr.mxu0 0.0
  %1542 = vmatpush1.msra.mxu0 0.0
  %1543 = vmatprep.subr.mxu0 0.0
  %1544 = vmatpush1.msra.mxu0 0.0
  %1545 = vmatprep.subr.mxu0 0.0
  %1546 = vmatpush1.msra.mxu0 0.0
  %1547 = vmatprep.subr.mxu0 0.0
  %1548 = vmatpush1.msra.mxu0 0.0
  %1549 = vmatprep.subr.mxu0 0.0
  %1550 = vmatpush1.msra.mxu0 0.0
  %1551 = vmatprep.subr.mxu0 0.0
  %1552 = vmatpush1.msra.mxu0 0.0
  %1553 = vmatprep.subr.mxu0 0.0
  %1554 = vmatpush1.msra.mxu0 0.0
  %1555 = vmatprep.subr.mxu0 0.0
  %1556 = vmatpush1.msra.mxu0 0.0
  %1557 = vmatprep.subr.mxu0 0.0
  %1558 = vmatpush1.msra.mxu0 0.0
  %1559 = vmatprep.subr.mxu0 0.0
  %1560 = vmatpush1.msra.mxu0 0.0
  %1561 = vmatprep.subr.mxu0 0.0
  %1562 = vmatpush1.msra.mxu0 0.0
  %1563 = vmatprep.subr.mxu0 0.0
  %1564 = vmatpush1.msra.mxu0 0.0
  %1565 = vmatprep.subr.mxu0 0.0
  %1566 = vmatpush1.msra.mxu0 0.0
  %1567 = vmatprep.subr.mxu0 0.0
  %1568 = vmatpush1.msra.mxu0 0.0
  %1569 = vmatprep.mubr.f32.mxu0 0.0
  %1570 = vmatmul.mubr.f32.gmra.mrb[0].mxu0 %v1072
  %v1571 = vpop.f32.mrb[0].mxu0
  %v1572 = vadd.f32 0.0, %v1571
  %v1573 = vpop.f32.mrb[0].mxu0
  %1574 = vmatprep.mubr.f32.mxu0 0.0
  %1575 = vmatmul.mubr.f32.gmra.mrb[0].mxu0 %v1075
  %v1576 = vpop.f32.mrb[0].mxu0
  %v1577 = vadd.f32 0.0, %v1576
  %v1578 = vpop.f32.mrb[0].mxu0
  %1579 = vmatprep.mubr.f32.mxu0 0.0
  %1580 = vmatmul.mubr.f32.gmra.mrb[0].mxu0 %v1078
  %v1581 = vpop.f32.mrb[0].mxu0
  %v1582 = vadd.f32 0.0, %v1581
  %v1583 = vpop.f32.mrb[0].mxu0
  %1584 = vdwg.mxu0
  %1586 = vset.pattern.permute.xlu0 0
  %1587 = vperm.xlu0 %1586, %v238
  %v1588 = vpop.permute.xlu0 %1587
  %1591 = vset.pattern.permute.xlu0 0
  %1592 = vperm.xlu0 %1591, %v239
  %v1593 = vpop.permute.xlu0 %1592
  %1596 = vset.pattern.permute.xlu0 0
  %1597 = vperm.xlu0 %1596, %v240
  %v1598 = vpop.permute.xlu0 %1597
  %v1600 = vmul.f32 %v1572, %v1588
  %v1601 = vmul.f32 %v1577, %v1593
  %v1602 = vmul.f32 %v1582, %v1598
  %v1603 = vld [vmem:[%s35] sm:$0xf]
  %v1604 = vld [vmem:[%s35 + $0x4] sm:$0xf]
  %v1605 = vld [vmem:[%s37] sm:$0x1]
  %v1606 = vld [vmem:[%s39] sm:$0xf]
  %v1607 = vld [vmem:[%s39 + $0x4] sm:$0xf]
  %v1608 = vld [vmem:[%s41] sm:$0x1]
  %v1609 = vld [vmem:[%s43] sm:$0xf]
  %v1610 = vld [vmem:[%s43 + $0x4] sm:$0xf]
  %v1611 = vld [vmem:[%s45] sm:$0x1]
  %v1612 = vld [vmem:[%s47] sm:$0xf]
  %v1613 = vld [vmem:[%s47 + $0x4] sm:$0xf]
  %v1614 = vld [vmem:[%s47 + $0x8] sm:$0xf]
  %v1615 = vld [vmem:[%s47 + $0xc] sm:$0xf]
  %v1616 = vld [vmem:[%s49] sm:$0x1]
  %v1617 = vld [vmem:[%s51] sm:$0xf]
  %v1618 = vld [vmem:[%s51 + $0x4] sm:$0xf]
  %v1619 = vld [vmem:[%s53] sm:$0x1]
  %v1620 = vld [vmem:[%s55] sm:$0xf]
  %v1621 = vld [vmem:[%s57] sm:$0x1]
  %v1622 = vld [vmem:[%s59] sm:$0xf]
  %v1623 = vld [vmem:[%s59 + $0x4] sm:$0xf]
  %v1624 = vld [vmem:[%s59 + $0x8] sm:$0xf]
  %v1625 = vld [vmem:[%s59 + $0xc] sm:$0xf]
  %v1626 = vld [vmem:[%s61] sm:$0x1]
  %1627 = vmatprep.subr.mxu0 0.0
  %1628 = vmatpush1.msra.mxu0 %v1600
  %1629 = vmatprep.subr.mxu0 0.0
  %1630 = vmatpush1.msra.mxu0 %v1601
  %1631 = vmatprep.subr.mxu0 0.0
  %1632 = vmatpush1.msra.mxu0 %v1602
  %1633 = vmatprep.subr.mxu0 0.0
  %1634 = vmatpush1.msra.mxu0 0.0
  %1635 = vmatprep.subr.mxu0 0.0
  %1636 = vmatpush1.msra.mxu0 0.0
  %1637 = vmatprep.subr.mxu0 0.0
  %1638 = vmatpush1.msra.mxu0 0.0
  %1639 = vmatprep.subr.mxu0 0.0
  %1640 = vmatpush1.msra.mxu0 0.0
  %1641 = vmatprep.subr.mxu0 0.0
  %1642 = vmatpush1.msra.mxu0 0.0
  %1643 = vmatprep.subr.mxu0 0.0
  %1644 = vmatpush1.msra.mxu0 0.0
  %1645 = vmatprep.subr.mxu0 0.0
  %1646 = vmatpush1.msra.mxu0 0.0
  %1647 = vmatprep.subr.mxu0 0.0
  %1648 = vmatpush1.msra.mxu0 0.0
  %1649 = vmatprep.subr.mxu0 0.0
  %1650 = vmatpush1.msra.mxu0 0.0
  %1651 = vmatprep.subr.mxu0 0.0
  %1652 = vmatpush1.msra.mxu0 0.0
  %1653 = vmatprep.subr.mxu0 0.0
  %1654 = vmatpush1.msra.mxu0 0.0
  %1655 = vmatprep.subr.mxu0 0.0
  %1656 = vmatpush1.msra.mxu0 0.0
  %1657 = vmatprep.subr.mxu0 0.0
  %1658 = vmatpush1.msra.mxu0 0.0
  %1659 = vmatprep.subr.mxu0 0.0
  %1660 = vmatpush1.msra.mxu0 0.0
  %1661 = vmatprep.subr.mxu0 0.0
  %1662 = vmatpush1.msra.mxu0 0.0
  %1663 = vmatprep.subr.mxu0 0.0
  %1664 = vmatpush1.msra.mxu0 0.0
  %1665 = vmatprep.subr.mxu0 0.0
  %1666 = vmatpush1.msra.mxu0 0.0
  %1667 = vmatprep.subr.mxu0 0.0
  %1668 = vmatpush1.msra.mxu0 0.0
  %1669 = vmatprep.subr.mxu0 0.0
  %1670 = vmatpush1.msra.mxu0 0.0
  %1671 = vmatprep.subr.mxu0 0.0
  %1672 = vmatpush1.msra.mxu0 0.0
  %1673 = vmatprep.subr.mxu0 0.0
  %1674 = vmatpush1.msra.mxu0 0.0
  %1675 = vmatprep.subr.mxu0 0.0
  %1676 = vmatpush1.msra.mxu0 0.0
  %1677 = vmatprep.subr.mxu0 0.0
  %1678 = vmatpush1.msra.mxu0 0.0
  %1679 = vmatprep.subr.mxu0 0.0
  %1680 = vmatpush1.msra.mxu0 0.0
  %1681 = vmatprep.subr.mxu0 0.0
  %1682 = vmatpush1.msra.mxu0 0.0
  %1683 = vmatprep.subr.mxu0 0.0
  %1684 = vmatpush1.msra.mxu0 0.0
  %1685 = vmatprep.subr.mxu0 0.0
  %1686 = vmatpush1.msra.mxu0 0.0
  %1687 = vmatprep.subr.mxu0 0.0
  %1688 = vmatpush1.msra.mxu0 0.0
  %1689 = vmatprep.subr.mxu0 0.0
  %1690 = vmatpush1.msra.mxu0 0.0
  %1691 = vmatprep.mubr.f32.mxu0 0.0
  %1692 = vmatmul.mubr.f32.gmra.mrb[0].mxu0 %v243
  %v1693 = vpop.f32.mrb[0].mxu0
  %v1694 = vadd.f32 0.0, %v1693
  %v1695 = vpop.f32.mrb[0].mxu0
  %1696 = vmatprep.mubr.f32.mxu0 0.0
  %1697 = vmatmul.mubr.f32.gmra.mrb[0].mxu0 %v246
  %v1698 = vpop.f32.mrb[0].mxu0
  %v1699 = vadd.f32 0.0, %v1698
  %v1700 = vpop.f32.mrb[0].mxu0
  %1701 = vmatprep.mubr.f32.mxu0 0.0
  %1702 = vmatmul.mubr.f32.gmra.mrb[0].mxu0 %v249
  %v1703 = vpop.f32.mrb[0].mxu0
  %v1704 = vadd.f32 0.0, %v1703
  %v1705 = vpop.f32.mrb[0].mxu0
  %1706 = vmatprep.mubr.f32.mxu0 0.0
  %1707 = vmatmul.mubr.f32.gmra.mrb[0].mxu0 %v252
  %v1708 = vpop.f32.mrb[0].mxu0
  %v1709 = vadd.f32 0.0, %v1708
  %v1710 = vpop.f32.mrb[0].mxu0
  %1711 = vmatprep.mubr.f32.mxu0 0.0
  %1712 = vmatmul.mubr.f32.gmra.mrb[0].mxu0 %v255
  %v1713 = vpop.f32.mrb[0].mxu0
  %v1714 = vadd.f32 0.0, %v1713
  %v1715 = vpop.f32.mrb[0].mxu0
  %1716 = vmatprep.mubr.f32.mxu0 0.0
  %1717 = vmatmul.mubr.f32.gmra.mrb[0].mxu0 %v258
  %v1718 = vpop.f32.mrb[0].mxu0
  %v1719 = vadd.f32 0.0, %v1718
  %v1720 = vpop.f32.mrb[0].mxu0
  %1721 = vmatprep.mubr.f32.mxu0 0.0
  %1722 = vmatmul.mubr.f32.gmra.mrb[0].mxu0 %v261
  %v1723 = vpop.f32.mrb[0].mxu0
  %v1724 = vadd.f32 0.0, %v1723
  %v1725 = vpop.f32.mrb[0].mxu0
  %1726 = vmatprep.mubr.f32.mxu0 0.0
  %1727 = vmatmul.mubr.f32.gmra.mrb[0].mxu0 %v264
  %v1728 = vpop.f32.mrb[0].mxu0
  %v1729 = vadd.f32 0.0, %v1728
  %v1730 = vpop.f32.mrb[0].mxu0
  %1731 = vmatprep.mubr.f32.mxu0 0.0
  %1732 = vmatmul.mubr.f32.gmra.mrb[0].mxu0 %v267
  %v1733 = vpop.f32.mrb[0].mxu0
  %v1734 = vadd.f32 0.0, %v1733
  %v1735 = vpop.f32.mrb[0].mxu0
  %1736 = vmatprep.mubr.f32.mxu0 0.0
  %1737 = vmatmul.mubr.f32.gmra.mrb[0].mxu0 %v270
  %v1738 = vpop.f32.mrb[0].mxu0
  %v1739 = vadd.f32 0.0, %v1738
  %v1740 = vpop.f32.mrb[0].mxu0
  %1741 = vmatprep.mubr.f32.mxu0 0.0
  %1742 = vmatmul.mubr.f32.gmra.mrb[0].mxu0 %v273
  %v1743 = vpop.f32.mrb[0].mxu0
  %v1744 = vadd.f32 0.0, %v1743
  %v1745 = vpop.f32.mrb[0].mxu0
  %1746 = vmatprep.mubr.f32.mxu0 0.0
  %1747 = vmatmul.mubr.f32.gmra.mrb[0].mxu0 %v276
  %v1748 = vpop.f32.mrb[0].mxu0
  %v1749 = vadd.f32 0.0, %v1748
  %v1750 = vpop.f32.mrb[0].mxu0
  %1751 = vdwg.mxu0
  %v1752 = vpack.c.bf16 %v1500, %v1499
  %v1753 = vpack.c.bf16 %v1502, %v1501
  %v1754 = vpack.c.bf16 %v1504, %v1503
  %v1756 = vlaneseq
  %v1757 = vshrl.u32 %v1756, 7
  %v1758 = vsub.s32 0, %v1757
  %v1759 = vrot.slane %v1611, %v1758
  %v1763 = vunpack.c.l.b16 %v1609
  %v1764 = vunpack.c.l.b16 %v1610
  %v1765 = vpack.c.b16 %v1764, %v1763
  %vm1767 = vcmask 130048
  %v1769 = vsel %vm1767, %v1752, 0
  %v1772 = vsel %vm1767, %v1753, 0
  %v1775 = vsel %vm1767, %v1754, 0
  %1777 = vmatprep.subr.bf16.mxu0 0
  %1778 = vmatpush1.bf16.msra.mxu0 %v1765
  %1779 = vmatprep.subr.bf16.mxu0 0
  %1780 = vmatpush1.bf16.msra.mxu0 0
  %1781 = vmatprep.subr.bf16.mxu0 0
  %1782 = vmatpush1.bf16.msra.mxu0 0
  %1783 = vmatprep.subr.bf16.mxu0 0
  %1784 = vmatpush1.bf16.msra.mxu0 0
  %1785 = vmatprep.subr.bf16.mxu0 0
  %1786 = vmatpush1.bf16.msra.mxu0 0
  %1787 = vmatprep.subr.bf16.mxu0 0
  %1788 = vmatpush1.bf16.msra.mxu0 0
  %1789 = vmatprep.subr.bf16.mxu0 0
  %1790 = vmatpush1.bf16.msra.mxu0 0
  %1791 = vmatprep.subr.bf16.mxu0 0
  %1792 = vmatpush1.bf16.msra.mxu0 0
  %1793 = vmatprep.subr.bf16.mxu0 0
  %1794 = vmatpush1.bf16.msra.mxu0 0
  %1795 = vmatprep.subr.bf16.mxu0 0
  %1796 = vmatpush1.bf16.msra.mxu0 0
  %1797 = vmatprep.subr.bf16.mxu0 0
  %1798 = vmatpush1.bf16.msra.mxu0 0
  %1799 = vmatprep.subr.bf16.mxu0 0
  %1800 = vmatpush1.bf16.msra.mxu0 0
  %1801 = vmatprep.subr.bf16.mxu0 0
  %1802 = vmatpush1.bf16.msra.mxu0 0
  %1803 = vmatprep.subr.bf16.mxu0 0
  %1804 = vmatpush1.bf16.msra.mxu0 0
  %1805 = vmatprep.subr.bf16.mxu0 0
  %1806 = vmatpush1.bf16.msra.mxu0 0
  %1807 = vmatprep.subr.bf16.mxu0 0
  %1808 = vmatpush1.bf16.msra.mxu0 0
  %1809 = vmatprep.mubr.bf16.mxu0 0
  %1810 = vmatmul.mubr.bf16.gmra.mrb[0].mxu0 %v1769
  %v1811 = vpop.f32.mrb[0].mxu0
  %v1812 = vadd.f32 %v1759, %v1811
  %v1813 = vpop.f32.mrb[0].mxu0
  %v1814 = vpop.f32.mrb[0].mxu0
  %v1815 = vadd.f32 %v1759, %v1814
  %v1816 = vpop.f32.mrb[0].mxu0
  %1817 = vmatprep.mubr.bf16.mxu0 0
  %1818 = vmatmul.mubr.bf16.gmra.mrb[0].mxu0 %v1772
  %v1819 = vpop.f32.mrb[0].mxu0
  %v1820 = vadd.f32 %v1759, %v1819
  %v1821 = vpop.f32.mrb[0].mxu0
  %v1822 = vpop.f32.mrb[0].mxu0
  %v1823 = vadd.f32 %v1759, %v1822
  %v1824 = vpop.f32.mrb[0].mxu0
  %1825 = vmatprep.mubr.bf16.mxu0 0
  %1826 = vmatmul.mubr.bf16.gmra.mrb[0].mxu0 %v1775
  %v1827 = vpop.f32.mrb[0].mxu0
  %v1828 = vadd.f32 %v1759, %v1827
  %v1829 = vpop.f32.mrb[0].mxu0
  %v1830 = vpop.f32.mrb[0].mxu0
  %v1831 = vadd.f32 %v1759, %v1830
  %v1832 = vpop.f32.mrb[0].mxu0
  %1833 = vdwg.mxu0
  %v1834 = vadd.f32 %v1724, %v1694
  %v1835 = vadd.f32 %v1729, %v1699
  %v1836 = vadd.f32 %v1734, %v1704
  %v1837 = vadd.f32 %v1739, %v1709
  %v1838 = vadd.f32 %v1744, %v1714
  %v1839 = vadd.f32 %v1749, %v1719
  %v1840 = vmul.f32 %v1834, 0.5
  %v1841 = vmul.f32 %v1835, 0.5
  %v1842 = vmul.f32 %v1836, 0.5
  %v1843 = vmul.f32 %v1837, 0.5
  %v1844 = vmul.f32 %v1838, 0.5
  %v1845 = vmul.f32 %v1839, 0.5
  %v1846 = vpack.c.bf16 %v1841, %v1840
  %v1847 = vpack.c.bf16 %v1843, %v1842
  %v1848 = vpack.c.bf16 %v1845, %v1844
  %v1851 = vunpack.c.l.b16 %v1603
  %v1852 = vunpack.c.l.b16 %v1604
  %v1853 = vpack.c.b16 %v1852, %v1851
  %v1856 = vsel %vm1767, %v1846, 0
  %v1859 = vsel %vm1767, %v1847, 0
  %v1862 = vsel %vm1767, %v1848, 0
  %1864 = vmatprep.subr.bf16.mxu0 0
  %1865 = vmatpush1.bf16.msra.mxu0 %v1853
  %1866 = vmatprep.subr.bf16.mxu0 0
  %1867 = vmatpush1.bf16.msra.mxu0 0
  %1868 = vmatprep.subr.bf16.mxu0 0
  %1869 = vmatpush1.bf16.msra.mxu0 0
  %1870 = vmatprep.subr.bf16.mxu0 0
  %1871 = vmatpush1.bf16.msra.mxu0 0
  %1872 = vmatprep.subr.bf16.mxu0 0
  %1873 = vmatpush1.bf16.msra.mxu0 0
  %1874 = vmatprep.subr.bf16.mxu0 0
  %1875 = vmatpush1.bf16.msra.mxu0 0
  %1876 = vmatprep.subr.bf16.mxu0 0
  %1877 = vmatpush1.bf16.msra.mxu0 0
  %1878 = vmatprep.subr.bf16.mxu0 0
  %1879 = vmatpush1.bf16.msra.mxu0 0
  %1880 = vmatprep.subr.bf16.mxu0 0
  %1881 = vmatpush1.bf16.msra.mxu0 0
  %1882 = vmatprep.subr.bf16.mxu0 0
  %1883 = vmatpush1.bf16.msra.mxu0 0
  %1884 = vmatprep.subr.bf16.mxu0 0
  %1885 = vmatpush1.bf16.msra.mxu0 0
  %1886 = vmatprep.subr.bf16.mxu0 0
  %1887 = vmatpush1.bf16.msra.mxu0 0
  %1888 = vmatprep.subr.bf16.mxu0 0
  %1889 = vmatpush1.bf16.msra.mxu0 0
  %1890 = vmatprep.subr.bf16.mxu0 0
  %1891 = vmatpush1.bf16.msra.mxu0 0
  %1892 = vmatprep.subr.bf16.mxu0 0
  %1893 = vmatpush1.bf16.msra.mxu0 0
  %1894 = vmatprep.subr.bf16.mxu0 0
  %1895 = vmatpush1.bf16.msra.mxu0 0
  %1896 = vmatprep.mubr.bf16.mxu0 0
  %1897 = vmatmul.mubr.bf16.gmra.mrb[0].mxu0 %v1856
  %v1898 = vpop.f32.mrb[0].mxu0
  %v1899 = vadd.f32 0.0, %v1898
  %v1900 = vpop.f32.mrb[0].mxu0
  %v1901 = vpop.f32.mrb[0].mxu0
  %v1902 = vadd.f32 0.0, %v1901
  %v1903 = vpop.f32.mrb[0].mxu0
  %1904 = vmatprep.mubr.bf16.mxu0 0
  %1905 = vmatmul.mubr.bf16.gmra.mrb[0].mxu0 %v1859
  %v1906 = vpop.f32.mrb[0].mxu0
  %v1907 = vadd.f32 0.0, %v1906
  %v1908 = vpop.f32.mrb[0].mxu0
  %v1909 = vpop.f32.mrb[0].mxu0
  %v1910 = vadd.f32 0.0, %v1909
  %v1911 = vpop.f32.mrb[0].mxu0
  %1912 = vmatprep.mubr.bf16.mxu0 0
  %1913 = vmatmul.mubr.bf16.gmra.mrb[0].mxu0 %v1862
  %v1914 = vpop.f32.mrb[0].mxu0
  %v1915 = vadd.f32 0.0, %v1914
  %v1916 = vpop.f32.mrb[0].mxu0
  %v1917 = vpop.f32.mrb[0].mxu0
  %v1918 = vadd.f32 0.0, %v1917
  %v1919 = vpop.f32.mrb[0].mxu0
  %1920 = vdwg.mxu0
  %v1921 = vadd.f32 %v1812, %v1899
  %v1922 = vadd.f32 %v1815, %v1902
  %v1923 = vadd.f32 %v1820, %v1907
  %v1924 = vadd.f32 %v1823, %v1910
  %v1925 = vadd.f32 %v1828, %v1915
  %v1926 = vadd.f32 %v1831, %v1918
  %v1927 = vsub.f32 %v1724, %v1694
  %v1928 = vsub.f32 %v1729, %v1699
  %v1929 = vsub.f32 %v1734, %v1704
  %v1930 = vsub.f32 %v1739, %v1709
  %v1931 = vsub.f32 %v1744, %v1714
  %v1932 = vsub.f32 %v1749, %v1719
  %v1933 = vand.u32 2147483647, %v1927
  %v1934 = vand.u32 2147483647, %v1928
  %v1935 = vand.u32 2147483647, %v1929
  %v1936 = vand.u32 2147483647, %v1930
  %v1937 = vand.u32 2147483647, %v1931
  %v1938 = vand.u32 2147483647, %v1932
  %v1939 = vmul.f32 %v1933, 0.5
  %v1940 = vmul.f32 %v1934, 0.5
  %v1941 = vmul.f32 %v1935, 0.5
  %v1942 = vmul.f32 %v1936, 0.5
  %v1943 = vmul.f32 %v1937, 0.5
  %v1944 = vmul.f32 %v1938, 0.5
  %v1945 = vpack.c.bf16 %v1940, %v1939
  %v1946 = vpack.c.bf16 %v1942, %v1941
  %v1947 = vpack.c.bf16 %v1944, %v1943
  %v1950 = vunpack.c.l.b16 %v1606
  %v1951 = vunpack.c.l.b16 %v1607
  %v1952 = vpack.c.b16 %v1951, %v1950
  %v1955 = vsel %vm1767, %v1945, 0
  %v1958 = vsel %vm1767, %v1946, 0
  %v1961 = vsel %vm1767, %v1947, 0
  %1963 = vmatprep.subr.bf16.mxu0 0
  %1964 = vmatpush1.bf16.msra.mxu0 %v1952
  %1965 = vmatprep.subr.bf16.mxu0 0
  %1966 = vmatpush1.bf16.msra.mxu0 0
  %1967 = vmatprep.subr.bf16.mxu0 0
  %1968 = vmatpush1.bf16.msra.mxu0 0
  %1969 = vmatprep.subr.bf16.mxu0 0
  %1970 = vmatpush1.bf16.msra.mxu0 0
  %1971 = vmatprep.subr.bf16.mxu0 0
  %1972 = vmatpush1.bf16.msra.mxu0 0
  %1973 = vmatprep.subr.bf16.mxu0 0
  %1974 = vmatpush1.bf16.msra.mxu0 0
  %1975 = vmatprep.subr.bf16.mxu0 0
  %1976 = vmatpush1.bf16.msra.mxu0 0
  %1977 = vmatprep.subr.bf16.mxu0 0
  %1978 = vmatpush1.bf16.msra.mxu0 0
  %1979 = vmatprep.subr.bf16.mxu0 0
  %1980 = vmatpush1.bf16.msra.mxu0 0
  %1981 = vmatprep.subr.bf16.mxu0 0
  %1982 = vmatpush1.bf16.msra.mxu0 0
  %1983 = vmatprep.subr.bf16.mxu0 0
  %1984 = vmatpush1.bf16.msra.mxu0 0
  %1985 = vmatprep.subr.bf16.mxu0 0
  %1986 = vmatpush1.bf16.msra.mxu0 0
  %1987 = vmatprep.subr.bf16.mxu0 0
  %1988 = vmatpush1.bf16.msra.mxu0 0
  %1989 = vmatprep.subr.bf16.mxu0 0
  %1990 = vmatpush1.bf16.msra.mxu0 0
  %1991 = vmatprep.subr.bf16.mxu0 0
  %1992 = vmatpush1.bf16.msra.mxu0 0
  %1993 = vmatprep.subr.bf16.mxu0 0
  %1994 = vmatpush1.bf16.msra.mxu0 0
  %1995 = vmatprep.mubr.bf16.mxu0 0
  %1996 = vmatmul.mubr.bf16.gmra.mrb[0].mxu0 %v1955
  %v1997 = vpop.f32.mrb[0].mxu0
  %v1998 = vadd.f32 0.0, %v1997
  %v1999 = vpop.f32.mrb[0].mxu0
  %v2000 = vpop.f32.mrb[0].mxu0
  %v2001 = vadd.f32 0.0, %v2000
  %v2002 = vpop.f32.mrb[0].mxu0
  %2003 = vmatprep.mubr.bf16.mxu0 0
  %2004 = vmatmul.mubr.bf16.gmra.mrb[0].mxu0 %v1958
  %v2005 = vpop.f32.mrb[0].mxu0
  %v2006 = vadd.f32 0.0, %v2005
  %v2007 = vpop.f32.mrb[0].mxu0
  %v2008 = vpop.f32.mrb[0].mxu0
  %v2009 = vadd.f32 0.0, %v2008
  %v2010 = vpop.f32.mrb[0].mxu0
  %2011 = vmatprep.mubr.bf16.mxu0 0
  %2012 = vmatmul.mubr.bf16.gmra.mrb[0].mxu0 %v1961
  %v2013 = vpop.f32.mrb[0].mxu0
  %v2014 = vadd.f32 0.0, %v2013
  %v2015 = vpop.f32.mrb[0].mxu0
  %v2016 = vpop.f32.mrb[0].mxu0
  %v2017 = vadd.f32 0.0, %v2016
  %v2018 = vpop.f32.mrb[0].mxu0
  %2019 = vdwg.mxu0
  %v2020 = vadd.f32 %v1921, %v1998
  %v2021 = vadd.f32 %v1922, %v2001
  %v2022 = vadd.f32 %v1923, %v2006
  %v2023 = vadd.f32 %v1924, %v2009
  %v2024 = vadd.f32 %v1925, %v2014
  %v2025 = vadd.f32 %v1926, %v2017
  %v2026 = vadd.f32 %v375, %v345
  %v2027 = vadd.f32 %v380, %v350
  %v2028 = vadd.f32 %v385, %v355
  %v2029 = vadd.f32 %v390, %v360
  %v2030 = vadd.f32 %v395, %v365
  %v2031 = vadd.f32 %v400, %v370
  %v2032 = vmul.f32 %v2026, 0.5
  %v2033 = vmul.f32 %v2027, 0.5
  %v2034 = vmul.f32 %v2028, 0.5
  %v2035 = vmul.f32 %v2029, 0.5
  %v2036 = vmul.f32 %v2030, 0.5
  %v2037 = vmul.f32 %v2031, 0.5
  %v2038 = vpack.c.bf16 %v2033, %v2032
  %v2039 = vpack.c.bf16 %v2035, %v2034
  %v2040 = vpack.c.bf16 %v2037, %v2036
  %vm2041 = vcmask 15360
  %v2043 = vsel %vm2041, %v2038, 0
  %v2046 = vsel %vm2041, %v2039, 0
  %v2049 = vsel %vm2041, %v2040, 0
  %v2052 = vsel %vm689, %v1605, 0
  %2054 = vmatprep.subr.bf16.mxu0 0
  %2055 = vmatpush1.bf16.msra.mxu0 %v2052
  %2056 = vmatprep.subr.bf16.mxu0 0
  %2057 = vmatpush1.bf16.msra.mxu0 0
  %2058 = vmatprep.subr.bf16.mxu0 0
  %2059 = vmatpush1.bf16.msra.mxu0 0
  %2060 = vmatprep.subr.bf16.mxu0 0
  %2061 = vmatpush1.bf16.msra.mxu0 0
  %2062 = vmatprep.subr.bf16.mxu0 0
  %2063 = vmatpush1.bf16.msra.mxu0 0
  %2064 = vmatprep.subr.bf16.mxu0 0
  %2065 = vmatpush1.bf16.msra.mxu0 0
  %2066 = vmatprep.subr.bf16.mxu0 0
  %2067 = vmatpush1.bf16.msra.mxu0 0
  %2068 = vmatprep.subr.bf16.mxu0 0
  %2069 = vmatpush1.bf16.msra.mxu0 0
  %2070 = vmatprep.subr.bf16.mxu0 0
  %2071 = vmatpush1.bf16.msra.mxu0 0
  %2072 = vmatprep.subr.bf16.mxu0 0
  %2073 = vmatpush1.bf16.msra.mxu0 0
  %2074 = vmatprep.subr.bf16.mxu0 0
  %2075 = vmatpush1.bf16.msra.mxu0 0
  %2076 = vmatprep.subr.bf16.mxu0 0
  %2077 = vmatpush1.bf16.msra.mxu0 0
  %2078 = vmatprep.subr.bf16.mxu0 0
  %2079 = vmatpush1.bf16.msra.mxu0 0
  %2080 = vmatprep.subr.bf16.mxu0 0
  %2081 = vmatpush1.bf16.msra.mxu0 0
  %2082 = vmatprep.subr.bf16.mxu0 0
  %2083 = vmatpush1.bf16.msra.mxu0 0
  %2084 = vmatprep.subr.bf16.mxu0 0
  %2085 = vmatpush1.bf16.msra.mxu0 0
  %2086 = vmatprep.mubr.bf16.mxu0 0
  %2087 = vmatmul.mubr.bf16.gmra.mrb[0].mxu0 %v2043
  %v2088 = vpop.f32.mrb[0].mxu0
  %v2089 = vadd.f32 0.0, %v2088
  %v2090 = vpop.f32.mrb[0].mxu0
  %v2091 = vpop.f32.mrb[0].mxu0
  %v2092 = vadd.f32 0.0, %v2091
  %v2093 = vpop.f32.mrb[0].mxu0
  %2094 = vmatprep.mubr.bf16.mxu0 0
  %2095 = vmatmul.mubr.bf16.gmra.mrb[0].mxu0 %v2046
  %v2096 = vpop.f32.mrb[0].mxu0
  %v2097 = vadd.f32 0.0, %v2096
  %v2098 = vpop.f32.mrb[0].mxu0
  %v2099 = vpop.f32.mrb[0].mxu0
  %v2100 = vadd.f32 0.0, %v2099
  %v2101 = vpop.f32.mrb[0].mxu0
  %2102 = vmatprep.mubr.bf16.mxu0 0
  %2103 = vmatmul.mubr.bf16.gmra.mrb[0].mxu0 %v2049
  %v2104 = vpop.f32.mrb[0].mxu0
  %v2105 = vadd.f32 0.0, %v2104
  %v2106 = vpop.f32.mrb[0].mxu0
  %v2107 = vpop.f32.mrb[0].mxu0
  %v2108 = vadd.f32 0.0, %v2107
  %v2109 = vpop.f32.mrb[0].mxu0
  %2110 = vdwg.mxu0
  %v2111 = vadd.f32 %v2020, %v2089
  %v2112 = vadd.f32 %v2021, %v2092
  %v2113 = vadd.f32 %v2022, %v2097
  %v2114 = vadd.f32 %v2023, %v2100
  %v2115 = vadd.f32 %v2024, %v2105
  %v2116 = vadd.f32 %v2025, %v2108
  %v2117 = vsub.f32 %v375, %v345
  %v2118 = vsub.f32 %v380, %v350
  %v2119 = vsub.f32 %v385, %v355
  %v2120 = vsub.f32 %v390, %v360
  %v2121 = vsub.f32 %v395, %v365
  %v2122 = vsub.f32 %v400, %v370
  %v2123 = vand.u32 2147483647, %v2117
  %v2124 = vand.u32 2147483647, %v2118
  %v2125 = vand.u32 2147483647, %v2119
  %v2126 = vand.u32 2147483647, %v2120
  %v2127 = vand.u32 2147483647, %v2121
  %v2128 = vand.u32 2147483647, %v2122
  %v2129 = vmul.f32 %v2123, 0.5
  %v2130 = vmul.f32 %v2124, 0.5
  %v2131 = vmul.f32 %v2125, 0.5
  %v2132 = vmul.f32 %v2126, 0.5
  %v2133 = vmul.f32 %v2127, 0.5
  %v2134 = vmul.f32 %v2128, 0.5
  %v2135 = vpack.c.bf16 %v2130, %v2129
  %v2136 = vpack.c.bf16 %v2132, %v2131
  %v2137 = vpack.c.bf16 %v2134, %v2133
  %v2139 = vsel %vm2041, %v2135, 0
  %v2142 = vsel %vm2041, %v2136, 0
  %v2145 = vsel %vm2041, %v2137, 0
  %v2148 = vsel %vm689, %v1608, 0
  %2150 = vmatprep.subr.bf16.mxu0 0
  %2151 = vmatpush1.bf16.msra.mxu0 %v2148
  %2152 = vmatprep.subr.bf16.mxu0 0
  %2153 = vmatpush1.bf16.msra.mxu0 0
  %2154 = vmatprep.subr.bf16.mxu0 0
  %2155 = vmatpush1.bf16.msra.mxu0 0
  %2156 = vmatprep.subr.bf16.mxu0 0
  %2157 = vmatpush1.bf16.msra.mxu0 0
  %2158 = vmatprep.subr.bf16.mxu0 0
  %2159 = vmatpush1.bf16.msra.mxu0 0
  %2160 = vmatprep.subr.bf16.mxu0 0
  %2161 = vmatpush1.bf16.msra.mxu0 0
  %2162 = vmatprep.subr.bf16.mxu0 0
  %2163 = vmatpush1.bf16.msra.mxu0 0
  %2164 = vmatprep.subr.bf16.mxu0 0
  %2165 = vmatpush1.bf16.msra.mxu0 0
  %2166 = vmatprep.subr.bf16.mxu0 0
  %2167 = vmatpush1.bf16.msra.mxu0 0
  %2168 = vmatprep.subr.bf16.mxu0 0
  %2169 = vmatpush1.bf16.msra.mxu0 0
  %2170 = vmatprep.subr.bf16.mxu0 0
  %2171 = vmatpush1.bf16.msra.mxu0 0
  %2172 = vmatprep.subr.bf16.mxu0 0
  %2173 = vmatpush1.bf16.msra.mxu0 0
  %2174 = vmatprep.subr.bf16.mxu0 0
  %2175 = vmatpush1.bf16.msra.mxu0 0
  %2176 = vmatprep.subr.bf16.mxu0 0
  %2177 = vmatpush1.bf16.msra.mxu0 0
  %2178 = vmatprep.subr.bf16.mxu0 0
  %2179 = vmatpush1.bf16.msra.mxu0 0
  %2180 = vmatprep.subr.bf16.mxu0 0
  %2181 = vmatpush1.bf16.msra.mxu0 0
  %2182 = vmatprep.mubr.bf16.mxu0 0
  %2183 = vmatmul.mubr.bf16.gmra.mrb[0].mxu0 %v2139
  %v2184 = vpop.f32.mrb[0].mxu0
  %v2185 = vadd.f32 0.0, %v2184
  %v2186 = vpop.f32.mrb[0].mxu0
  %v2187 = vpop.f32.mrb[0].mxu0
  %v2188 = vadd.f32 0.0, %v2187
  %v2189 = vpop.f32.mrb[0].mxu0
  %2190 = vmatprep.mubr.bf16.mxu0 0
  %2191 = vmatmul.mubr.bf16.gmra.mrb[0].mxu0 %v2142
  %v2192 = vpop.f32.mrb[0].mxu0
  %v2193 = vadd.f32 0.0, %v2192
  %v2194 = vpop.f32.mrb[0].mxu0
  %v2195 = vpop.f32.mrb[0].mxu0
  %v2196 = vadd.f32 0.0, %v2195
  %v2197 = vpop.f32.mrb[0].mxu0
  %2198 = vmatprep.mubr.bf16.mxu0 0
  %2199 = vmatmul.mubr.bf16.gmra.mrb[0].mxu0 %v2145
  %v2200 = vpop.f32.mrb[0].mxu0
  %v2201 = vadd.f32 0.0, %v2200
  %v2202 = vpop.f32.mrb[0].mxu0
  %v2203 = vpop.f32.mrb[0].mxu0
  %v2204 = vadd.f32 0.0, %v2203
  %v2205 = vpop.f32.mrb[0].mxu0
  %2206 = vdwg.mxu0
  %v2207 = vadd.f32 %v2111, %v2185
  %v2208 = vadd.f32 %v2112, %v2188
  %v2209 = vadd.f32 %v2113, %v2193
  %v2210 = vadd.f32 %v2114, %v2196
  %v2211 = vadd.f32 %v2115, %v2201
  %v2212 = vadd.f32 %v2116, %v2204
  %v2213 = vmax.f32 %v2207, 0.0
  %v2214 = vmax.f32 %v2208, 0.0
  %v2215 = vmax.f32 %v2209, 0.0
  %v2216 = vmax.f32 %v2210, 0.0
  %v2217 = vmax.f32 %v2211, 0.0
  %v2218 = vmax.f32 %v2212, 0.0
  %v2219 = vpack.c.bf16 %v2214, %v2213
  %v2220 = vpack.c.bf16 %v2216, %v2215
  %v2221 = vpack.c.bf16 %v2218, %v2217
  %v2223 = vlaneseq
  %v2224 = vshrl.u32 %v2223, 7
  %v2225 = vsub.s32 0, %v2224
  %v2226 = vrot.slane %v1616, %v2225
  %v2232 = vunpack.c.l.b16 %v1612
  %v2233 = vunpack.c.l.b16 %v1613
  %v2234 = vunpack.c.l.b16 %v1614
  %v2235 = vunpack.c.l.b16 %v1615
  %v2236 = vpack.c.b16 %v2233, %v2232
  %v2237 = vpack.c.b16 %v2235, %v2234
  %v2241 = vsel %vm971, %v2219, 0
  %v2244 = vsel %vm971, %v2220, 0
  %v2247 = vsel %vm971, %v2221, 0
  %2249 = vmatprep.subr.bf16.mxu0 0
  %2250 = vmatpush1.bf16.msra.mxu0 %v2236
  %2251 = vmatprep.subr.bf16.mxu0 0
  %2252 = vmatpush1.bf16.msra.mxu0 %v2237
  %2253 = vmatprep.subr.bf16.mxu0 0
  %2254 = vmatpush1.bf16.msra.mxu0 0
  %2255 = vmatprep.subr.bf16.mxu0 0
  %2256 = vmatpush1.bf16.msra.mxu0 0
  %2257 = vmatprep.subr.bf16.mxu0 0
  %2258 = vmatpush1.bf16.msra.mxu0 0
  %2259 = vmatprep.subr.bf16.mxu0 0
  %2260 = vmatpush1.bf16.msra.mxu0 0
  %2261 = vmatprep.subr.bf16.mxu0 0
  %2262 = vmatpush1.bf16.msra.mxu0 0
  %2263 = vmatprep.subr.bf16.mxu0 0
  %2264 = vmatpush1.bf16.msra.mxu0 0
  %2265 = vmatprep.subr.bf16.mxu0 0
  %2266 = vmatpush1.bf16.msra.mxu0 0
  %2267 = vmatprep.subr.bf16.mxu0 0
  %2268 = vmatpush1.bf16.msra.mxu0 0
  %2269 = vmatprep.subr.bf16.mxu0 0
  %2270 = vmatpush1.bf16.msra.mxu0 0
  %2271 = vmatprep.subr.bf16.mxu0 0
  %2272 = vmatpush1.bf16.msra.mxu0 0
  %2273 = vmatprep.subr.bf16.mxu0 0
  %2274 = vmatpush1.bf16.msra.mxu0 0
  %2275 = vmatprep.subr.bf16.mxu0 0
  %2276 = vmatpush1.bf16.msra.mxu0 0
  %2277 = vmatprep.subr.bf16.mxu0 0
  %2278 = vmatpush1.bf16.msra.mxu0 0
  %2279 = vmatprep.subr.bf16.mxu0 0
  %2280 = vmatpush1.bf16.msra.mxu0 0
  %2281 = vmatprep.mubr.bf16.mxu0 0
  %2282 = vmatmul.mubr.bf16.gmra.mrb[0].mxu0 %v2241
  %v2283 = vpop.f32.mrb[0].mxu0
  %v2284 = vadd.f32 %v2226, %v2283
  %v2285 = vpop.f32.mrb[0].mxu0
  %v2286 = vpop.f32.mrb[0].mxu0
  %v2287 = vadd.f32 %v2226, %v2286
  %v2288 = vpop.f32.mrb[0].mxu0
  %2289 = vmatprep.mubr.bf16.mxu0 0
  %2290 = vmatmul.mubr.bf16.gmra.mrb[0].mxu0 %v2244
  %v2291 = vpop.f32.mrb[0].mxu0
  %v2292 = vadd.f32 %v2226, %v2291
  %v2293 = vpop.f32.mrb[0].mxu0
  %v2294 = vpop.f32.mrb[0].mxu0
  %v2295 = vadd.f32 %v2226, %v2294
  %v2296 = vpop.f32.mrb[0].mxu0
  %2297 = vmatprep.mubr.bf16.mxu0 0
  %2298 = vmatmul.mubr.bf16.gmra.mrb[0].mxu0 %v2247
  %v2299 = vpop.f32.mrb[0].mxu0
  %v2300 = vadd.f32 %v2226, %v2299
  %v2301 = vpop.f32.mrb[0].mxu0
  %v2302 = vpop.f32.mrb[0].mxu0
  %v2303 = vadd.f32 %v2226, %v2302
  %v2304 = vpop.f32.mrb[0].mxu0
  %2305 = vdwg.mxu0
  %2306 = vmatprep.subr.mxu0 0.0
  %2307 = vmatpush1.msra.mxu0 %v2284
  %2308 = vmatprep.subr.mxu0 0.0
  %2309 = vmatpush1.msra.mxu0 %v2287
  %2310 = vmatprep.subr.mxu0 0.0
  %2311 = vmatpush1.msra.mxu0 %v2292
  %2312 = vmatprep.subr.mxu0 0.0
  %2313 = vmatpush1.msra.mxu0 %v2295
  %2314 = vmatprep.subr.mxu0 0.0
  %2315 = vmatpush1.msra.mxu0 %v2300
  %2316 = vmatprep.subr.mxu0 0.0
  %2317 = vmatpush1.msra.mxu0 %v2303
  %2318 = vmatprep.subr.mxu0 0.0
  %2319 = vmatpush1.msra.mxu0 0.0
  %2320 = vmatprep.subr.mxu0 0.0
  %2321 = vmatpush1.msra.mxu0 0.0
  %2322 = vmatprep.subr.mxu0 0.0
  %2323 = vmatpush1.msra.mxu0 0.0
  %2324 = vmatprep.subr.mxu0 0.0
  %2325 = vmatpush1.msra.mxu0 0.0
  %2326 = vmatprep.subr.mxu0 0.0
  %2327 = vmatpush1.msra.mxu0 0.0
  %2328 = vmatprep.subr.mxu0 0.0
  %2329 = vmatpush1.msra.mxu0 0.0
  %2330 = vmatprep.subr.mxu0 0.0
  %2331 = vmatpush1.msra.mxu0 0.0
  %2332 = vmatprep.subr.mxu0 0.0
  %2333 = vmatpush1.msra.mxu0 0.0
  %2334 = vmatprep.subr.mxu0 0.0
  %2335 = vmatpush1.msra.mxu0 0.0
  %2336 = vmatprep.subr.mxu0 0.0
  %2337 = vmatpush1.msra.mxu0 0.0
  %2338 = vmatprep.subr.mxu0 0.0
  %2339 = vmatpush1.msra.mxu0 0.0
  %2340 = vmatprep.subr.mxu0 0.0
  %2341 = vmatpush1.msra.mxu0 0.0
  %2342 = vmatprep.subr.mxu0 0.0
  %2343 = vmatpush1.msra.mxu0 0.0
  %2344 = vmatprep.subr.mxu0 0.0
  %2345 = vmatpush1.msra.mxu0 0.0
  %2346 = vmatprep.subr.mxu0 0.0
  %2347 = vmatpush1.msra.mxu0 0.0
  %2348 = vmatprep.subr.mxu0 0.0
  %2349 = vmatpush1.msra.mxu0 0.0
  %2350 = vmatprep.subr.mxu0 0.0
  %2351 = vmatpush1.msra.mxu0 0.0
  %2352 = vmatprep.subr.mxu0 0.0
  %2353 = vmatpush1.msra.mxu0 0.0
  %2354 = vmatprep.subr.mxu0 0.0
  %2355 = vmatpush1.msra.mxu0 0.0
  %2356 = vmatprep.subr.mxu0 0.0
  %2357 = vmatpush1.msra.mxu0 0.0
  %2358 = vmatprep.subr.mxu0 0.0
  %2359 = vmatpush1.msra.mxu0 0.0
  %2360 = vmatprep.subr.mxu0 0.0
  %2361 = vmatpush1.msra.mxu0 0.0
  %2362 = vmatprep.subr.mxu0 0.0
  %2363 = vmatpush1.msra.mxu0 0.0
  %2364 = vmatprep.subr.mxu0 0.0
  %2365 = vmatpush1.msra.mxu0 0.0
  %2366 = vmatprep.subr.mxu0 0.0
  %2367 = vmatpush1.msra.mxu0 0.0
  %2368 = vmatprep.subr.mxu0 0.0
  %2369 = vmatpush1.msra.mxu0 0.0
  %2370 = vmatprep.mubr.f32.mxu0 0.0
  %2371 = vmatmul.mubr.f32.gmra.mrb[0].mxu0 %v1072
  %v2372 = vpop.f32.mrb[0].mxu0
  %v2373 = vadd.f32 0.0, %v2372
  %v2374 = vpop.f32.mrb[0].mxu0
  %2375 = vmatprep.mubr.f32.mxu0 0.0
  %2376 = vmatmul.mubr.f32.gmra.mrb[0].mxu0 %v1075
  %v2377 = vpop.f32.mrb[0].mxu0
  %v2378 = vadd.f32 0.0, %v2377
  %v2379 = vpop.f32.mrb[0].mxu0
  %2380 = vmatprep.mubr.f32.mxu0 0.0
  %2381 = vmatmul.mubr.f32.gmra.mrb[0].mxu0 %v1078
  %v2382 = vpop.f32.mrb[0].mxu0
  %v2383 = vadd.f32 0.0, %v2382
  %v2384 = vpop.f32.mrb[0].mxu0
  %2385 = vdwg.mxu0
  %v2386 = vpack.c.bf16 %v2378, %v2373
  %v2387 = vpack.c.bf16 %v2383, %v2383
  %v2389 = vlaneseq
  %v2390 = vshrl.u32 %v2389, 7
  %v2391 = vsub.s32 0, %v2390
  %v2392 = vrot.slane %v1621, %v2391
  %v2395 = vsel %vm1168, %v2386, 0
  %v2398 = vsel %vm1168, %v2387, 0
  %v2401 = vsel %vm779, %v1620, 0
  %2403 = vmatprep.subr.bf16.mxu0 0
  %2404 = vmatpush1.bf16.msra.mxu0 %v2401
  %2405 = vmatprep.subr.bf16.mxu0 0
  %2406 = vmatpush1.bf16.msra.mxu0 0
  %2407 = vmatprep.subr.bf16.mxu0 0
  %2408 = vmatpush1.bf16.msra.mxu0 0
  %2409 = vmatprep.subr.bf16.mxu0 0
  %2410 = vmatpush1.bf16.msra.mxu0 0
  %2411 = vmatprep.subr.bf16.mxu0 0
  %2412 = vmatpush1.bf16.msra.mxu0 0
  %2413 = vmatprep.subr.bf16.mxu0 0
  %2414 = vmatpush1.bf16.msra.mxu0 0
  %2415 = vmatprep.subr.bf16.mxu0 0
  %2416 = vmatpush1.bf16.msra.mxu0 0
  %2417 = vmatprep.subr.bf16.mxu0 0
  %2418 = vmatpush1.bf16.msra.mxu0 0
  %2419 = vmatprep.subr.bf16.mxu0 0
  %2420 = vmatpush1.bf16.msra.mxu0 0
  %2421 = vmatprep.subr.bf16.mxu0 0
  %2422 = vmatpush1.bf16.msra.mxu0 0
  %2423 = vmatprep.subr.bf16.mxu0 0
  %2424 = vmatpush1.bf16.msra.mxu0 0
  %2425 = vmatprep.subr.bf16.mxu0 0
  %2426 = vmatpush1.bf16.msra.mxu0 0
  %2427 = vmatprep.subr.bf16.mxu0 0
  %2428 = vmatpush1.bf16.msra.mxu0 0
  %2429 = vmatprep.subr.bf16.mxu0 0
  %2430 = vmatpush1.bf16.msra.mxu0 0
  %2431 = vmatprep.subr.bf16.mxu0 0
  %2432 = vmatpush1.bf16.msra.mxu0 0
  %2433 = vmatprep.subr.bf16.mxu0 0
  %2434 = vmatpush1.bf16.msra.mxu0 0
  %2435 = vmatprep.mubr.bf16.mxu0 0
  %2436 = vmatmul.mubr.bf16.gmra.mrb[0].mxu0 %v2395
  %v2437 = vpop.f32.mrb[0].mxu0
  %v2438 = vadd.f32 %v2392, %v2437
  %v2439 = vpop.f32.mrb[0].mxu0
  %v2440 = vpop.f32.mrb[0].mxu0
  %v2441 = vadd.f32 %v2392, %v2440
  %v2442 = vpop.f32.mrb[0].mxu0
  %2443 = vmatprep.mubr.bf16.mxu0 0
  %2444 = vmatmul.mubr.bf16.gmra.mrb[0].mxu0 %v2398
  %v2445 = vpop.f32.mrb[0].mxu0
  %v2446 = vadd.f32 %v2392, %v2445
  %v2447 = vpop.f32.mrb[0].mxu0
  %v2448 = vpop.f32.mrb[0].mxu0
  %v2449 = vpop.f32.mrb[0].mxu0
  %2450 = vdwg.mxu0
  %v2451 = vpack.c.bf16 %v1601, %v1600
  %v2452 = vpack.c.bf16 %v1602, %v1602
  %v2455 = vunpack.c.l.b16 %v1617
  %v2456 = vunpack.c.l.b16 %v1618
  %v2457 = vpack.c.b16 %v2456, %v2455
  %v2460 = vsel %vm1767, %v2451, 0
  %v2463 = vsel %vm1767, %v2452, 0
  %2465 = vmatprep.subr.bf16.mxu0 0
  %2466 = vmatpush1.bf16.msra.mxu0 %v2457
  %2467 = vmatprep.subr.bf16.mxu0 0
  %2468 = vmatpush1.bf16.msra.mxu0 0
  %2469 = vmatprep.subr.bf16.mxu0 0
  %2470 = vmatpush1.bf16.msra.mxu0 0
  %2471 = vmatprep.subr.bf16.mxu0 0
  %2472 = vmatpush1.bf16.msra.mxu0 0
  %2473 = vmatprep.subr.bf16.mxu0 0
  %2474 = vmatpush1.bf16.msra.mxu0 0
  %2475 = vmatprep.subr.bf16.mxu0 0
  %2476 = vmatpush1.bf16.msra.mxu0 0
  %2477 = vmatprep.subr.bf16.mxu0 0
  %2478 = vmatpush1.bf16.msra.mxu0 0
  %2479 = vmatprep.subr.bf16.mxu0 0
  %2480 = vmatpush1.bf16.msra.mxu0 0
  %2481 = vmatprep.subr.bf16.mxu0 0
  %2482 = vmatpush1.bf16.msra.mxu0 0
  %2483 = vmatprep.subr.bf16.mxu0 0
  %2484 = vmatpush1.bf16.msra.mxu0 0
  %2485 = vmatprep.subr.bf16.mxu0 0
  %2486 = vmatpush1.bf16.msra.mxu0 0
  %2487 = vmatprep.subr.bf16.mxu0 0
  %2488 = vmatpush1.bf16.msra.mxu0 0
  %2489 = vmatprep.subr.bf16.mxu0 0
  %2490 = vmatpush1.bf16.msra.mxu0 0
  %2491 = vmatprep.subr.bf16.mxu0 0
  %2492 = vmatpush1.bf16.msra.mxu0 0
  %2493 = vmatprep.subr.bf16.mxu0 0
  %2494 = vmatpush1.bf16.msra.mxu0 0
  %2495 = vmatprep.subr.bf16.mxu0 0
  %2496 = vmatpush1.bf16.msra.mxu0 0
  %2497 = vmatprep.mubr.bf16.mxu0 0
  %2498 = vmatmul.mubr.bf16.gmra.mrb[0].mxu0 %v2460
  %v2499 = vpop.f32.mrb[0].mxu0
  %v2500 = vadd.f32 0.0, %v2499
  %v2501 = vpop.f32.mrb[0].mxu0
  %v2502 = vpop.f32.mrb[0].mxu0
  %v2503 = vadd.f32 0.0, %v2502
  %v2504 = vpop.f32.mrb[0].mxu0
  %2505 = vmatprep.mubr.bf16.mxu0 0
  %2506 = vmatmul.mubr.bf16.gmra.mrb[0].mxu0 %v2463
  %v2507 = vpop.f32.mrb[0].mxu0
  %v2508 = vadd.f32 0.0, %v2507
  %v2509 = vpop.f32.mrb[0].mxu0
  %v2510 = vpop.f32.mrb[0].mxu0
  %v2511 = vpop.f32.mrb[0].mxu0
  %2512 = vdwg.mxu0
  %v2513 = vadd.f32 %v2438, %v2500
  %v2514 = vadd.f32 %v2441, %v2503
  %v2515 = vadd.f32 %v2446, %v2508
  %v2516 = vpack.c.bf16 %v215, %v214
  %v2517 = vpack.c.bf16 %v216, %v216
  %v2519 = vsel %vm2041, %v2516, 0
  %v2522 = vsel %vm2041, %v2517, 0
  %v2525 = vsel %vm689, %v1619, 0
  %2527 = vmatprep.subr.bf16.mxu0 0
  %2528 = vmatpush1.bf16.msra.mxu0 %v2525
  %2529 = vmatprep.subr.bf16.mxu0 0
  %2530 = vmatpush1.bf16.msra.mxu0 0
  %2531 = vmatprep.subr.bf16.mxu0 0
  %2532 = vmatpush1.bf16.msra.mxu0 0
  %2533 = vmatprep.subr.bf16.mxu0 0
  %2534 = vmatpush1.bf16.msra.mxu0 0
  %2535 = vmatprep.subr.bf16.mxu0 0
  %2536 = vmatpush1.bf16.msra.mxu0 0
  %2537 = vmatprep.subr.bf16.mxu0 0
  %2538 = vmatpush1.bf16.msra.mxu0 0
  %2539 = vmatprep.subr.bf16.mxu0 0
  %2540 = vmatpush1.bf16.msra.mxu0 0
  %2541 = vmatprep.subr.bf16.mxu0 0
  %2542 = vmatpush1.bf16.msra.mxu0 0
  %2543 = vmatprep.subr.bf16.mxu0 0
  %2544 = vmatpush1.bf16.msra.mxu0 0
  %2545 = vmatprep.subr.bf16.mxu0 0
  %2546 = vmatpush1.bf16.msra.mxu0 0
  %2547 = vmatprep.subr.bf16.mxu0 0
  %2548 = vmatpush1.bf16.msra.mxu0 0
  %2549 = vmatprep.subr.bf16.mxu0 0
  %2550 = vmatpush1.bf16.msra.mxu0 0
  %2551 = vmatprep.subr.bf16.mxu0 0
  %2552 = vmatpush1.bf16.msra.mxu0 0
  %2553 = vmatprep.subr.bf16.mxu0 0
  %2554 = vmatpush1.bf16.msra.mxu0 0
  %2555 = vmatprep.subr.bf16.mxu0 0
  %2556 = vmatpush1.bf16.msra.mxu0 0
  %2557 = vmatprep.subr.bf16.mxu0 0
  %2558 = vmatpush1.bf16.msra.mxu0 0
  %2559 = vmatprep.mubr.bf16.mxu0 0
  %2560 = vmatmul.mubr.bf16.gmra.mrb[0].mxu0 %v2519
  %v2561 = vpop.f32.mrb[0].mxu0
  %v2562 = vadd.f32 0.0, %v2561
  %v2563 = vpop.f32.mrb[0].mxu0
  %v2564 = vpop.f32.mrb[0].mxu0
  %v2565 = vadd.f32 0.0, %v2564
  %v2566 = vpop.f32.mrb[0].mxu0
  %2567 = vmatprep.mubr.bf16.mxu0 0
  %2568 = vmatmul.mubr.bf16.gmra.mrb[0].mxu0 %v2522
  %v2569 = vpop.f32.mrb[0].mxu0
  %v2570 = vadd.f32 0.0, %v2569
  %v2571 = vpop.f32.mrb[0].mxu0
  %v2572 = vpop.f32.mrb[0].mxu0
  %v2573 = vpop.f32.mrb[0].mxu0
  %2574 = vdwg.mxu0
  %v2575 = vadd.f32 %v2513, %v2562
  %v2576 = vadd.f32 %v2514, %v2565
  %v2577 = vadd.f32 %v2515, %v2570
  %v2578 = vmax.f32 %v2575, 0.0
  %v2579 = vmax.f32 %v2576, 0.0
  %v2580 = vmax.f32 %v2577, 0.0
  %v2581 = vpack.c.bf16 %v2579, %v2578
  %v2582 = vpack.c.bf16 %v2580, %v2580
  %v2584 = vlaneseq
  %v2585 = vshrl.u32 %v2584, 7
  %v2586 = vsub.s32 0, %v2585
  %v2587 = vrot.slane %v1626, %v2586
  %v2593 = vunpack.c.l.b16 %v1622
  %v2594 = vunpack.c.l.b16 %v1623
  %v2595 = vunpack.c.l.b16 %v1624
  %v2596 = vunpack.c.l.b16 %v1625
  %v2597 = vpack.c.b16 %v2594, %v2593
  %v2598 = vpack.c.b16 %v2596, %v2595
  %v2602 = vsel %vm971, %v2581, 0
  %v2605 = vsel %vm971, %v2582, 0
  %2607 = vmatprep.subr.bf16.mxu0 0
  %2608 = vmatpush1.bf16.msra.mxu0 %v2597
  %2609 = vmatprep.subr.bf16.mxu0 0
  %2610 = vmatpush1.bf16.msra.mxu0 %v2598
  %2611 = vmatprep.subr.bf16.mxu0 0
  %2612 = vmatpush1.bf16.msra.mxu0 0
  %2613 = vmatprep.subr.bf16.mxu0 0
  %2614 = vmatpush1.bf16.msra.mxu0 0
  %2615 = vmatprep.subr.bf16.mxu0 0
  %2616 = vmatpush1.bf16.msra.mxu0 0
  %2617 = vmatprep.subr.bf16.mxu0 0
  %2618 = vmatpush1.bf16.msra.mxu0 0
  %2619 = vmatprep.subr.bf16.mxu0 0
  %2620 = vmatpush1.bf16.msra.mxu0 0
  %2621 = vmatprep.subr.bf16.mxu0 0
  %2622 = vmatpush1.bf16.msra.mxu0 0
  %2623 = vmatprep.subr.bf16.mxu0 0
  %2624 = vmatpush1.bf16.msra.mxu0 0
  %2625 = vmatprep.subr.bf16.mxu0 0
  %2626 = vmatpush1.bf16.msra.mxu0 0
  %2627 = vmatprep.subr.bf16.mxu0 0
  %2628 = vmatpush1.bf16.msra.mxu0 0
  %2629 = vmatprep.subr.bf16.mxu0 0
  %2630 = vmatpush1.bf16.msra.mxu0 0
  %2631 = vmatprep.subr.bf16.mxu0 0
  %2632 = vmatpush1.bf16.msra.mxu0 0
  %2633 = vmatprep.subr.bf16.mxu0 0
  %2634 = vmatpush1.bf16.msra.mxu0 0
  %2635 = vmatprep.subr.bf16.mxu0 0
  %2636 = vmatpush1.bf16.msra.mxu0 0
  %2637 = vmatprep.subr.bf16.mxu0 0
  %2638 = vmatpush1.bf16.msra.mxu0 0
  %2639 = vmatprep.mubr.bf16.mxu0 0
  %2640 = vmatmul.mubr.bf16.gmra.mrb[0].mxu0 %v2602
  %v2641 = vpop.f32.mrb[0].mxu0
  %v2642 = vadd.f32 %v2587, %v2641
  %v2643 = vpop.f32.mrb[0].mxu0
  %v2644 = vpop.f32.mrb[0].mxu0
  %v2645 = vadd.f32 %v2587, %v2644
  %v2646 = vpop.f32.mrb[0].mxu0
  %2647 = vmatprep.mubr.bf16.mxu0 0
  %2648 = vmatmul.mubr.bf16.gmra.mrb[0].mxu0 %v2605
  %v2649 = vpop.f32.mrb[0].mxu0
  %v2650 = vadd.f32 %v2587, %v2649
  %v2651 = vpop.f32.mrb[0].mxu0
  %v2652 = vpop.f32.mrb[0].mxu0
  %v2653 = vpop.f32.mrb[0].mxu0
  %2654 = vdwg.mxu0
  %v2655 = vmax.f32 %v2642, 0.0
  %v2656 = vmax.f32 %v2645, 0.0
  %v2657 = vmax.f32 %v2650, 0.0
  %2658 = vmatprep.subr.mxu0 0.0
  %2659 = vmatpush1.msra.mxu0 %v2655
  %2660 = vmatprep.subr.mxu0 0.0
  %2661 = vmatpush1.msra.mxu0 %v2656
  %2662 = vmatprep.subr.mxu0 0.0
  %2663 = vmatpush1.msra.mxu0 %v2657
  %2664 = vmatprep.subr.mxu0 0.0
  %2665 = vmatpush1.msra.mxu0 0.0
  %2666 = vmatprep.subr.mxu0 0.0
  %2667 = vmatpush1.msra.mxu0 0.0
  %2668 = vmatprep.subr.mxu0 0.0
  %2669 = vmatpush1.msra.mxu0 0.0
  %2670 = vmatprep.subr.mxu0 0.0
  %2671 = vmatpush1.msra.mxu0 0.0
  %2672 = vmatprep.subr.mxu0 0.0
  %2673 = vmatpush1.msra.mxu0 0.0
  %2674 = vmatprep.subr.mxu0 0.0
  %2675 = vmatpush1.msra.mxu0 0.0
  %2676 = vmatprep.subr.mxu0 0.0
  %2677 = vmatpush1.msra.mxu0 0.0
  %2678 = vmatprep.subr.mxu0 0.0
  %2679 = vmatpush1.msra.mxu0 0.0
  %2680 = vmatprep.subr.mxu0 0.0
  %2681 = vmatpush1.msra.mxu0 0.0
  %2682 = vmatprep.subr.mxu0 0.0
  %2683 = vmatpush1.msra.mxu0 0.0
  %2684 = vmatprep.subr.mxu0 0.0
  %2685 = vmatpush1.msra.mxu0 0.0
  %2686 = vmatprep.subr.mxu0 0.0
  %2687 = vmatpush1.msra.mxu0 0.0
  %2688 = vmatprep.subr.mxu0 0.0
  %2689 = vmatpush1.msra.mxu0 0.0
  %2690 = vmatprep.subr.mxu0 0.0
  %2691 = vmatpush1.msra.mxu0 0.0
  %2692 = vmatprep.subr.mxu0 0.0
  %2693 = vmatpush1.msra.mxu0 0.0
  %2694 = vmatprep.subr.mxu0 0.0
  %2695 = vmatpush1.msra.mxu0 0.0
  %2696 = vmatprep.subr.mxu0 0.0
  %2697 = vmatpush1.msra.mxu0 0.0
  %2698 = vmatprep.subr.mxu0 0.0
  %2699 = vmatpush1.msra.mxu0 0.0
  %2700 = vmatprep.subr.mxu0 0.0
  %2701 = vmatpush1.msra.mxu0 0.0
  %2702 = vmatprep.subr.mxu0 0.0
  %2703 = vmatpush1.msra.mxu0 0.0
  %2704 = vmatprep.subr.mxu0 0.0
  %2705 = vmatpush1.msra.mxu0 0.0
  %2706 = vmatprep.subr.mxu0 0.0
  %2707 = vmatpush1.msra.mxu0 0.0
  %2708 = vmatprep.subr.mxu0 0.0
  %2709 = vmatpush1.msra.mxu0 0.0
  %2710 = vmatprep.subr.mxu0 0.0
  %2711 = vmatpush1.msra.mxu0 0.0
  %2712 = vmatprep.subr.mxu0 0.0
  %2713 = vmatpush1.msra.mxu0 0.0
  %2714 = vmatprep.subr.mxu0 0.0
  %2715 = vmatpush1.msra.mxu0 0.0
  %2716 = vmatprep.subr.mxu0 0.0
  %2717 = vmatpush1.msra.mxu0 0.0
  %2718 = vmatprep.subr.mxu0 0.0
  %2719 = vmatpush1.msra.mxu0 0.0
  %2720 = vmatprep.subr.mxu0 0.0
  %2721 = vmatpush1.msra.mxu0 0.0
  %2722 = vmatprep.mubr.f32.mxu0 0.0
  %2723 = vmatmul.mubr.f32.gmra.mrb[0].mxu0 %v243
  %v2724 = vpop.f32.mrb[0].mxu0
  %v2725 = vadd.f32 0.0, %v2724
  %v2726 = vpop.f32.mrb[0].mxu0
  %2727 = vmatprep.mubr.f32.mxu0 0.0
  %2728 = vmatmul.mubr.f32.gmra.mrb[0].mxu0 %v246
  %v2729 = vpop.f32.mrb[0].mxu0
  %v2730 = vadd.f32 0.0, %v2729
  %v2731 = vpop.f32.mrb[0].mxu0
  %2732 = vmatprep.mubr.f32.mxu0 0.0
  %2733 = vmatmul.mubr.f32.gmra.mrb[0].mxu0 %v249
  %v2734 = vpop.f32.mrb[0].mxu0
  %v2735 = vadd.f32 0.0, %v2734
  %v2736 = vpop.f32.mrb[0].mxu0
  %2737 = vmatprep.mubr.f32.mxu0 0.0
  %2738 = vmatmul.mubr.f32.gmra.mrb[0].mxu0 %v252
  %v2739 = vpop.f32.mrb[0].mxu0
  %v2740 = vadd.f32 0.0, %v2739
  %v2741 = vpop.f32.mrb[0].mxu0
  %2742 = vmatprep.mubr.f32.mxu0 0.0
  %2743 = vmatmul.mubr.f32.gmra.mrb[0].mxu0 %v255
  %v2744 = vpop.f32.mrb[0].mxu0
  %v2745 = vadd.f32 0.0, %v2744
  %v2746 = vpop.f32.mrb[0].mxu0
  %2747 = vmatprep.mubr.f32.mxu0 0.0
  %2748 = vmatmul.mubr.f32.gmra.mrb[0].mxu0 %v258
  %v2749 = vpop.f32.mrb[0].mxu0
  %v2750 = vadd.f32 0.0, %v2749
  %v2751 = vpop.f32.mrb[0].mxu0
  %2752 = vmatprep.mubr.f32.mxu0 0.0
  %2753 = vmatmul.mubr.f32.gmra.mrb[0].mxu0 %v261
  %v2754 = vpop.f32.mrb[0].mxu0
  %v2755 = vadd.f32 0.0, %v2754
  %v2756 = vpop.f32.mrb[0].mxu0
  %2757 = vmatprep.mubr.f32.mxu0 0.0
  %2758 = vmatmul.mubr.f32.gmra.mrb[0].mxu0 %v264
  %v2759 = vpop.f32.mrb[0].mxu0
  %v2760 = vadd.f32 0.0, %v2759
  %v2761 = vpop.f32.mrb[0].mxu0
  %2762 = vmatprep.mubr.f32.mxu0 0.0
  %2763 = vmatmul.mubr.f32.gmra.mrb[0].mxu0 %v267
  %v2764 = vpop.f32.mrb[0].mxu0
  %v2765 = vadd.f32 0.0, %v2764
  %v2766 = vpop.f32.mrb[0].mxu0
  %2767 = vmatprep.mubr.f32.mxu0 0.0
  %2768 = vmatmul.mubr.f32.gmra.mrb[0].mxu0 %v270
  %v2769 = vpop.f32.mrb[0].mxu0
  %v2770 = vadd.f32 0.0, %v2769
  %v2771 = vpop.f32.mrb[0].mxu0
  %2772 = vmatprep.mubr.f32.mxu0 0.0
  %2773 = vmatmul.mubr.f32.gmra.mrb[0].mxu0 %v273
  %v2774 = vpop.f32.mrb[0].mxu0
  %v2775 = vadd.f32 0.0, %v2774
  %v2776 = vpop.f32.mrb[0].mxu0
  %2777 = vmatprep.mubr.f32.mxu0 0.0
  %2778 = vmatmul.mubr.f32.gmra.mrb[0].mxu0 %v276
  %v2779 = vpop.f32.mrb[0].mxu0
  %v2780 = vadd.f32 0.0, %v2779
  %v2781 = vpop.f32.mrb[0].mxu0
  %2782 = vdwg.mxu0
  %v2783 = vadd.f32 %v2725, %v2755
  %v2784 = vadd.f32 %v2730, %v2760
  %v2785 = vadd.f32 %v2735, %v2765
  %v2786 = vadd.f32 %v2740, %v2770
  %v2787 = vadd.f32 %v2745, %v2775
  %v2788 = vadd.f32 %v2750, %v2780
  %v2789 = vmul.f32 %v2783, 0.5
  %v2790 = vmul.f32 %v2784, 0.5
  %v2791 = vmul.f32 %v2785, 0.5
  %v2792 = vmul.f32 %v2786, 0.5
  %v2793 = vmul.f32 %v2787, 0.5
  %v2794 = vmul.f32 %v2788, 0.5
  %2795 = vmatprep.subr.mxu0 0.0
  %2796 = vmatpush1.msra.mxu0 %v2789
  %2797 = vmatprep.subr.mxu0 0.0
  %2798 = vmatpush1.msra.mxu0 %v2790
  %2799 = vmatprep.subr.mxu0 0.0
  %2800 = vmatpush1.msra.mxu0 %v2791
  %2801 = vmatprep.subr.mxu0 0.0
  %2802 = vmatpush1.msra.mxu0 %v2792
  %2803 = vmatprep.subr.mxu0 0.0
  %2804 = vmatpush1.msra.mxu0 %v2793
  %2805 = vmatprep.subr.mxu0 0.0
  %2806 = vmatpush1.msra.mxu0 %v2794
  %2807 = vmatprep.subr.mxu0 0.0
  %2808 = vmatpush1.msra.mxu0 0.0
  %2809 = vmatprep.subr.mxu0 0.0
  %2810 = vmatpush1.msra.mxu0 0.0
  %2811 = vmatprep.subr.mxu0 0.0
  %2812 = vmatpush1.msra.mxu0 0.0
  %2813 = vmatprep.subr.mxu0 0.0
  %2814 = vmatpush1.msra.mxu0 0.0
  %2815 = vmatprep.subr.mxu0 0.0
  %2816 = vmatpush1.msra.mxu0 0.0
  %2817 = vmatprep.subr.mxu0 0.0
  %2818 = vmatpush1.msra.mxu0 0.0
  %2819 = vmatprep.subr.mxu0 0.0
  %2820 = vmatpush1.msra.mxu0 0.0
  %2821 = vmatprep.subr.mxu0 0.0
  %2822 = vmatpush1.msra.mxu0 0.0
  %2823 = vmatprep.subr.mxu0 0.0
  %2824 = vmatpush1.msra.mxu0 0.0
  %2825 = vmatprep.subr.mxu0 0.0
  %2826 = vmatpush1.msra.mxu0 0.0
  %2827 = vmatprep.subr.mxu0 0.0
  %2828 = vmatpush1.msra.mxu0 0.0
  %2829 = vmatprep.subr.mxu0 0.0
  %2830 = vmatpush1.msra.mxu0 0.0
  %2831 = vmatprep.subr.mxu0 0.0
  %2832 = vmatpush1.msra.mxu0 0.0
  %2833 = vmatprep.subr.mxu0 0.0
  %2834 = vmatpush1.msra.mxu0 0.0
  %2835 = vmatprep.subr.mxu0 0.0
  %2836 = vmatpush1.msra.mxu0 0.0
  %2837 = vmatprep.subr.mxu0 0.0
  %2838 = vmatpush1.msra.mxu0 0.0
  %2839 = vmatprep.subr.mxu0 0.0
  %2840 = vmatpush1.msra.mxu0 0.0
  %2841 = vmatprep.subr.mxu0 0.0
  %2842 = vmatpush1.msra.mxu0 0.0
  %2843 = vmatprep.subr.mxu0 0.0
  %2844 = vmatpush1.msra.mxu0 0.0
  %2845 = vmatprep.subr.mxu0 0.0
  %2846 = vmatpush1.msra.mxu0 0.0
  %2847 = vmatprep.subr.mxu0 0.0
  %2848 = vmatpush1.msra.mxu0 0.0
  %2849 = vmatprep.subr.mxu0 0.0
  %2850 = vmatpush1.msra.mxu0 0.0
  %2851 = vmatprep.subr.mxu0 0.0
  %2852 = vmatpush1.msra.mxu0 0.0
  %2853 = vmatprep.subr.mxu0 0.0
  %2854 = vmatpush1.msra.mxu0 0.0
  %2855 = vmatprep.subr.mxu0 0.0
  %2856 = vmatpush1.msra.mxu0 0.0
  %2857 = vmatprep.subr.mxu0 0.0
  %2858 = vmatpush1.msra.mxu0 0.0
  %2859 = vmatprep.mubr.f32.mxu0 0.0
  %2860 = vmatmul.mubr.f32.gmra.mrb[0].mxu0 %v1072
  %v2861 = vpop.f32.mrb[0].mxu0
  %v2862 = vadd.f32 0.0, %v2861
  %v2863 = vpop.f32.mrb[0].mxu0
  %2864 = vmatprep.mubr.f32.mxu0 0.0
  %2865 = vmatmul.mubr.f32.gmra.mrb[0].mxu0 %v1075
  %v2866 = vpop.f32.mrb[0].mxu0
  %v2867 = vadd.f32 0.0, %v2866
  %v2868 = vpop.f32.mrb[0].mxu0
  %2869 = vmatprep.mubr.f32.mxu0 0.0
  %2870 = vmatmul.mubr.f32.gmra.mrb[0].mxu0 %v1078
  %v2871 = vpop.f32.mrb[0].mxu0
  %v2872 = vadd.f32 0.0, %v2871
  %v2873 = vpop.f32.mrb[0].mxu0
  %2874 = vdwg.mxu0
  %v2875 = vmul.f32 %v2862, %v1588
  %v2876 = vmul.f32 %v2867, %v1593
  %v2877 = vmul.f32 %v2872, %v1598
  %v2878 = vld [vmem:[%s63] sm:$0xf]
  %v2879 = vld [vmem:[%s63 + $0x4] sm:$0xf]
  %v2880 = vld [vmem:[%s65] sm:$0x1]
  %v2881 = vld [vmem:[%s67] sm:$0x3]
  %v2882 = vld [vmem:[%s69] sm:$0xf]
  %v2883 = vld [vmem:[%s69 + $0x4] sm:$0xf]
  %v2884 = vld [vmem:[%s71] sm:$0x1]
  %v2885 = vld [vmem:[%s73] sm:$0x3]
  %v2886 = vld [vmem:[%s75] sm:$0xf]
  %v2887 = vld [vmem:[%s75 + $0x4] sm:$0xf]
  %v2888 = vld [vmem:[%s77] sm:$0x1]
  %v2889 = vld [vmem:[%s79] sm:$0xf]
  %v2890 = vld [vmem:[%s79 + $0x4] sm:$0xf]
  %v2891 = vld [vmem:[%s79 + $0x8] sm:$0xf]
  %v2892 = vld [vmem:[%s79 + $0xc] sm:$0xf]
  %v2893 = vld [vmem:[%s81] sm:$0x1]
  %v2894 = vld [vmem:[%s83] sm:$0xf]
  %v2895 = vld [vmem:[%s83 + $0x4] sm:$0xf]
  %v2896 = vld [vmem:[%s85] sm:$0x1]
  %v2897 = vld [vmem:[%s87] sm:$0x3]
  %v2898 = vld [vmem:[%s89] sm:$0xf]
  %v2899 = vld [vmem:[%s91] sm:$0x1]
  %v2900 = vld [vmem:[%s93] sm:$0xf]
  %v2901 = vld [vmem:[%s93 + $0x4] sm:$0xf]
  %v2902 = vld [vmem:[%s93 + $0x8] sm:$0xf]
  %v2903 = vld [vmem:[%s93 + $0xc] sm:$0xf]
  %v2904 = vld [vmem:[%s95] sm:$0x1]
  %2905 = vmatprep.subr.mxu0 0.0
  %2906 = vmatpush1.msra.mxu0 %v2875
  %2907 = vmatprep.subr.mxu0 0.0
  %2908 = vmatpush1.msra.mxu0 %v2876
  %2909 = vmatprep.subr.mxu0 0.0
  %2910 = vmatpush1.msra.mxu0 %v2877
  %2911 = vmatprep.subr.mxu0 0.0
  %2912 = vmatpush1.msra.mxu0 0.0
  %2913 = vmatprep.subr.mxu0 0.0
  %2914 = vmatpush1.msra.mxu0 0.0
  %2915 = vmatprep.subr.mxu0 0.0
  %2916 = vmatpush1.msra.mxu0 0.0
  %2917 = vmatprep.subr.mxu0 0.0
  %2918 = vmatpush1.msra.mxu0 0.0
  %2919 = vmatprep.subr.mxu0 0.0
  %2920 = vmatpush1.msra.mxu0 0.0
  %2921 = vmatprep.subr.mxu0 0.0
  %2922 = vmatpush1.msra.mxu0 0.0
  %2923 = vmatprep.subr.mxu0 0.0
  %2924 = vmatpush1.msra.mxu0 0.0
  %2925 = vmatprep.subr.mxu0 0.0
  %2926 = vmatpush1.msra.mxu0 0.0
  %2927 = vmatprep.subr.mxu0 0.0
  %2928 = vmatpush1.msra.mxu0 0.0
  %2929 = vmatprep.subr.mxu0 0.0
  %2930 = vmatpush1.msra.mxu0 0.0
  %2931 = vmatprep.subr.mxu0 0.0
  %2932 = vmatpush1.msra.mxu0 0.0
  %2933 = vmatprep.subr.mxu0 0.0
  %2934 = vmatpush1.msra.mxu0 0.0
  %2935 = vmatprep.subr.mxu0 0.0
  %2936 = vmatpush1.msra.mxu0 0.0
  %2937 = vmatprep.subr.mxu0 0.0
  %2938 = vmatpush1.msra.mxu0 0.0
  %2939 = vmatprep.subr.mxu0 0.0
  %2940 = vmatpush1.msra.mxu0 0.0
  %2941 = vmatprep.subr.mxu0 0.0
  %2942 = vmatpush1.msra.mxu0 0.0
  %2943 = vmatprep.subr.mxu0 0.0
  %2944 = vmatpush1.msra.mxu0 0.0
  %2945 = vmatprep.subr.mxu0 0.0
  %2946 = vmatpush1.msra.mxu0 0.0
  %2947 = vmatprep.subr.mxu0 0.0
  %2948 = vmatpush1.msra.mxu0 0.0
  %2949 = vmatprep.subr.mxu0 0.0
  %2950 = vmatpush1.msra.mxu0 0.0
  %2951 = vmatprep.subr.mxu0 0.0
  %2952 = vmatpush1.msra.mxu0 0.0
  %2953 = vmatprep.subr.mxu0 0.0
  %2954 = vmatpush1.msra.mxu0 0.0
  %2955 = vmatprep.subr.mxu0 0.0
  %2956 = vmatpush1.msra.mxu0 0.0
  %2957 = vmatprep.subr.mxu0 0.0
  %2958 = vmatpush1.msra.mxu0 0.0
  %2959 = vmatprep.subr.mxu0 0.0
  %2960 = vmatpush1.msra.mxu0 0.0
  %2961 = vmatprep.subr.mxu0 0.0
  %2962 = vmatpush1.msra.mxu0 0.0
  %2963 = vmatprep.subr.mxu0 0.0
  %2964 = vmatpush1.msra.mxu0 0.0
  %2965 = vmatprep.subr.mxu0 0.0
  %2966 = vmatpush1.msra.mxu0 0.0
  %2967 = vmatprep.subr.mxu0 0.0
  %2968 = vmatpush1.msra.mxu0 0.0
  %2969 = vmatprep.mubr.f32.mxu0 0.0
  %2970 = vmatmul.mubr.f32.gmra.mrb[0].mxu0 %v243
  %v2971 = vpop.f32.mrb[0].mxu0
  %v2972 = vadd.f32 0.0, %v2971
  %v2973 = vpop.f32.mrb[0].mxu0
  %2974 = vmatprep.mubr.f32.mxu0 0.0
  %2975 = vmatmul.mubr.f32.gmra.mrb[0].mxu0 %v246
  %v2976 = vpop.f32.mrb[0].mxu0
  %v2977 = vadd.f32 0.0, %v2976
  %v2978 = vpop.f32.mrb[0].mxu0
  %2979 = vmatprep.mubr.f32.mxu0 0.0
  %2980 = vmatmul.mubr.f32.gmra.mrb[0].mxu0 %v249
  %v2981 = vpop.f32.mrb[0].mxu0
  %v2982 = vadd.f32 0.0, %v2981
  %v2983 = vpop.f32.mrb[0].mxu0
  %2984 = vmatprep.mubr.f32.mxu0 0.0
  %2985 = vmatmul.mubr.f32.gmra.mrb[0].mxu0 %v252
  %v2986 = vpop.f32.mrb[0].mxu0
  %v2987 = vadd.f32 0.0, %v2986
  %v2988 = vpop.f32.mrb[0].mxu0
  %2989 = vmatprep.mubr.f32.mxu0 0.0
  %2990 = vmatmul.mubr.f32.gmra.mrb[0].mxu0 %v255
  %v2991 = vpop.f32.mrb[0].mxu0
  %v2992 = vadd.f32 0.0, %v2991
  %v2993 = vpop.f32.mrb[0].mxu0
  %2994 = vmatprep.mubr.f32.mxu0 0.0
  %2995 = vmatmul.mubr.f32.gmra.mrb[0].mxu0 %v258
  %v2996 = vpop.f32.mrb[0].mxu0
  %v2997 = vadd.f32 0.0, %v2996
  %v2998 = vpop.f32.mrb[0].mxu0
  %2999 = vmatprep.mubr.f32.mxu0 0.0
  %3000 = vmatmul.mubr.f32.gmra.mrb[0].mxu0 %v261
  %v3001 = vpop.f32.mrb[0].mxu0
  %v3002 = vadd.f32 0.0, %v3001
  %v3003 = vpop.f32.mrb[0].mxu0
  %3004 = vmatprep.mubr.f32.mxu0 0.0
  %3005 = vmatmul.mubr.f32.gmra.mrb[0].mxu0 %v264
  %v3006 = vpop.f32.mrb[0].mxu0
  %v3007 = vadd.f32 0.0, %v3006
  %v3008 = vpop.f32.mrb[0].mxu0
  %3009 = vmatprep.mubr.f32.mxu0 0.0
  %3010 = vmatmul.mubr.f32.gmra.mrb[0].mxu0 %v267
  %v3011 = vpop.f32.mrb[0].mxu0
  %v3012 = vadd.f32 0.0, %v3011
  %v3013 = vpop.f32.mrb[0].mxu0
  %3014 = vmatprep.mubr.f32.mxu0 0.0
  %3015 = vmatmul.mubr.f32.gmra.mrb[0].mxu0 %v270
  %v3016 = vpop.f32.mrb[0].mxu0
  %v3017 = vadd.f32 0.0, %v3016
  %v3018 = vpop.f32.mrb[0].mxu0
  %3019 = vmatprep.mubr.f32.mxu0 0.0
  %3020 = vmatmul.mubr.f32.gmra.mrb[0].mxu0 %v273
  %v3021 = vpop.f32.mrb[0].mxu0
  %v3022 = vadd.f32 0.0, %v3021
  %v3023 = vpop.f32.mrb[0].mxu0
  %3024 = vmatprep.mubr.f32.mxu0 0.0
  %3025 = vmatmul.mubr.f32.gmra.mrb[0].mxu0 %v276
  %v3026 = vpop.f32.mrb[0].mxu0
  %v3027 = vadd.f32 0.0, %v3026
  %v3028 = vpop.f32.mrb[0].mxu0
  %3029 = vdwg.mxu0
  %v3030 = vpack.c.bf16 %v2790, %v2789
  %v3031 = vpack.c.bf16 %v2792, %v2791
  %v3032 = vpack.c.bf16 %v2794, %v2793
  %v3034 = vlaneseq
  %v3035 = vshrl.u32 %v3034, 7
  %v3036 = vsub.s32 0, %v3035
  %v3037 = vrot.slane %v2888, %v3036
  %v3041 = vunpack.c.l.b16 %v2886
  %v3042 = vunpack.c.l.b16 %v2887
  %v3043 = vpack.c.b16 %v3042, %v3041
  %v3046 = vsel %vm1767, %v3030, 0
  %v3049 = vsel %vm1767, %v3031, 0
  %v3052 = vsel %vm1767, %v3032, 0
  %3054 = vmatprep.subr.bf16.mxu0 0
  %3055 = vmatpush1.bf16.msra.mxu0 %v3043
  %3056 = vmatprep.subr.bf16.mxu0 0
  %3057 = vmatpush1.bf16.msra.mxu0 0
  %3058 = vmatprep.subr.bf16.mxu0 0
  %3059 = vmatpush1.bf16.msra.mxu0 0
  %3060 = vmatprep.subr.bf16.mxu0 0
  %3061 = vmatpush1.bf16.msra.mxu0 0
  %3062 = vmatprep.subr.bf16.mxu0 0
  %3063 = vmatpush1.bf16.msra.mxu0 0
  %3064 = vmatprep.subr.bf16.mxu0 0
  %3065 = vmatpush1.bf16.msra.mxu0 0
  %3066 = vmatprep.subr.bf16.mxu0 0
  %3067 = vmatpush1.bf16.msra.mxu0 0
  %3068 = vmatprep.subr.bf16.mxu0 0
  %3069 = vmatpush1.bf16.msra.mxu0 0
  %3070 = vmatprep.subr.bf16.mxu0 0
  %3071 = vmatpush1.bf16.msra.mxu0 0
  %3072 = vmatprep.subr.bf16.mxu0 0
  %3073 = vmatpush1.bf16.msra.mxu0 0
  %3074 = vmatprep.subr.bf16.mxu0 0
  %3075 = vmatpush1.bf16.msra.mxu0 0
  %3076 = vmatprep.subr.bf16.mxu0 0
  %3077 = vmatpush1.bf16.msra.mxu0 0
  %3078 = vmatprep.subr.bf16.mxu0 0
  %3079 = vmatpush1.bf16.msra.mxu0 0
  %3080 = vmatprep.subr.bf16.mxu0 0
  %3081 = vmatpush1.bf16.msra.mxu0 0
  %3082 = vmatprep.subr.bf16.mxu0 0
  %3083 = vmatpush1.bf16.msra.mxu0 0
  %3084 = vmatprep.subr.bf16.mxu0 0
  %3085 = vmatpush1.bf16.msra.mxu0 0
  %3086 = vmatprep.mubr.bf16.mxu0 0
  %3087 = vmatmul.mubr.bf16.gmra.mrb[0].mxu0 %v3046
  %v3088 = vpop.f32.mrb[0].mxu0
  %v3089 = vadd.f32 %v3037, %v3088
  %v3090 = vpop.f32.mrb[0].mxu0
  %v3091 = vpop.f32.mrb[0].mxu0
  %v3092 = vadd.f32 %v3037, %v3091
  %v3093 = vpop.f32.mrb[0].mxu0
  %3094 = vmatprep.mubr.bf16.mxu0 0
  %3095 = vmatmul.mubr.bf16.gmra.mrb[0].mxu0 %v3049
  %v3096 = vpop.f32.mrb[0].mxu0
  %v3097 = vadd.f32 %v3037, %v3096
  %v3098 = vpop.f32.mrb[0].mxu0
  %v3099 = vpop.f32.mrb[0].mxu0
  %v3100 = vadd.f32 %v3037, %v3099
  %v3101 = vpop.f32.mrb[0].mxu0
  %3102 = vmatprep.mubr.bf16.mxu0 0
  %3103 = vmatmul.mubr.bf16.gmra.mrb[0].mxu0 %v3052
  %v3104 = vpop.f32.mrb[0].mxu0
  %v3105 = vadd.f32 %v3037, %v3104
  %v3106 = vpop.f32.mrb[0].mxu0
  %v3107 = vpop.f32.mrb[0].mxu0
  %v3108 = vadd.f32 %v3037, %v3107
  %v3109 = vpop.f32.mrb[0].mxu0
  %3110 = vdwg.mxu0
  %v3111 = vadd.f32 %v3002, %v2972
  %v3112 = vadd.f32 %v3007, %v2977
  %v3113 = vadd.f32 %v3012, %v2982
  %v3114 = vadd.f32 %v3017, %v2987
  %v3115 = vadd.f32 %v3022, %v2992
  %v3116 = vadd.f32 %v3027, %v2997
  %v3117 = vmul.f32 %v3111, 0.5
  %v3118 = vmul.f32 %v3112, 0.5
  %v3119 = vmul.f32 %v3113, 0.5
  %v3120 = vmul.f32 %v3114, 0.5
  %v3121 = vmul.f32 %v3115, 0.5
  %v3122 = vmul.f32 %v3116, 0.5
  %v3123 = vpack.c.bf16 %v3118, %v3117
  %v3124 = vpack.c.bf16 %v3120, %v3119
  %v3125 = vpack.c.bf16 %v3122, %v3121
  %v3128 = vunpack.c.l.b16 %v2878
  %v3129 = vunpack.c.l.b16 %v2879
  %v3130 = vpack.c.b16 %v3129, %v3128
  %v3133 = vsel %vm1767, %v3123, 0
  %v3136 = vsel %vm1767, %v3124, 0
  %v3139 = vsel %vm1767, %v3125, 0
  %3141 = vmatprep.subr.bf16.mxu0 0
  %3142 = vmatpush1.bf16.msra.mxu0 %v3130
  %3143 = vmatprep.subr.bf16.mxu0 0
  %3144 = vmatpush1.bf16.msra.mxu0 0
  %3145 = vmatprep.subr.bf16.mxu0 0
  %3146 = vmatpush1.bf16.msra.mxu0 0
  %3147 = vmatprep.subr.bf16.mxu0 0
  %3148 = vmatpush1.bf16.msra.mxu0 0
  %3149 = vmatprep.subr.bf16.mxu0 0
  %3150 = vmatpush1.bf16.msra.mxu0 0
  %3151 = vmatprep.subr.bf16.mxu0 0
  %3152 = vmatpush1.bf16.msra.mxu0 0
  %3153 = vmatprep.subr.bf16.mxu0 0
  %3154 = vmatpush1.bf16.msra.mxu0 0
  %3155 = vmatprep.subr.bf16.mxu0 0
  %3156 = vmatpush1.bf16.msra.mxu0 0
  %3157 = vmatprep.subr.bf16.mxu0 0
  %3158 = vmatpush1.bf16.msra.mxu0 0
  %3159 = vmatprep.subr.bf16.mxu0 0
  %3160 = vmatpush1.bf16.msra.mxu0 0
  %3161 = vmatprep.subr.bf16.mxu0 0
  %3162 = vmatpush1.bf16.msra.mxu0 0
  %3163 = vmatprep.subr.bf16.mxu0 0
  %3164 = vmatpush1.bf16.msra.mxu0 0
  %3165 = vmatprep.subr.bf16.mxu0 0
  %3166 = vmatpush1.bf16.msra.mxu0 0
  %3167 = vmatprep.subr.bf16.mxu0 0
  %3168 = vmatpush1.bf16.msra.mxu0 0
  %3169 = vmatprep.subr.bf16.mxu0 0
  %3170 = vmatpush1.bf16.msra.mxu0 0
  %3171 = vmatprep.subr.bf16.mxu0 0
  %3172 = vmatpush1.bf16.msra.mxu0 0
  %3173 = vmatprep.mubr.bf16.mxu0 0
  %3174 = vmatmul.mubr.bf16.gmra.mrb[0].mxu0 %v3133
  %v3175 = vpop.f32.mrb[0].mxu0
  %v3176 = vadd.f32 0.0, %v3175
  %v3177 = vpop.f32.mrb[0].mxu0
  %v3178 = vpop.f32.mrb[0].mxu0
  %v3179 = vadd.f32 0.0, %v3178
  %v3180 = vpop.f32.mrb[0].mxu0
  %3181 = vmatprep.mubr.bf16.mxu0 0
  %3182 = vmatmul.mubr.bf16.gmra.mrb[0].mxu0 %v3136
  %v3183 = vpop.f32.mrb[0].mxu0
  %v3184 = vadd.f32 0.0, %v3183
  %v3185 = vpop.f32.mrb[0].mxu0
  %v3186 = vpop.f32.mrb[0].mxu0
  %v3187 = vadd.f32 0.0, %v3186
  %v3188 = vpop.f32.mrb[0].mxu0
  %3189 = vmatprep.mubr.bf16.mxu0 0
  %3190 = vmatmul.mubr.bf16.gmra.mrb[0].mxu0 %v3139
  %v3191 = vpop.f32.mrb[0].mxu0
  %v3192 = vadd.f32 0.0, %v3191
  %v3193 = vpop.f32.mrb[0].mxu0
  %v3194 = vpop.f32.mrb[0].mxu0
  %v3195 = vadd.f32 0.0, %v3194
  %v3196 = vpop.f32.mrb[0].mxu0
  %3197 = vdwg.mxu0
  %v3198 = vadd.f32 %v3089, %v3176
  %v3199 = vadd.f32 %v3092, %v3179
  %v3200 = vadd.f32 %v3097, %v3184
  %v3201 = vadd.f32 %v3100, %v3187
  %v3202 = vadd.f32 %v3105, %v3192
  %v3203 = vadd.f32 %v3108, %v3195
  %v3204 = vsub.f32 %v3002, %v2972
  %v3205 = vsub.f32 %v3007, %v2977
  %v3206 = vsub.f32 %v3012, %v2982
  %v3207 = vsub.f32 %v3017, %v2987
  %v3208 = vsub.f32 %v3022, %v2992
  %v3209 = vsub.f32 %v3027, %v2997
  %v3210 = vand.u32 2147483647, %v3204
  %v3211 = vand.u32 2147483647, %v3205
  %v3212 = vand.u32 2147483647, %v3206
  %v3213 = vand.u32 2147483647, %v3207
  %v3214 = vand.u32 2147483647, %v3208
  %v3215 = vand.u32 2147483647, %v3209
  %v3216 = vmul.f32 %v3210, 0.5
  %v3217 = vmul.f32 %v3211, 0.5
  %v3218 = vmul.f32 %v3212, 0.5
  %v3219 = vmul.f32 %v3213, 0.5
  %v3220 = vmul.f32 %v3214, 0.5
  %v3221 = vmul.f32 %v3215, 0.5
  %v3222 = vpack.c.bf16 %v3217, %v3216
  %v3223 = vpack.c.bf16 %v3219, %v3218
  %v3224 = vpack.c.bf16 %v3221, %v3220
  %v3227 = vunpack.c.l.b16 %v2882
  %v3228 = vunpack.c.l.b16 %v2883
  %v3229 = vpack.c.b16 %v3228, %v3227
  %v3232 = vsel %vm1767, %v3222, 0
  %v3235 = vsel %vm1767, %v3223, 0
  %v3238 = vsel %vm1767, %v3224, 0
  %3240 = vmatprep.subr.bf16.mxu0 0
  %3241 = vmatpush1.bf16.msra.mxu0 %v3229
  %3242 = vmatprep.subr.bf16.mxu0 0
  %3243 = vmatpush1.bf16.msra.mxu0 0
  %3244 = vmatprep.subr.bf16.mxu0 0
  %3245 = vmatpush1.bf16.msra.mxu0 0
  %3246 = vmatprep.subr.bf16.mxu0 0
  %3247 = vmatpush1.bf16.msra.mxu0 0
  %3248 = vmatprep.subr.bf16.mxu0 0
  %3249 = vmatpush1.bf16.msra.mxu0 0
  %3250 = vmatprep.subr.bf16.mxu0 0
  %3251 = vmatpush1.bf16.msra.mxu0 0
  %3252 = vmatprep.subr.bf16.mxu0 0
  %3253 = vmatpush1.bf16.msra.mxu0 0
  %3254 = vmatprep.subr.bf16.mxu0 0
  %3255 = vmatpush1.bf16.msra.mxu0 0
  %3256 = vmatprep.subr.bf16.mxu0 0
  %3257 = vmatpush1.bf16.msra.mxu0 0
  %3258 = vmatprep.subr.bf16.mxu0 0
  %3259 = vmatpush1.bf16.msra.mxu0 0
  %3260 = vmatprep.subr.bf16.mxu0 0
  %3261 = vmatpush1.bf16.msra.mxu0 0
  %3262 = vmatprep.subr.bf16.mxu0 0
  %3263 = vmatpush1.bf16.msra.mxu0 0
  %3264 = vmatprep.subr.bf16.mxu0 0
  %3265 = vmatpush1.bf16.msra.mxu0 0
  %3266 = vmatprep.subr.bf16.mxu0 0
  %3267 = vmatpush1.bf16.msra.mxu0 0
  %3268 = vmatprep.subr.bf16.mxu0 0
  %3269 = vmatpush1.bf16.msra.mxu0 0
  %3270 = vmatprep.subr.bf16.mxu0 0
  %3271 = vmatpush1.bf16.msra.mxu0 0
  %3272 = vmatprep.mubr.bf16.mxu0 0
  %3273 = vmatmul.mubr.bf16.gmra.mrb[0].mxu0 %v3232
  %v3274 = vpop.f32.mrb[0].mxu0
  %v3275 = vadd.f32 0.0, %v3274
  %v3276 = vpop.f32.mrb[0].mxu0
  %v3277 = vpop.f32.mrb[0].mxu0
  %v3278 = vadd.f32 0.0, %v3277
  %v3279 = vpop.f32.mrb[0].mxu0
  %3280 = vmatprep.mubr.bf16.mxu0 0
  %3281 = vmatmul.mubr.bf16.gmra.mrb[0].mxu0 %v3235
  %v3282 = vpop.f32.mrb[0].mxu0
  %v3283 = vadd.f32 0.0, %v3282
  %v3284 = vpop.f32.mrb[0].mxu0
  %v3285 = vpop.f32.mrb[0].mxu0
  %v3286 = vadd.f32 0.0, %v3285
  %v3287 = vpop.f32.mrb[0].mxu0
  %3288 = vmatprep.mubr.bf16.mxu0 0
  %3289 = vmatmul.mubr.bf16.gmra.mrb[0].mxu0 %v3238
  %v3290 = vpop.f32.mrb[0].mxu0
  %v3291 = vadd.f32 0.0, %v3290
  %v3292 = vpop.f32.mrb[0].mxu0
  %v3293 = vpop.f32.mrb[0].mxu0
  %v3294 = vadd.f32 0.0, %v3293
  %v3295 = vpop.f32.mrb[0].mxu0
  %3296 = vdwg.mxu0
  %v3297 = vadd.f32 %v3198, %v3275
  %v3298 = vadd.f32 %v3199, %v3278
  %v3299 = vadd.f32 %v3200, %v3283
  %v3300 = vadd.f32 %v3201, %v3286
  %v3301 = vadd.f32 %v3202, %v3291
  %v3302 = vadd.f32 %v3203, %v3294
  %v3304 = vsel %vm689, %v2880, 0
  %3306 = vmatprep.subr.bf16.mxu0 0
  %3307 = vmatpush1.bf16.msra.mxu0 %v3304
  %3308 = vmatprep.subr.bf16.mxu0 0
  %3309 = vmatpush1.bf16.msra.mxu0 0
  %3310 = vmatprep.subr.bf16.mxu0 0
  %3311 = vmatpush1.bf16.msra.mxu0 0
  %3312 = vmatprep.subr.bf16.mxu0 0
  %3313 = vmatpush1.bf16.msra.mxu0 0
  %3314 = vmatprep.subr.bf16.mxu0 0
  %3315 = vmatpush1.bf16.msra.mxu0 0
  %3316 = vmatprep.subr.bf16.mxu0 0
  %3317 = vmatpush1.bf16.msra.mxu0 0
  %3318 = vmatprep.subr.bf16.mxu0 0
  %3319 = vmatpush1.bf16.msra.mxu0 0
  %3320 = vmatprep.subr.bf16.mxu0 0
  %3321 = vmatpush1.bf16.msra.mxu0 0
  %3322 = vmatprep.subr.bf16.mxu0 0
  %3323 = vmatpush1.bf16.msra.mxu0 0
  %3324 = vmatprep.subr.bf16.mxu0 0
  %3325 = vmatpush1.bf16.msra.mxu0 0
  %3326 = vmatprep.subr.bf16.mxu0 0
  %3327 = vmatpush1.bf16.msra.mxu0 0
  %3328 = vmatprep.subr.bf16.mxu0 0
  %3329 = vmatpush1.bf16.msra.mxu0 0
  %3330 = vmatprep.subr.bf16.mxu0 0
  %3331 = vmatpush1.bf16.msra.mxu0 0
  %3332 = vmatprep.subr.bf16.mxu0 0
  %3333 = vmatpush1.bf16.msra.mxu0 0
  %3334 = vmatprep.subr.bf16.mxu0 0
  %3335 = vmatpush1.bf16.msra.mxu0 0
  %3336 = vmatprep.subr.bf16.mxu0 0
  %3337 = vmatpush1.bf16.msra.mxu0 0
  %3338 = vmatprep.mubr.bf16.mxu0 0
  %3339 = vmatmul.mubr.bf16.gmra.mrb[0].mxu0 %v2043
  %v3340 = vpop.f32.mrb[0].mxu0
  %v3341 = vadd.f32 0.0, %v3340
  %v3342 = vpop.f32.mrb[0].mxu0
  %v3343 = vpop.f32.mrb[0].mxu0
  %v3344 = vadd.f32 0.0, %v3343
  %v3345 = vpop.f32.mrb[0].mxu0
  %3346 = vmatprep.mubr.bf16.mxu0 0
  %3347 = vmatmul.mubr.bf16.gmra.mrb[0].mxu0 %v2046
  %v3348 = vpop.f32.mrb[0].mxu0
  %v3349 = vadd.f32 0.0, %v3348
  %v3350 = vpop.f32.mrb[0].mxu0
  %v3351 = vpop.f32.mrb[0].mxu0
  %v3352 = vadd.f32 0.0, %v3351
  %v3353 = vpop.f32.mrb[0].mxu0
  %3354 = vmatprep.mubr.bf16.mxu0 0
  %3355 = vmatmul.mubr.bf16.gmra.mrb[0].mxu0 %v2049
  %v3356 = vpop.f32.mrb[0].mxu0
  %v3357 = vadd.f32 0.0, %v3356
  %v3358 = vpop.f32.mrb[0].mxu0
  %v3359 = vpop.f32.mrb[0].mxu0
  %v3360 = vadd.f32 0.0, %v3359
  %v3361 = vpop.f32.mrb[0].mxu0
  %3362 = vdwg.mxu0
  %v3363 = vadd.f32 %v3297, %v3341
  %v3364 = vadd.f32 %v3298, %v3344
  %v3365 = vadd.f32 %v3299, %v3349
  %v3366 = vadd.f32 %v3300, %v3352
  %v3367 = vadd.f32 %v3301, %v3357
  %v3368 = vadd.f32 %v3302, %v3360
  %v3370 = vsel %vm689, %v2884, 0
  %3372 = vmatprep.subr.bf16.mxu0 0
  %3373 = vmatpush1.bf16.msra.mxu0 %v3370
  %3374 = vmatprep.subr.bf16.mxu0 0
  %3375 = vmatpush1.bf16.msra.mxu0 0
  %3376 = vmatprep.subr.bf16.mxu0 0
  %3377 = vmatpush1.bf16.msra.mxu0 0
  %3378 = vmatprep.subr.bf16.mxu0 0
  %3379 = vmatpush1.bf16.msra.mxu0 0
  %3380 = vmatprep.subr.bf16.mxu0 0
  %3381 = vmatpush1.bf16.msra.mxu0 0
  %3382 = vmatprep.subr.bf16.mxu0 0
  %3383 = vmatpush1.bf16.msra.mxu0 0
  %3384 = vmatprep.subr.bf16.mxu0 0
  %3385 = vmatpush1.bf16.msra.mxu0 0
  %3386 = vmatprep.subr.bf16.mxu0 0
  %3387 = vmatpush1.bf16.msra.mxu0 0
  %3388 = vmatprep.subr.bf16.mxu0 0
  %3389 = vmatpush1.bf16.msra.mxu0 0
  %3390 = vmatprep.subr.bf16.mxu0 0
  %3391 = vmatpush1.bf16.msra.mxu0 0
  %3392 = vmatprep.subr.bf16.mxu0 0
  %3393 = vmatpush1.bf16.msra.mxu0 0
  %3394 = vmatprep.subr.bf16.mxu0 0
  %3395 = vmatpush1.bf16.msra.mxu0 0
  %3396 = vmatprep.subr.bf16.mxu0 0
  %3397 = vmatpush1.bf16.msra.mxu0 0
  %3398 = vmatprep.subr.bf16.mxu0 0
  %3399 = vmatpush1.bf16.msra.mxu0 0
  %3400 = vmatprep.subr.bf16.mxu0 0
  %3401 = vmatpush1.bf16.msra.mxu0 0
  %3402 = vmatprep.subr.bf16.mxu0 0
  %3403 = vmatpush1.bf16.msra.mxu0 0
  %3404 = vmatprep.mubr.bf16.mxu0 0
  %3405 = vmatmul.mubr.bf16.gmra.mrb[0].mxu0 %v2139
  %v3406 = vpop.f32.mrb[0].mxu0
  %v3407 = vadd.f32 0.0, %v3406
  %v3408 = vpop.f32.mrb[0].mxu0
  %v3409 = vpop.f32.mrb[0].mxu0
  %v3410 = vadd.f32 0.0, %v3409
  %v3411 = vpop.f32.mrb[0].mxu0
  %3412 = vmatprep.mubr.bf16.mxu0 0
  %3413 = vmatmul.mubr.bf16.gmra.mrb[0].mxu0 %v2142
  %v3414 = vpop.f32.mrb[0].mxu0
  %v3415 = vadd.f32 0.0, %v3414
  %v3416 = vpop.f32.mrb[0].mxu0
  %v3417 = vpop.f32.mrb[0].mxu0
  %v3418 = vadd.f32 0.0, %v3417
  %v3419 = vpop.f32.mrb[0].mxu0
  %3420 = vmatprep.mubr.bf16.mxu0 0
  %3421 = vmatmul.mubr.bf16.gmra.mrb[0].mxu0 %v2145
  %v3422 = vpop.f32.mrb[0].mxu0
  %v3423 = vadd.f32 0.0, %v3422
  %v3424 = vpop.f32.mrb[0].mxu0
  %v3425 = vpop.f32.mrb[0].mxu0
  %v3426 = vadd.f32 0.0, %v3425
  %v3427 = vpop.f32.mrb[0].mxu0
  %3428 = vdwg.mxu0
  %v3429 = vadd.f32 %v3363, %v3407
  %v3430 = vadd.f32 %v3364, %v3410
  %v3431 = vadd.f32 %v3365, %v3415
  %v3432 = vadd.f32 %v3366, %v3418
  %v3433 = vadd.f32 %v3367, %v3423
  %v3434 = vadd.f32 %v3368, %v3426
  %v3435 = vadd.f32 %v500, %v470
  %v3436 = vadd.f32 %v505, %v475
  %v3437 = vadd.f32 %v510, %v480
  %v3438 = vadd.f32 %v515, %v485
  %v3439 = vadd.f32 %v520, %v490
  %v3440 = vadd.f32 %v525, %v495
  %v3441 = vmul.f32 %v3435, 0.5
  %v3442 = vmul.f32 %v3436, 0.5
  %v3443 = vmul.f32 %v3437, 0.5
  %v3444 = vmul.f32 %v3438, 0.5
  %v3445 = vmul.f32 %v3439, 0.5
  %v3446 = vmul.f32 %v3440, 0.5
  %v3447 = vpack.c.bf16 %v3442, %v3441
  %v3448 = vpack.c.bf16 %v3444, %v3443
  %v3449 = vpack.c.bf16 %v3446, %v3445
  %vm3450 = vcmask 31744
  %v3452 = vsel %vm3450, %v3447, 0
  %v3455 = vsel %vm3450, %v3448, 0
  %v3458 = vsel %vm3450, %v3449, 0
  %v3461 = vsel %vm690, %v2881, 0
  %3463 = vmatprep.subr.bf16.mxu0 0
  %3464 = vmatpush1.bf16.msra.mxu0 %v3461
  %3465 = vmatprep.subr.bf16.mxu0 0
  %3466 = vmatpush1.bf16.msra.mxu0 0
  %3467 = vmatprep.subr.bf16.mxu0 0
  %3468 = vmatpush1.bf16.msra.mxu0 0
  %3469 = vmatprep.subr.bf16.mxu0 0
  %3470 = vmatpush1.bf16.msra.mxu0 0
  %3471 = vmatprep.subr.bf16.mxu0 0
  %3472 = vmatpush1.bf16.msra.mxu0 0
  %3473 = vmatprep.subr.bf16.mxu0 0
  %3474 = vmatpush1.bf16.msra.mxu0 0
  %3475 = vmatprep.subr.bf16.mxu0 0
  %3476 = vmatpush1.bf16.msra.mxu0 0
  %3477 = vmatprep.subr.bf16.mxu0 0
  %3478 = vmatpush1.bf16.msra.mxu0 0
  %3479 = vmatprep.subr.bf16.mxu0 0
  %3480 = vmatpush1.bf16.msra.mxu0 0
  %3481 = vmatprep.subr.bf16.mxu0 0
  %3482 = vmatpush1.bf16.msra.mxu0 0
  %3483 = vmatprep.subr.bf16.mxu0 0
  %3484 = vmatpush1.bf16.msra.mxu0 0
  %3485 = vmatprep.subr.bf16.mxu0 0
  %3486 = vmatpush1.bf16.msra.mxu0 0
  %3487 = vmatprep.subr.bf16.mxu0 0
  %3488 = vmatpush1.bf16.msra.mxu0 0
  %3489 = vmatprep.subr.bf16.mxu0 0
  %3490 = vmatpush1.bf16.msra.mxu0 0
  %3491 = vmatprep.subr.bf16.mxu0 0
  %3492 = vmatpush1.bf16.msra.mxu0 0
  %3493 = vmatprep.subr.bf16.mxu0 0
  %3494 = vmatpush1.bf16.msra.mxu0 0
  %3495 = vmatprep.mubr.bf16.mxu0 0
  %3496 = vmatmul.mubr.bf16.gmra.mrb[0].mxu0 %v3452
  %v3497 = vpop.f32.mrb[0].mxu0
  %v3498 = vadd.f32 0.0, %v3497
  %v3499 = vpop.f32.mrb[0].mxu0
  %v3500 = vpop.f32.mrb[0].mxu0
  %v3501 = vadd.f32 0.0, %v3500
  %v3502 = vpop.f32.mrb[0].mxu0
  %3503 = vmatprep.mubr.bf16.mxu0 0
  %3504 = vmatmul.mubr.bf16.gmra.mrb[0].mxu0 %v3455
  %v3505 = vpop.f32.mrb[0].mxu0
  %v3506 = vadd.f32 0.0, %v3505
  %v3507 = vpop.f32.mrb[0].mxu0
  %v3508 = vpop.f32.mrb[0].mxu0
  %v3509 = vadd.f32 0.0, %v3508
  %v3510 = vpop.f32.mrb[0].mxu0
  %3511 = vmatprep.mubr.bf16.mxu0 0
  %3512 = vmatmul.mubr.bf16.gmra.mrb[0].mxu0 %v3458
  %v3513 = vpop.f32.mrb[0].mxu0
  %v3514 = vadd.f32 0.0, %v3513
  %v3515 = vpop.f32.mrb[0].mxu0
  %v3516 = vpop.f32.mrb[0].mxu0
  %v3517 = vadd.f32 0.0, %v3516
  %v3518 = vpop.f32.mrb[0].mxu0
  %3519 = vdwg.mxu0
  %v3520 = vadd.f32 %v3429, %v3498
  %v3521 = vadd.f32 %v3430, %v3501
  %v3522 = vadd.f32 %v3431, %v3506
  %v3523 = vadd.f32 %v3432, %v3509
  %v3524 = vadd.f32 %v3433, %v3514
  %v3525 = vadd.f32 %v3434, %v3517
  %v3526 = vsub.f32 %v500, %v470
  %v3527 = vsub.f32 %v505, %v475
  %v3528 = vsub.f32 %v510, %v480
  %v3529 = vsub.f32 %v515, %v485
  %v3530 = vsub.f32 %v520, %v490
  %v3531 = vsub.f32 %v525, %v495
  %v3532 = vand.u32 2147483647, %v3526
  %v3533 = vand.u32 2147483647, %v3527
  %v3534 = vand.u32 2147483647, %v3528
  %v3535 = vand.u32 2147483647, %v3529
  %v3536 = vand.u32 2147483647, %v3530
  %v3537 = vand.u32 2147483647, %v3531
  %v3538 = vmul.f32 %v3532, 0.5
  %v3539 = vmul.f32 %v3533, 0.5
  %v3540 = vmul.f32 %v3534, 0.5
  %v3541 = vmul.f32 %v3535, 0.5
  %v3542 = vmul.f32 %v3536, 0.5
  %v3543 = vmul.f32 %v3537, 0.5
  %v3544 = vpack.c.bf16 %v3539, %v3538
  %v3545 = vpack.c.bf16 %v3541, %v3540
  %v3546 = vpack.c.bf16 %v3543, %v3542
  %v3548 = vsel %vm3450, %v3544, 0
  %v3551 = vsel %vm3450, %v3545, 0
  %v3554 = vsel %vm3450, %v3546, 0
  %v3557 = vsel %vm690, %v2885, 0
  %3559 = vmatprep.subr.bf16.mxu0 0
  %3560 = vmatpush1.bf16.msra.mxu0 %v3557
  %3561 = vmatprep.subr.bf16.mxu0 0
  %3562 = vmatpush1.bf16.msra.mxu0 0
  %3563 = vmatprep.subr.bf16.mxu0 0
  %3564 = vmatpush1.bf16.msra.mxu0 0
  %3565 = vmatprep.subr.bf16.mxu0 0
  %3566 = vmatpush1.bf16.msra.mxu0 0
  %3567 = vmatprep.subr.bf16.mxu0 0
  %3568 = vmatpush1.bf16.msra.mxu0 0
  %3569 = vmatprep.subr.bf16.mxu0 0
  %3570 = vmatpush1.bf16.msra.mxu0 0
  %3571 = vmatprep.subr.bf16.mxu0 0
  %3572 = vmatpush1.bf16.msra.mxu0 0
  %3573 = vmatprep.subr.bf16.mxu0 0
  %3574 = vmatpush1.bf16.msra.mxu0 0
  %3575 = vmatprep.subr.bf16.mxu0 0
  %3576 = vmatpush1.bf16.msra.mxu0 0
  %3577 = vmatprep.subr.bf16.mxu0 0
  %3578 = vmatpush1.bf16.msra.mxu0 0
  %3579 = vmatprep.subr.bf16.mxu0 0
  %3580 = vmatpush1.bf16.msra.mxu0 0
  %3581 = vmatprep.subr.bf16.mxu0 0
  %3582 = vmatpush1.bf16.msra.mxu0 0
  %3583 = vmatprep.subr.bf16.mxu0 0
  %3584 = vmatpush1.bf16.msra.mxu0 0
  %3585 = vmatprep.subr.bf16.mxu0 0
  %3586 = vmatpush1.bf16.msra.mxu0 0
  %3587 = vmatprep.subr.bf16.mxu0 0
  %3588 = vmatpush1.bf16.msra.mxu0 0
  %3589 = vmatprep.subr.bf16.mxu0 0
  %3590 = vmatpush1.bf16.msra.mxu0 0
  %3591 = vmatprep.mubr.bf16.mxu0 0
  %3592 = vmatmul.mubr.bf16.gmra.mrb[0].mxu0 %v3548
  %v3593 = vpop.f32.mrb[0].mxu0
  %v3594 = vadd.f32 0.0, %v3593
  %v3595 = vpop.f32.mrb[0].mxu0
  %v3596 = vpop.f32.mrb[0].mxu0
  %v3597 = vadd.f32 0.0, %v3596
  %v3598 = vpop.f32.mrb[0].mxu0
  %3599 = vmatprep.mubr.bf16.mxu0 0
  %3600 = vmatmul.mubr.bf16.gmra.mrb[0].mxu0 %v3551
  %v3601 = vpop.f32.mrb[0].mxu0
  %v3602 = vadd.f32 0.0, %v3601
  %v3603 = vpop.f32.mrb[0].mxu0
  %v3604 = vpop.f32.mrb[0].mxu0
  %v3605 = vadd.f32 0.0, %v3604
  %v3606 = vpop.f32.mrb[0].mxu0
  %3607 = vmatprep.mubr.bf16.mxu0 0
  %3608 = vmatmul.mubr.bf16.gmra.mrb[0].mxu0 %v3554
  %v3609 = vpop.f32.mrb[0].mxu0
  %v3610 = vadd.f32 0.0, %v3609
  %v3611 = vpop.f32.mrb[0].mxu0
  %v3612 = vpop.f32.mrb[0].mxu0
  %v3613 = vadd.f32 0.0, %v3612
  %v3614 = vpop.f32.mrb[0].mxu0
  %3615 = vdwg.mxu0
  %v3616 = vadd.f32 %v3520, %v3594
  %v3617 = vadd.f32 %v3521, %v3597
  %v3618 = vadd.f32 %v3522, %v3602
  %v3619 = vadd.f32 %v3523, %v3605
  %v3620 = vadd.f32 %v3524, %v3610
  %v3621 = vadd.f32 %v3525, %v3613
  %v3622 = vmax.f32 %v3616, 0.0
  %v3623 = vmax.f32 %v3617, 0.0
  %v3624 = vmax.f32 %v3618, 0.0
  %v3625 = vmax.f32 %v3619, 0.0
  %v3626 = vmax.f32 %v3620, 0.0
  %v3627 = vmax.f32 %v3621, 0.0
  %v3628 = vpack.c.bf16 %v3623, %v3622
  %v3629 = vpack.c.bf16 %v3625, %v3624
  %v3630 = vpack.c.bf16 %v3627, %v3626
  %v3632 = vlaneseq
  %v3633 = vshrl.u32 %v3632, 7
  %v3634 = vsub.s32 0, %v3633
  %v3635 = vrot.slane %v2893, %v3634
  %v3641 = vunpack.c.l.b16 %v2889
  %v3642 = vunpack.c.l.b16 %v2890
  %v3643 = vunpack.c.l.b16 %v2891
  %v3644 = vunpack.c.l.b16 %v2892
  %v3645 = vpack.c.b16 %v3642, %v3641
  %v3646 = vpack.c.b16 %v3644, %v3643
  %v3650 = vsel %vm971, %v3628, 0
  %v3653 = vsel %vm971, %v3629, 0
  %v3656 = vsel %vm971, %v3630, 0
  %3658 = vmatprep.subr.bf16.mxu0 0
  %3659 = vmatpush1.bf16.msra.mxu0 %v3645
  %3660 = vmatprep.subr.bf16.mxu0 0
  %3661 = vmatpush1.bf16.msra.mxu0 %v3646
  %3662 = vmatprep.subr.bf16.mxu0 0
  %3663 = vmatpush1.bf16.msra.mxu0 0
  %3664 = vmatprep.subr.bf16.mxu0 0
  %3665 = vmatpush1.bf16.msra.mxu0 0
  %3666 = vmatprep.subr.bf16.mxu0 0
  %3667 = vmatpush1.bf16.msra.mxu0 0
  %3668 = vmatprep.subr.bf16.mxu0 0
  %3669 = vmatpush1.bf16.msra.mxu0 0
  %3670 = vmatprep.subr.bf16.mxu0 0
  %3671 = vmatpush1.bf16.msra.mxu0 0
  %3672 = vmatprep.subr.bf16.mxu0 0
  %3673 = vmatpush1.bf16.msra.mxu0 0
  %3674 = vmatprep.subr.bf16.mxu0 0
  %3675 = vmatpush1.bf16.msra.mxu0 0
  %3676 = vmatprep.subr.bf16.mxu0 0
  %3677 = vmatpush1.bf16.msra.mxu0 0
  %3678 = vmatprep.subr.bf16.mxu0 0
  %3679 = vmatpush1.bf16.msra.mxu0 0
  %3680 = vmatprep.subr.bf16.mxu0 0
  %3681 = vmatpush1.bf16.msra.mxu0 0
  %3682 = vmatprep.subr.bf16.mxu0 0
  %3683 = vmatpush1.bf16.msra.mxu0 0
  %3684 = vmatprep.subr.bf16.mxu0 0
  %3685 = vmatpush1.bf16.msra.mxu0 0
  %3686 = vmatprep.subr.bf16.mxu0 0
  %3687 = vmatpush1.bf16.msra.mxu0 0
  %3688 = vmatprep.subr.bf16.mxu0 0
  %3689 = vmatpush1.bf16.msra.mxu0 0
  %3690 = vmatprep.mubr.bf16.mxu0 0
  %3691 = vmatmul.mubr.bf16.gmra.mrb[0].mxu0 %v3650
  %v3692 = vpop.f32.mrb[0].mxu0
  %v3693 = vadd.f32 %v3635, %v3692
  %v3694 = vpop.f32.mrb[0].mxu0
  %v3695 = vpop.f32.mrb[0].mxu0
  %v3696 = vadd.f32 %v3635, %v3695
  %v3697 = vpop.f32.mrb[0].mxu0
  %3698 = vmatprep.mubr.bf16.mxu0 0
  %3699 = vmatmul.mubr.bf16.gmra.mrb[0].mxu0 %v3653
  %v3700 = vpop.f32.mrb[0].mxu0
  %v3701 = vadd.f32 %v3635, %v3700
  %v3702 = vpop.f32.mrb[0].mxu0
  %v3703 = vpop.f32.mrb[0].mxu0
  %v3704 = vadd.f32 %v3635, %v3703
  %v3705 = vpop.f32.mrb[0].mxu0
  %3706 = vmatprep.mubr.bf16.mxu0 0
  %3707 = vmatmul.mubr.bf16.gmra.mrb[0].mxu0 %v3656
  %v3708 = vpop.f32.mrb[0].mxu0
  %v3709 = vadd.f32 %v3635, %v3708
  %v3710 = vpop.f32.mrb[0].mxu0
  %v3711 = vpop.f32.mrb[0].mxu0
  %v3712 = vadd.f32 %v3635, %v3711
  %v3713 = vpop.f32.mrb[0].mxu0
  %3714 = vdwg.mxu0
  %3715 = vmatprep.subr.mxu0 0.0
  %3716 = vmatpush1.msra.mxu0 %v3693
  %3717 = vmatprep.subr.mxu0 0.0
  %3718 = vmatpush1.msra.mxu0 %v3696
  %3719 = vmatprep.subr.mxu0 0.0
  %3720 = vmatpush1.msra.mxu0 %v3701
  %3721 = vmatprep.subr.mxu0 0.0
  %3722 = vmatpush1.msra.mxu0 %v3704
  %3723 = vmatprep.subr.mxu0 0.0
  %3724 = vmatpush1.msra.mxu0 %v3709
  %3725 = vmatprep.subr.mxu0 0.0
  %3726 = vmatpush1.msra.mxu0 %v3712
  %3727 = vmatprep.subr.mxu0 0.0
  %3728 = vmatpush1.msra.mxu0 0.0
  %3729 = vmatprep.subr.mxu0 0.0
  %3730 = vmatpush1.msra.mxu0 0.0
  %3731 = vmatprep.subr.mxu0 0.0
  %3732 = vmatpush1.msra.mxu0 0.0
  %3733 = vmatprep.subr.mxu0 0.0
  %3734 = vmatpush1.msra.mxu0 0.0
  %3735 = vmatprep.subr.mxu0 0.0
  %3736 = vmatpush1.msra.mxu0 0.0
  %3737 = vmatprep.subr.mxu0 0.0
  %3738 = vmatpush1.msra.mxu0 0.0
  %3739 = vmatprep.subr.mxu0 0.0
  %3740 = vmatpush1.msra.mxu0 0.0
  %3741 = vmatprep.subr.mxu0 0.0
  %3742 = vmatpush1.msra.mxu0 0.0
  %3743 = vmatprep.subr.mxu0 0.0
  %3744 = vmatpush1.msra.mxu0 0.0
  %3745 = vmatprep.subr.mxu0 0.0
  %3746 = vmatpush1.msra.mxu0 0.0
  %3747 = vmatprep.subr.mxu0 0.0
  %3748 = vmatpush1.msra.mxu0 0.0
  %3749 = vmatprep.subr.mxu0 0.0
  %3750 = vmatpush1.msra.mxu0 0.0
  %3751 = vmatprep.subr.mxu0 0.0
  %3752 = vmatpush1.msra.mxu0 0.0
  %3753 = vmatprep.subr.mxu0 0.0
  %3754 = vmatpush1.msra.mxu0 0.0
  %3755 = vmatprep.subr.mxu0 0.0
  %3756 = vmatpush1.msra.mxu0 0.0
  %3757 = vmatprep.subr.mxu0 0.0
  %3758 = vmatpush1.msra.mxu0 0.0
  %3759 = vmatprep.subr.mxu0 0.0
  %3760 = vmatpush1.msra.mxu0 0.0
  %3761 = vmatprep.subr.mxu0 0.0
  %3762 = vmatpush1.msra.mxu0 0.0
  %3763 = vmatprep.subr.mxu0 0.0
  %3764 = vmatpush1.msra.mxu0 0.0
  %3765 = vmatprep.subr.mxu0 0.0
  %3766 = vmatpush1.msra.mxu0 0.0
  %3767 = vmatprep.subr.mxu0 0.0
  %3768 = vmatpush1.msra.mxu0 0.0
  %3769 = vmatprep.subr.mxu0 0.0
  %3770 = vmatpush1.msra.mxu0 0.0
  %3771 = vmatprep.subr.mxu0 0.0
  %3772 = vmatpush1.msra.mxu0 0.0
  %3773 = vmatprep.subr.mxu0 0.0
  %3774 = vmatpush1.msra.mxu0 0.0
  %3775 = vmatprep.subr.mxu0 0.0
  %3776 = vmatpush1.msra.mxu0 0.0
  %3777 = vmatprep.subr.mxu0 0.0
  %3778 = vmatpush1.msra.mxu0 0.0
  %3779 = vmatprep.mubr.f32.mxu0 0.0
  %3780 = vmatmul.mubr.f32.gmra.mrb[0].mxu0 %v1072
  %v3781 = vpop.f32.mrb[0].mxu0
  %v3782 = vadd.f32 0.0, %v3781
  %v3783 = vpop.f32.mrb[0].mxu0
  %3784 = vmatprep.mubr.f32.mxu0 0.0
  %3785 = vmatmul.mubr.f32.gmra.mrb[0].mxu0 %v1075
  %v3786 = vpop.f32.mrb[0].mxu0
  %v3787 = vadd.f32 0.0, %v3786
  %v3788 = vpop.f32.mrb[0].mxu0
  %3789 = vmatprep.mubr.f32.mxu0 0.0
  %3790 = vmatmul.mubr.f32.gmra.mrb[0].mxu0 %v1078
  %v3791 = vpop.f32.mrb[0].mxu0
  %v3792 = vadd.f32 0.0, %v3791
  %v3793 = vpop.f32.mrb[0].mxu0
  %3794 = vdwg.mxu0
  %v3795 = vpack.c.bf16 %v3787, %v3782
  %v3796 = vpack.c.bf16 %v3792, %v3792
  %v3798 = vlaneseq
  %v3799 = vshrl.u32 %v3798, 7
  %v3800 = vsub.s32 0, %v3799
  %v3801 = vrot.slane %v2899, %v3800
  %v3804 = vsel %vm1168, %v3795, 0
  %v3807 = vsel %vm1168, %v3796, 0
  %v3810 = vsel %vm779, %v2898, 0
  %3812 = vmatprep.subr.bf16.mxu0 0
  %3813 = vmatpush1.bf16.msra.mxu0 %v3810
  %3814 = vmatprep.subr.bf16.mxu0 0
  %3815 = vmatpush1.bf16.msra.mxu0 0
  %3816 = vmatprep.subr.bf16.mxu0 0
  %3817 = vmatpush1.bf16.msra.mxu0 0
  %3818 = vmatprep.subr.bf16.mxu0 0
  %3819 = vmatpush1.bf16.msra.mxu0 0
  %3820 = vmatprep.subr.bf16.mxu0 0
  %3821 = vmatpush1.bf16.msra.mxu0 0
  %3822 = vmatprep.subr.bf16.mxu0 0
  %3823 = vmatpush1.bf16.msra.mxu0 0
  %3824 = vmatprep.subr.bf16.mxu0 0
  %3825 = vmatpush1.bf16.msra.mxu0 0
  %3826 = vmatprep.subr.bf16.mxu0 0
  %3827 = vmatpush1.bf16.msra.mxu0 0
  %3828 = vmatprep.subr.bf16.mxu0 0
  %3829 = vmatpush1.bf16.msra.mxu0 0
  %3830 = vmatprep.subr.bf16.mxu0 0
  %3831 = vmatpush1.bf16.msra.mxu0 0
  %3832 = vmatprep.subr.bf16.mxu0 0
  %3833 = vmatpush1.bf16.msra.mxu0 0
  %3834 = vmatprep.subr.bf16.mxu0 0
  %3835 = vmatpush1.bf16.msra.mxu0 0
  %3836 = vmatprep.subr.bf16.mxu0 0
  %3837 = vmatpush1.bf16.msra.mxu0 0
  %3838 = vmatprep.subr.bf16.mxu0 0
  %3839 = vmatpush1.bf16.msra.mxu0 0
  %3840 = vmatprep.subr.bf16.mxu0 0
  %3841 = vmatpush1.bf16.msra.mxu0 0
  %3842 = vmatprep.subr.bf16.mxu0 0
  %3843 = vmatpush1.bf16.msra.mxu0 0
  %3844 = vmatprep.mubr.bf16.mxu0 0
  %3845 = vmatmul.mubr.bf16.gmra.mrb[0].mxu0 %v3804
  %v3846 = vpop.f32.mrb[0].mxu0
  %v3847 = vadd.f32 %v3801, %v3846
  %v3848 = vpop.f32.mrb[0].mxu0
  %v3849 = vpop.f32.mrb[0].mxu0
  %v3850 = vadd.f32 %v3801, %v3849
  %v3851 = vpop.f32.mrb[0].mxu0
  %3852 = vmatprep.mubr.bf16.mxu0 0
  %3853 = vmatmul.mubr.bf16.gmra.mrb[0].mxu0 %v3807
  %v3854 = vpop.f32.mrb[0].mxu0
  %v3855 = vadd.f32 %v3801, %v3854
  %v3856 = vpop.f32.mrb[0].mxu0
  %v3857 = vpop.f32.mrb[0].mxu0
  %v3858 = vpop.f32.mrb[0].mxu0
  %3859 = vdwg.mxu0
  %v3860 = vpack.c.bf16 %v2876, %v2875
  %v3861 = vpack.c.bf16 %v2877, %v2877
  %v3864 = vunpack.c.l.b16 %v2894
  %v3865 = vunpack.c.l.b16 %v2895
  %v3866 = vpack.c.b16 %v3865, %v3864
  %v3869 = vsel %vm1767, %v3860, 0
  %v3872 = vsel %vm1767, %v3861, 0
  %3874 = vmatprep.subr.bf16.mxu0 0
  %3875 = vmatpush1.bf16.msra.mxu0 %v3866
  %3876 = vmatprep.subr.bf16.mxu0 0
  %3877 = vmatpush1.bf16.msra.mxu0 0
  %3878 = vmatprep.subr.bf16.mxu0 0
  %3879 = vmatpush1.bf16.msra.mxu0 0
  %3880 = vmatprep.subr.bf16.mxu0 0
  %3881 = vmatpush1.bf16.msra.mxu0 0
  %3882 = vmatprep.subr.bf16.mxu0 0
  %3883 = vmatpush1.bf16.msra.mxu0 0
  %3884 = vmatprep.subr.bf16.mxu0 0
  %3885 = vmatpush1.bf16.msra.mxu0 0
  %3886 = vmatprep.subr.bf16.mxu0 0
  %3887 = vmatpush1.bf16.msra.mxu0 0
  %3888 = vmatprep.subr.bf16.mxu0 0
  %3889 = vmatpush1.bf16.msra.mxu0 0
  %3890 = vmatprep.subr.bf16.mxu0 0
  %3891 = vmatpush1.bf16.msra.mxu0 0
  %3892 = vmatprep.subr.bf16.mxu0 0
  %3893 = vmatpush1.bf16.msra.mxu0 0
  %3894 = vmatprep.subr.bf16.mxu0 0
  %3895 = vmatpush1.bf16.msra.mxu0 0
  %3896 = vmatprep.subr.bf16.mxu0 0
  %3897 = vmatpush1.bf16.msra.mxu0 0
  %3898 = vmatprep.subr.bf16.mxu0 0
  %3899 = vmatpush1.bf16.msra.mxu0 0
  %3900 = vmatprep.subr.bf16.mxu0 0
  %3901 = vmatpush1.bf16.msra.mxu0 0
  %3902 = vmatprep.subr.bf16.mxu0 0
  %3903 = vmatpush1.bf16.msra.mxu0 0
  %3904 = vmatprep.subr.bf16.mxu0 0
  %3905 = vmatpush1.bf16.msra.mxu0 0
  %3906 = vmatprep.mubr.bf16.mxu0 0
  %3907 = vmatmul.mubr.bf16.gmra.mrb[0].mxu0 %v3869
  %v3908 = vpop.f32.mrb[0].mxu0
  %v3909 = vadd.f32 0.0, %v3908
  %v3910 = vpop.f32.mrb[0].mxu0
  %v3911 = vpop.f32.mrb[0].mxu0
  %v3912 = vadd.f32 0.0, %v3911
  %v3913 = vpop.f32.mrb[0].mxu0
  %3914 = vmatprep.mubr.bf16.mxu0 0
  %3915 = vmatmul.mubr.bf16.gmra.mrb[0].mxu0 %v3872
  %v3916 = vpop.f32.mrb[0].mxu0
  %v3917 = vadd.f32 0.0, %v3916
  %v3918 = vpop.f32.mrb[0].mxu0
  %v3919 = vpop.f32.mrb[0].mxu0
  %v3920 = vpop.f32.mrb[0].mxu0
  %3921 = vdwg.mxu0
  %v3922 = vadd.f32 %v3847, %v3909
  %v3923 = vadd.f32 %v3850, %v3912
  %v3924 = vadd.f32 %v3855, %v3917
  %v3926 = vsel %vm689, %v2896, 0
  %3928 = vmatprep.subr.bf16.mxu0 0
  %3929 = vmatpush1.bf16.msra.mxu0 %v3926
  %3930 = vmatprep.subr.bf16.mxu0 0
  %3931 = vmatpush1.bf16.msra.mxu0 0
  %3932 = vmatprep.subr.bf16.mxu0 0
  %3933 = vmatpush1.bf16.msra.mxu0 0
  %3934 = vmatprep.subr.bf16.mxu0 0
  %3935 = vmatpush1.bf16.msra.mxu0 0
  %3936 = vmatprep.subr.bf16.mxu0 0
  %3937 = vmatpush1.bf16.msra.mxu0 0
  %3938 = vmatprep.subr.bf16.mxu0 0
  %3939 = vmatpush1.bf16.msra.mxu0 0
  %3940 = vmatprep.subr.bf16.mxu0 0
  %3941 = vmatpush1.bf16.msra.mxu0 0
  %3942 = vmatprep.subr.bf16.mxu0 0
  %3943 = vmatpush1.bf16.msra.mxu0 0
  %3944 = vmatprep.subr.bf16.mxu0 0
  %3945 = vmatpush1.bf16.msra.mxu0 0
  %3946 = vmatprep.subr.bf16.mxu0 0
  %3947 = vmatpush1.bf16.msra.mxu0 0
  %3948 = vmatprep.subr.bf16.mxu0 0
  %3949 = vmatpush1.bf16.msra.mxu0 0
  %3950 = vmatprep.subr.bf16.mxu0 0
  %3951 = vmatpush1.bf16.msra.mxu0 0
  %3952 = vmatprep.subr.bf16.mxu0 0
  %3953 = vmatpush1.bf16.msra.mxu0 0
  %3954 = vmatprep.subr.bf16.mxu0 0
  %3955 = vmatpush1.bf16.msra.mxu0 0
  %3956 = vmatprep.subr.bf16.mxu0 0
  %3957 = vmatpush1.bf16.msra.mxu0 0
  %3958 = vmatprep.subr.bf16.mxu0 0
  %3959 = vmatpush1.bf16.msra.mxu0 0
  %3960 = vmatprep.mubr.bf16.mxu0 0
  %3961 = vmatmul.mubr.bf16.gmra.mrb[0].mxu0 %v2519
  %v3962 = vpop.f32.mrb[0].mxu0
  %v3963 = vadd.f32 0.0, %v3962
  %v3964 = vpop.f32.mrb[0].mxu0
  %v3965 = vpop.f32.mrb[0].mxu0
  %v3966 = vadd.f32 0.0, %v3965
  %v3967 = vpop.f32.mrb[0].mxu0
  %3968 = vmatprep.mubr.bf16.mxu0 0
  %3969 = vmatmul.mubr.bf16.gmra.mrb[0].mxu0 %v2522
  %v3970 = vpop.f32.mrb[0].mxu0
  %v3971 = vadd.f32 0.0, %v3970
  %v3972 = vpop.f32.mrb[0].mxu0
  %v3973 = vpop.f32.mrb[0].mxu0
  %v3974 = vpop.f32.mrb[0].mxu0
  %3975 = vdwg.mxu0
  %v3976 = vadd.f32 %v3922, %v3963
  %v3977 = vadd.f32 %v3923, %v3966
  %v3978 = vadd.f32 %v3924, %v3971
  %v3979 = vpack.c.bf16 %v218, %v217
  %v3980 = vpack.c.bf16 %v219, %v219
  %v3982 = vsel %vm3450, %v3979, 0
  %v3985 = vsel %vm3450, %v3980, 0
  %v3988 = vsel %vm690, %v2897, 0
  %3990 = vmatprep.subr.bf16.mxu0 0
  %3991 = vmatpush1.bf16.msra.mxu0 %v3988
  %3992 = vmatprep.subr.bf16.mxu0 0
  %3993 = vmatpush1.bf16.msra.mxu0 0
  %3994 = vmatprep.subr.bf16.mxu0 0
  %3995 = vmatpush1.bf16.msra.mxu0 0
  %3996 = vmatprep.subr.bf16.mxu0 0
  %3997 = vmatpush1.bf16.msra.mxu0 0
  %3998 = vmatprep.subr.bf16.mxu0 0
  %3999 = vmatpush1.bf16.msra.mxu0 0
  %4000 = vmatprep.subr.bf16.mxu0 0
  %4001 = vmatpush1.bf16.msra.mxu0 0
  %4002 = vmatprep.subr.bf16.mxu0 0
  %4003 = vmatpush1.bf16.msra.mxu0 0
  %4004 = vmatprep.subr.bf16.mxu0 0
  %4005 = vmatpush1.bf16.msra.mxu0 0
  %4006 = vmatprep.subr.bf16.mxu0 0
  %4007 = vmatpush1.bf16.msra.mxu0 0
  %4008 = vmatprep.subr.bf16.mxu0 0
  %4009 = vmatpush1.bf16.msra.mxu0 0
  %4010 = vmatprep.subr.bf16.mxu0 0
  %4011 = vmatpush1.bf16.msra.mxu0 0
  %4012 = vmatprep.subr.bf16.mxu0 0
  %4013 = vmatpush1.bf16.msra.mxu0 0
  %4014 = vmatprep.subr.bf16.mxu0 0
  %4015 = vmatpush1.bf16.msra.mxu0 0
  %4016 = vmatprep.subr.bf16.mxu0 0
  %4017 = vmatpush1.bf16.msra.mxu0 0
  %4018 = vmatprep.subr.bf16.mxu0 0
  %4019 = vmatpush1.bf16.msra.mxu0 0
  %4020 = vmatprep.subr.bf16.mxu0 0
  %4021 = vmatpush1.bf16.msra.mxu0 0
  %4022 = vmatprep.mubr.bf16.mxu0 0
  %4023 = vmatmul.mubr.bf16.gmra.mrb[0].mxu0 %v3982
  %v4024 = vpop.f32.mrb[0].mxu0
  %v4025 = vadd.f32 0.0, %v4024
  %v4026 = vpop.f32.mrb[0].mxu0
  %v4027 = vpop.f32.mrb[0].mxu0
  %v4028 = vadd.f32 0.0, %v4027
  %v4029 = vpop.f32.mrb[0].mxu0
  %4030 = vmatprep.mubr.bf16.mxu0 0
  %4031 = vmatmul.mubr.bf16.gmra.mrb[0].mxu0 %v3985
  %v4032 = vpop.f32.mrb[0].mxu0
  %v4033 = vadd.f32 0.0, %v4032
  %v4034 = vpop.f32.mrb[0].mxu0
  %v4035 = vpop.f32.mrb[0].mxu0
  %v4036 = vpop.f32.mrb[0].mxu0
  %4037 = vdwg.mxu0
  %v4038 = vadd.f32 %v3976, %v4025
  %v4039 = vadd.f32 %v3977, %v4028
  %v4040 = vadd.f32 %v3978, %v4033
  %v4041 = vmax.f32 %v4038, 0.0
  %v4042 = vmax.f32 %v4039, 0.0
  %v4043 = vmax.f32 %v4040, 0.0
  %v4044 = vpack.c.bf16 %v4042, %v4041
  %v4045 = vpack.c.bf16 %v4043, %v4043
  %v4047 = vlaneseq
  %v4048 = vshrl.u32 %v4047, 7
  %v4049 = vsub.s32 0, %v4048
  %v4050 = vrot.slane %v2904, %v4049
  %v4056 = vunpack.c.l.b16 %v2900
  %v4057 = vunpack.c.l.b16 %v2901
  %v4058 = vunpack.c.l.b16 %v2902
  %v4059 = vunpack.c.l.b16 %v2903
  %v4060 = vpack.c.b16 %v4057, %v4056
  %v4061 = vpack.c.b16 %v4059, %v4058
  %v4065 = vsel %vm971, %v4044, 0
  %v4068 = vsel %vm971, %v4045, 0
  %4070 = vmatprep.subr.bf16.mxu0 0
  %4071 = vmatpush1.bf16.msra.mxu0 %v4060
  %4072 = vmatprep.subr.bf16.mxu0 0
  %4073 = vmatpush1.bf16.msra.mxu0 %v4061
  %4074 = vmatprep.subr.bf16.mxu0 0
  %4075 = vmatpush1.bf16.msra.mxu0 0
  %4076 = vmatprep.subr.bf16.mxu0 0
  %4077 = vmatpush1.bf16.msra.mxu0 0
  %4078 = vmatprep.subr.bf16.mxu0 0
  %4079 = vmatpush1.bf16.msra.mxu0 0
  %4080 = vmatprep.subr.bf16.mxu0 0
  %4081 = vmatpush1.bf16.msra.mxu0 0
  %4082 = vmatprep.subr.bf16.mxu0 0
  %4083 = vmatpush1.bf16.msra.mxu0 0
  %4084 = vmatprep.subr.bf16.mxu0 0
  %4085 = vmatpush1.bf16.msra.mxu0 0
  %4086 = vmatprep.subr.bf16.mxu0 0
  %4087 = vmatpush1.bf16.msra.mxu0 0
  %4088 = vmatprep.subr.bf16.mxu0 0
  %4089 = vmatpush1.bf16.msra.mxu0 0
  %4090 = vmatprep.subr.bf16.mxu0 0
  %4091 = vmatpush1.bf16.msra.mxu0 0
  %4092 = vmatprep.subr.bf16.mxu0 0
  %4093 = vmatpush1.bf16.msra.mxu0 0
  %4094 = vmatprep.subr.bf16.mxu0 0
  %4095 = vmatpush1.bf16.msra.mxu0 0
  %4096 = vmatprep.subr.bf16.mxu0 0
  %4097 = vmatpush1.bf16.msra.mxu0 0
  %4098 = vmatprep.subr.bf16.mxu0 0
  %4099 = vmatpush1.bf16.msra.mxu0 0
  %4100 = vmatprep.subr.bf16.mxu0 0
  %4101 = vmatpush1.bf16.msra.mxu0 0
  %4102 = vmatprep.mubr.bf16.mxu0 0
  %4103 = vmatmul.mubr.bf16.gmra.mrb[0].mxu0 %v4065
  %v4104 = vpop.f32.mrb[0].mxu0
  %v4105 = vadd.f32 %v4050, %v4104
  %v4106 = vpop.f32.mrb[0].mxu0
  %v4107 = vpop.f32.mrb[0].mxu0
  %v4108 = vadd.f32 %v4050, %v4107
  %v4109 = vpop.f32.mrb[0].mxu0
  %4110 = vmatprep.mubr.bf16.mxu0 0
  %4111 = vmatmul.mubr.bf16.gmra.mrb[0].mxu0 %v4068
  %v4112 = vpop.f32.mrb[0].mxu0
  %v4113 = vadd.f32 %v4050, %v4112
  %v4114 = vpop.f32.mrb[0].mxu0
  %v4115 = vpop.f32.mrb[0].mxu0
  %v4116 = vpop.f32.mrb[0].mxu0
  %4117 = vdwg.mxu0
  %v4118 = vmax.f32 %v4105, 0.0
  %v4119 = vmax.f32 %v4108, 0.0
  %v4120 = vmax.f32 %v4113, 0.0
  %4121 = vmatprep.subr.mxu0 0.0
  %4122 = vmatpush1.msra.mxu0 %v4118
  %4123 = vmatprep.subr.mxu0 0.0
  %4124 = vmatpush1.msra.mxu0 %v4119
  %4125 = vmatprep.subr.mxu0 0.0
  %4126 = vmatpush1.msra.mxu0 %v4120
  %4127 = vmatprep.subr.mxu0 0.0
  %4128 = vmatpush1.msra.mxu0 0.0
  %4129 = vmatprep.subr.mxu0 0.0
  %4130 = vmatpush1.msra.mxu0 0.0
  %4131 = vmatprep.subr.mxu0 0.0
  %4132 = vmatpush1.msra.mxu0 0.0
  %4133 = vmatprep.subr.mxu0 0.0
  %4134 = vmatpush1.msra.mxu0 0.0
  %4135 = vmatprep.subr.mxu0 0.0
  %4136 = vmatpush1.msra.mxu0 0.0
  %4137 = vmatprep.subr.mxu0 0.0
  %4138 = vmatpush1.msra.mxu0 0.0
  %4139 = vmatprep.subr.mxu0 0.0
  %4140 = vmatpush1.msra.mxu0 0.0
  %4141 = vmatprep.subr.mxu0 0.0
  %4142 = vmatpush1.msra.mxu0 0.0
  %4143 = vmatprep.subr.mxu0 0.0
  %4144 = vmatpush1.msra.mxu0 0.0
  %4145 = vmatprep.subr.mxu0 0.0
  %4146 = vmatpush1.msra.mxu0 0.0
  %4147 = vmatprep.subr.mxu0 0.0
  %4148 = vmatpush1.msra.mxu0 0.0
  %4149 = vmatprep.subr.mxu0 0.0
  %4150 = vmatpush1.msra.mxu0 0.0
  %4151 = vmatprep.subr.mxu0 0.0
  %4152 = vmatpush1.msra.mxu0 0.0
  %4153 = vmatprep.subr.mxu0 0.0
  %4154 = vmatpush1.msra.mxu0 0.0
  %4155 = vmatprep.subr.mxu0 0.0
  %4156 = vmatpush1.msra.mxu0 0.0
  %4157 = vmatprep.subr.mxu0 0.0
  %4158 = vmatpush1.msra.mxu0 0.0
  %4159 = vmatprep.subr.mxu0 0.0
  %4160 = vmatpush1.msra.mxu0 0.0
  %4161 = vmatprep.subr.mxu0 0.0
  %4162 = vmatpush1.msra.mxu0 0.0
  %4163 = vmatprep.subr.mxu0 0.0
  %4164 = vmatpush1.msra.mxu0 0.0
  %4165 = vmatprep.subr.mxu0 0.0
  %4166 = vmatpush1.msra.mxu0 0.0
  %4167 = vmatprep.subr.mxu0 0.0
  %4168 = vmatpush1.msra.mxu0 0.0
  %4169 = vmatprep.subr.mxu0 0.0
  %4170 = vmatpush1.msra.mxu0 0.0
  %4171 = vmatprep.subr.mxu0 0.0
  %4172 = vmatpush1.msra.mxu0 0.0
  %4173 = vmatprep.subr.mxu0 0.0
  %4174 = vmatpush1.msra.mxu0 0.0
  %4175 = vmatprep.subr.mxu0 0.0
  %4176 = vmatpush1.msra.mxu0 0.0
  %4177 = vmatprep.subr.mxu0 0.0
  %4178 = vmatpush1.msra.mxu0 0.0
  %4179 = vmatprep.subr.mxu0 0.0
  %4180 = vmatpush1.msra.mxu0 0.0
  %4181 = vmatprep.subr.mxu0 0.0
  %4182 = vmatpush1.msra.mxu0 0.0
  %4183 = vmatprep.subr.mxu0 0.0
  %4184 = vmatpush1.msra.mxu0 0.0
  %4185 = vmatprep.mubr.f32.mxu0 0.0
  %4186 = vmatmul.mubr.f32.gmra.mrb[0].mxu0 %v243
  %v4187 = vpop.f32.mrb[0].mxu0
  %v4188 = vadd.f32 0.0, %v4187
  %v4189 = vpop.f32.mrb[0].mxu0
  %4190 = vmatprep.mubr.f32.mxu0 0.0
  %4191 = vmatmul.mubr.f32.gmra.mrb[0].mxu0 %v246
  %v4192 = vpop.f32.mrb[0].mxu0
  %v4193 = vadd.f32 0.0, %v4192
  %v4194 = vpop.f32.mrb[0].mxu0
  %4195 = vmatprep.mubr.f32.mxu0 0.0
  %4196 = vmatmul.mubr.f32.gmra.mrb[0].mxu0 %v249
  %v4197 = vpop.f32.mrb[0].mxu0
  %v4198 = vadd.f32 0.0, %v4197
  %v4199 = vpop.f32.mrb[0].mxu0
  %4200 = vmatprep.mubr.f32.mxu0 0.0
  %4201 = vmatmul.mubr.f32.gmra.mrb[0].mxu0 %v252
  %v4202 = vpop.f32.mrb[0].mxu0
  %v4203 = vadd.f32 0.0, %v4202
  %v4204 = vpop.f32.mrb[0].mxu0
  %4205 = vmatprep.mubr.f32.mxu0 0.0
  %4206 = vmatmul.mubr.f32.gmra.mrb[0].mxu0 %v255
  %v4207 = vpop.f32.mrb[0].mxu0
  %v4208 = vadd.f32 0.0, %v4207
  %v4209 = vpop.f32.mrb[0].mxu0
  %4210 = vmatprep.mubr.f32.mxu0 0.0
  %4211 = vmatmul.mubr.f32.gmra.mrb[0].mxu0 %v258
  %v4212 = vpop.f32.mrb[0].mxu0
  %v4213 = vadd.f32 0.0, %v4212
  %v4214 = vpop.f32.mrb[0].mxu0
  %4215 = vmatprep.mubr.f32.mxu0 0.0
  %4216 = vmatmul.mubr.f32.gmra.mrb[0].mxu0 %v261
  %v4217 = vpop.f32.mrb[0].mxu0
  %v4218 = vadd.f32 0.0, %v4217
  %v4219 = vpop.f32.mrb[0].mxu0
  %4220 = vmatprep.mubr.f32.mxu0 0.0
  %4221 = vmatmul.mubr.f32.gmra.mrb[0].mxu0 %v264
  %v4222 = vpop.f32.mrb[0].mxu0
  %v4223 = vadd.f32 0.0, %v4222
  %v4224 = vpop.f32.mrb[0].mxu0
  %4225 = vmatprep.mubr.f32.mxu0 0.0
  %4226 = vmatmul.mubr.f32.gmra.mrb[0].mxu0 %v267
  %v4227 = vpop.f32.mrb[0].mxu0
  %v4228 = vadd.f32 0.0, %v4227
  %v4229 = vpop.f32.mrb[0].mxu0
  %4230 = vmatprep.mubr.f32.mxu0 0.0
  %4231 = vmatmul.mubr.f32.gmra.mrb[0].mxu0 %v270
  %v4232 = vpop.f32.mrb[0].mxu0
  %v4233 = vadd.f32 0.0, %v4232
  %v4234 = vpop.f32.mrb[0].mxu0
  %4235 = vmatprep.mubr.f32.mxu0 0.0
  %4236 = vmatmul.mubr.f32.gmra.mrb[0].mxu0 %v273
  %v4237 = vpop.f32.mrb[0].mxu0
  %v4238 = vadd.f32 0.0, %v4237
  %v4239 = vpop.f32.mrb[0].mxu0
  %4240 = vmatprep.mubr.f32.mxu0 0.0
  %4241 = vmatmul.mubr.f32.gmra.mrb[0].mxu0 %v276
  %v4242 = vpop.f32.mrb[0].mxu0
  %v4243 = vadd.f32 0.0, %v4242
  %v4244 = vpop.f32.mrb[0].mxu0
  %4245 = vdwg.mxu0
  %v4246 = vadd.f32 %v4188, %v4218
  %v4247 = vadd.f32 %v4193, %v4223
  %v4248 = vadd.f32 %v4198, %v4228
  %v4249 = vadd.f32 %v4203, %v4233
  %v4250 = vadd.f32 %v4208, %v4238
  %v4251 = vadd.f32 %v4213, %v4243
  %v4252 = vmul.f32 %v4246, 0.5
  %v4253 = vmul.f32 %v4247, 0.5
  %v4254 = vmul.f32 %v4248, 0.5
  %v4255 = vmul.f32 %v4249, 0.5
  %v4256 = vmul.f32 %v4250, 0.5
  %v4257 = vmul.f32 %v4251, 0.5
  %4258 = vmatprep.subr.mxu0 0.0
  %4259 = vmatpush1.msra.mxu0 %v4252
  %4260 = vmatprep.subr.mxu0 0.0
  %4261 = vmatpush1.msra.mxu0 %v4253
  %4262 = vmatprep.subr.mxu0 0.0
  %4263 = vmatpush1.msra.mxu0 %v4254
  %4264 = vmatprep.subr.mxu0 0.0
  %4265 = vmatpush1.msra.mxu0 %v4255
  %4266 = vmatprep.subr.mxu0 0.0
  %4267 = vmatpush1.msra.mxu0 %v4256
  %4268 = vmatprep.subr.mxu0 0.0
  %4269 = vmatpush1.msra.mxu0 %v4257
  %4270 = vmatprep.subr.mxu0 0.0
  %4271 = vmatpush1.msra.mxu0 0.0
  %4272 = vmatprep.subr.mxu0 0.0
  %4273 = vmatpush1.msra.mxu0 0.0
  %4274 = vmatprep.subr.mxu0 0.0
  %4275 = vmatpush1.msra.mxu0 0.0
  %4276 = vmatprep.subr.mxu0 0.0
  %4277 = vmatpush1.msra.mxu0 0.0
  %4278 = vmatprep.subr.mxu0 0.0
  %4279 = vmatpush1.msra.mxu0 0.0
  %4280 = vmatprep.subr.mxu0 0.0
  %4281 = vmatpush1.msra.mxu0 0.0
  %4282 = vmatprep.subr.mxu0 0.0
  %4283 = vmatpush1.msra.mxu0 0.0
  %4284 = vmatprep.subr.mxu0 0.0
  %4285 = vmatpush1.msra.mxu0 0.0
  %4286 = vmatprep.subr.mxu0 0.0
  %4287 = vmatpush1.msra.mxu0 0.0
  %4288 = vmatprep.subr.mxu0 0.0
  %4289 = vmatpush1.msra.mxu0 0.0
  %4290 = vmatprep.subr.mxu0 0.0
  %4291 = vmatpush1.msra.mxu0 0.0
  %4292 = vmatprep.subr.mxu0 0.0
  %4293 = vmatpush1.msra.mxu0 0.0
  %4294 = vmatprep.subr.mxu0 0.0
  %4295 = vmatpush1.msra.mxu0 0.0
  %4296 = vmatprep.subr.mxu0 0.0
  %4297 = vmatpush1.msra.mxu0 0.0
  %4298 = vmatprep.subr.mxu0 0.0
  %4299 = vmatpush1.msra.mxu0 0.0
  %4300 = vmatprep.subr.mxu0 0.0
  %4301 = vmatpush1.msra.mxu0 0.0
  %4302 = vmatprep.subr.mxu0 0.0
  %4303 = vmatpush1.msra.mxu0 0.0
  %4304 = vmatprep.subr.mxu0 0.0
  %4305 = vmatpush1.msra.mxu0 0.0
  %4306 = vmatprep.subr.mxu0 0.0
  %4307 = vmatpush1.msra.mxu0 0.0
  %4308 = vmatprep.subr.mxu0 0.0
  %4309 = vmatpush1.msra.mxu0 0.0
  %4310 = vmatprep.subr.mxu0 0.0
  %4311 = vmatpush1.msra.mxu0 0.0
  %4312 = vmatprep.subr.mxu0 0.0
  %4313 = vmatpush1.msra.mxu0 0.0
  %4314 = vmatprep.subr.mxu0 0.0
  %4315 = vmatpush1.msra.mxu0 0.0
  %4316 = vmatprep.subr.mxu0 0.0
  %4317 = vmatpush1.msra.mxu0 0.0
  %4318 = vmatprep.subr.mxu0 0.0
  %4319 = vmatpush1.msra.mxu0 0.0
  %4320 = vmatprep.subr.mxu0 0.0
  %4321 = vmatpush1.msra.mxu0 0.0
  %4322 = vmatprep.mubr.f32.mxu0 0.0
  %4323 = vmatmul.mubr.f32.gmra.mrb[0].mxu0 %v1072
  %v4324 = vpop.f32.mrb[0].mxu0
  %v4325 = vadd.f32 0.0, %v4324
  %v4326 = vpop.f32.mrb[0].mxu0
  %4327 = vmatprep.mubr.f32.mxu0 0.0
  %4328 = vmatmul.mubr.f32.gmra.mrb[0].mxu0 %v1075
  %v4329 = vpop.f32.mrb[0].mxu0
  %v4330 = vadd.f32 0.0, %v4329
  %v4331 = vpop.f32.mrb[0].mxu0
  %4332 = vmatprep.mubr.f32.mxu0 0.0
  %4333 = vmatmul.mubr.f32.gmra.mrb[0].mxu0 %v1078
  %v4334 = vpop.f32.mrb[0].mxu0
  %v4335 = vadd.f32 0.0, %v4334
  %v4336 = vpop.f32.mrb[0].mxu0
  %4337 = vdwg.mxu0
  %v4338 = vmul.f32 %v4325, %v1588
  %v4339 = vmul.f32 %v4330, %v1593
  %v4340 = vmul.f32 %v4335, %v1598
  %v4341 = vld [vmem:[%s97] sm:$0xf]
  %v4342 = vld [vmem:[%s97 + $0x4] sm:$0xf]
  %v4343 = vld [vmem:[%s99] sm:$0x1]
  %v4344 = vld [vmem:[%s101] sm:$0x1]
  %v4345 = vpack.c.bf16 %v4339, %v4338
  %v4346 = vpack.c.bf16 %v4340, %v4340
  %v4349 = vunpack.c.l.b16 %v4341
  %v4350 = vunpack.c.l.b16 %v4342
  %v4351 = vpack.c.b16 %v4350, %v4349
  %v4354 = vsel %vm1767, %v4345, 0
  %v4357 = vsel %vm1767, %v4346, 0
  %4359 = vmatprep.subr.bf16.mxu0 0
  %4360 = vmatpush1.bf16.msra.mxu0 %v4351
  %4361 = vmatprep.subr.bf16.mxu0 0
  %4362 = vmatpush1.bf16.msra.mxu0 0
  %4363 = vmatprep.subr.bf16.mxu0 0
  %4364 = vmatpush1.bf16.msra.mxu0 0
  %4365 = vmatprep.subr.bf16.mxu0 0
  %4366 = vmatpush1.bf16.msra.mxu0 0
  %4367 = vmatprep.subr.bf16.mxu0 0
  %4368 = vmatpush1.bf16.msra.mxu0 0
  %4369 = vmatprep.subr.bf16.mxu0 0
  %4370 = vmatpush1.bf16.msra.mxu0 0
  %4371 = vmatprep.subr.bf16.mxu0 0
  %4372 = vmatpush1.bf16.msra.mxu0 0
  %4373 = vmatprep.subr.bf16.mxu0 0
  %4374 = vmatpush1.bf16.msra.mxu0 0
  %4375 = vmatprep.subr.bf16.mxu0 0
  %4376 = vmatpush1.bf16.msra.mxu0 0
  %4377 = vmatprep.subr.bf16.mxu0 0
  %4378 = vmatpush1.bf16.msra.mxu0 0
  %4379 = vmatprep.subr.bf16.mxu0 0
  %4380 = vmatpush1.bf16.msra.mxu0 0
  %4381 = vmatprep.subr.bf16.mxu0 0
  %4382 = vmatpush1.bf16.msra.mxu0 0
  %4383 = vmatprep.subr.bf16.mxu0 0
  %4384 = vmatpush1.bf16.msra.mxu0 0
  %4385 = vmatprep.subr.bf16.mxu0 0
  %4386 = vmatpush1.bf16.msra.mxu0 0
  %4387 = vmatprep.subr.bf16.mxu0 0
  %4388 = vmatpush1.bf16.msra.mxu0 0
  %4389 = vmatprep.subr.bf16.mxu0 0
  %4390 = vmatpush1.bf16.msra.mxu0 0
  %4391 = vmatprep.mubr.bf16.mxu0 0
  %4392 = vmatmul.mubr.bf16.gmra.mrb[0].mxu0 %v4354
  %v4393 = vpop.f32.mrb[0].mxu0
  %v4394 = vadd.f32 0.0, %v4393
  %v4395 = vpop.f32.mrb[0].mxu0
  %v4396 = vpop.f32.mrb[0].mxu0
  %v4397 = vadd.f32 0.0, %v4396
  %v4398 = vpop.f32.mrb[0].mxu0
  %4399 = vmatprep.mubr.bf16.mxu0 0
  %4400 = vmatmul.mubr.bf16.gmra.mrb[0].mxu0 %v4357
  %v4401 = vpop.f32.mrb[0].mxu0
  %v4402 = vadd.f32 0.0, %v4401
  %v4403 = vpop.f32.mrb[0].mxu0
  %v4404 = vpop.f32.mrb[0].mxu0
  %v4405 = vpop.f32.mrb[0].mxu0
  %4406 = vdwg.mxu0
  %v4408 = vlaneseq
  %v4409 = vshrl.u32 %v4408, 7
  %v4410 = vsub.s32 0, %v4409
  %v4411 = vrot.slane %v4344, %v4410
  %v4413 = vadd.f32 %v4411, %v4394
  %v4414 = vadd.f32 %v4411, %v4397
  %v4415 = vadd.f32 %v4411, %v4402
  %v4417 = vsel %vm689, %v4343, 0
  %4419 = vmatprep.subr.bf16.mxu0 0
  %4420 = vmatpush1.bf16.msra.mxu0 %v4417
  %4421 = vmatprep.subr.bf16.mxu0 0
  %4422 = vmatpush1.bf16.msra.mxu0 0
  %4423 = vmatprep.subr.bf16.mxu0 0
  %4424 = vmatpush1.bf16.msra.mxu0 0
  %4425 = vmatprep.subr.bf16.mxu0 0
  %4426 = vmatpush1.bf16.msra.mxu0 0
  %4427 = vmatprep.subr.bf16.mxu0 0
  %4428 = vmatpush1.bf16.msra.mxu0 0
  %4429 = vmatprep.subr.bf16.mxu0 0
  %4430 = vmatpush1.bf16.msra.mxu0 0
  %4431 = vmatprep.subr.bf16.mxu0 0
  %4432 = vmatpush1.bf16.msra.mxu0 0
  %4433 = vmatprep.subr.bf16.mxu0 0
  %4434 = vmatpush1.bf16.msra.mxu0 0
  %4435 = vmatprep.subr.bf16.mxu0 0
  %4436 = vmatpush1.bf16.msra.mxu0 0
  %4437 = vmatprep.subr.bf16.mxu0 0
  %4438 = vmatpush1.bf16.msra.mxu0 0
  %4439 = vmatprep.subr.bf16.mxu0 0
  %4440 = vmatpush1.bf16.msra.mxu0 0
  %4441 = vmatprep.subr.bf16.mxu0 0
  %4442 = vmatpush1.bf16.msra.mxu0 0
  %4443 = vmatprep.subr.bf16.mxu0 0
  %4444 = vmatpush1.bf16.msra.mxu0 0
  %4445 = vmatprep.subr.bf16.mxu0 0
  %4446 = vmatpush1.bf16.msra.mxu0 0
  %4447 = vmatprep.subr.bf16.mxu0 0
  %4448 = vmatpush1.bf16.msra.mxu0 0
  %4449 = vmatprep.subr.bf16.mxu0 0
  %4450 = vmatpush1.bf16.msra.mxu0 0
  %4451 = vmatprep.mubr.bf16.mxu0 0
  %4452 = vmatmul.mubr.bf16.gmra.mrb[0].mxu0 %v2519
  %v4453 = vpop.f32.mrb[0].mxu0
  %v4454 = vadd.f32 0.0, %v4453
  %v4455 = vpop.f32.mrb[0].mxu0
  %v4456 = vpop.f32.mrb[0].mxu0
  %v4457 = vadd.f32 0.0, %v4456
  %v4458 = vpop.f32.mrb[0].mxu0
  %4459 = vmatprep.mubr.bf16.mxu0 0
  %4460 = vmatmul.mubr.bf16.gmra.mrb[0].mxu0 %v2522
  %v4461 = vpop.f32.mrb[0].mxu0
  %v4462 = vadd.f32 0.0, %v4461
  %v4463 = vpop.f32.mrb[0].mxu0
  %v4464 = vpop.f32.mrb[0].mxu0
  %v4465 = vpop.f32.mrb[0].mxu0
  %4466 = vdwg.mxu0
  %v4467 = vadd.f32 %v4413, %v4454
  %v4468 = vadd.f32 %v4414, %v4457
  %v4469 = vadd.f32 %v4415, %v4462
  %4470 = vst.msk [vmem:[%s103] sm:$0xff] %vm679, %v4467
  %4471 = vst.msk [vmem:[%s103 + $0x8] sm:$0xff] %vm679, %v4468
  %4472 = vst.msk [vmem:[%s103 + $0x10] sm:$0xff] %vm679, %v4469
  // Predicated region
  $region206: #{_forward_impl.1} parent=0 // pred_check
    _
  $region207: #{_forward_impl.1} parent=0 // pred_check_branch
    %4474 = sbr.rel (0) target = $region209
  $region208: #{_forward_impl.1} parent=0 // pred_region
    _
  $region209: #{_forward_impl.1} parent=0 // pred_fallthru
    _
  // Predicated region
  $region210: #{_forward_impl.1} parent=0 // pred_check
    _
  $region211: #{_forward_impl.1} parent=0 // pred_check_branch
    %4476 = sbr.rel (0) target = $region213
  $region212: #{_forward_impl.1} parent=0 // pred_region
    _
  $region213: #{_forward_impl.1} parent=0 // pred_fallthru
    _

</llo_original>
